<compile_context>
chip_gen: v7x
topology: tpu7x:2x2x1
jax: 0.10.0
libtpu: 0.0.40
codegen_flags: <defaults>
</compile_context>

<pallas_src>
import functools

import jax
import jax.numpy as jnp
from jax.experimental import pallas as pl
from jax.experimental.pallas import tpu as pltpu


def _make_decoder_kernel(num_layers, hidden):
    """Kernel: one LSTM timestep through `num_layers` layers + output Linear.

    Ref order (inputs): x, h0, c0, [w_l, b_l]*num_layers, w_out, b_out
    Ref order (outputs): logits, h_out, c_out
    """

    def kernel(*refs):
        idx = 0
        x_ref = refs[idx]; idx += 1          # (B, E)
        h0_ref = refs[idx]; idx += 1         # (L, B, H)
        c0_ref = refs[idx]; idx += 1         # (L, B, H)
        layer_refs = []
        for _ in range(num_layers):
            layer_refs.append((refs[idx], refs[idx + 1]))   # (in+H, 4H), (1, 4H)
            idx += 2
        wout_ref = refs[idx]; idx += 1       # (H, V)
        bout_ref = refs[idx]; idx += 1       # (1, V)
        logits_ref = refs[idx]; idx += 1     # (B, V)
        h_out_ref = refs[idx]; idx += 1      # (L, B, H)
        c_out_ref = refs[idx]; idx += 1      # (L, B, H)

        H = hidden
        inp = x_ref[...]                     # layer input, (B, E) then (B, H)
        for l, (w_ref, b_ref) in enumerate(layer_refs):
            h_prev = h0_ref[l]               # (B, H)
            c_prev = c0_ref[l]               # (B, H)
            # Single fused MXU dot: [x | h] @ [W_ih^T ; W_hh^T] + (b_ih + b_hh)
            xh = jnp.concatenate([inp, h_prev], axis=-1)     # (B, in_dim + H)
            gates = (jnp.dot(xh, w_ref[...],
                             preferred_element_type=jnp.float32)
                     + b_ref[...])                           # (B, 4H)
            # PyTorch gate order [i, f, g, o]
            i_g = jax.nn.sigmoid(gates[:, 0 * H:1 * H])
            f_g = jax.nn.sigmoid(gates[:, 1 * H:2 * H])
            g_g = jnp.tanh(gates[:, 2 * H:3 * H])
            o_g = jax.nn.sigmoid(gates[:, 3 * H:4 * H])

            c_new = f_g * c_prev + i_g * g_g
            h_new = o_g * jnp.tanh(c_new)

            h_out_ref[l] = h_new.astype(h_out_ref.dtype)
            c_out_ref[l] = c_new.astype(c_out_ref.dtype)
            inp = h_new

        # Fused output projection: logits = h_top @ W_out^T + b_out
        logits_ref[...] = (jnp.dot(inp, wout_ref[...],
                                   preferred_element_type=jnp.float32)
                           + bout_ref[...]).astype(logits_ref.dtype)

    return kernel


def decoder_step(x, h0, c0, layer_ws, layer_bs, w_out_t, b_out):
    """One fused decoder step.

    x:        (B, E) f32 embedded tokens (dropout already applied / identity)
    h0, c0:   (L, B, H) f32
    layer_ws: list of (in_dim_l + H, 4H) fused transposed LSTM weights
    layer_bs: list of (1, 4H) fused biases (b_ih + b_hh)
    w_out_t:  (H, V) transposed Linear weight
    b_out:    (1, V) Linear bias
    returns logits (B, V), h_new (L, B, H), c_new (L, B, H)
    """
    B, E = x.shape
    L, _, H = h0.shape
    V = w_out_t.shape[1]

    kernel = _make_decoder_kernel(L, H)

    in_arrays = [x, h0, c0]
    in_specs = [
        pl.BlockSpec((B, E), lambda i: (0, 0)),
        pl.BlockSpec((L, B, H), lambda i: (0, 0, 0)),
        pl.BlockSpec((L, B, H), lambda i: (0, 0, 0)),
    ]
    for w, b in zip(layer_ws, layer_bs):
        in_arrays += [w, b]
        in_specs += [
            pl.BlockSpec(w.shape, lambda i: (0, 0)),
            pl.BlockSpec(b.shape, lambda i: (0, 0)),
        ]
    in_arrays += [w_out_t, b_out]
    in_specs += [
        pl.BlockSpec(w_out_t.shape, lambda i: (0, 0)),
        pl.BlockSpec(b_out.shape, lambda i: (0, 0)),
    ]

    out_shapes = (
        jax.ShapeDtypeStruct((B, V), jnp.float32),
        jax.ShapeDtypeStruct((L, B, H), jnp.float32),
        jax.ShapeDtypeStruct((L, B, H), jnp.float32),
    )
    out_specs = [
        pl.BlockSpec((B, V), lambda i: (0, 0)),
        pl.BlockSpec((L, B, H), lambda i: (0, 0, 0)),
        pl.BlockSpec((L, B, H), lambda i: (0, 0, 0)),
    ]

    return pl.pallas_call(
        kernel,
        out_shape=out_shapes,
        grid_spec=pltpu.PrefetchScalarGridSpec(
            num_scalar_prefetch=0,
            grid=(1,),                       # grid collapsed: single fused step
            in_specs=in_specs,
            out_specs=out_specs,
        ),
        compiler_params=pltpu.CompilerParams(
            dimension_semantics=("arbitrary",)),
    )(*in_arrays)


class Seq2SeqDecoderPallas:
    """JAX/Pallas equivalent of the PyTorch Seq2SeqDecoder (eval mode)."""

    def __init__(self, input_size, embedding_size, hidden_layer_size,
                 num_hidden_layers, output_size, dropout_rate, key):
        self.num_layers = num_hidden_layers
        self.hidden = hidden_layer_size
        self.output_size = output_size

        keys = jax.random.split(key, 3 + 4 * num_hidden_layers)
        # Embedding table (torch.nn.Embedding init ~ N(0, 1))
        self.embedding = jax.random.normal(
            keys[0], (input_size, embedding_size), dtype=jnp.float32)

        # LSTM params, PyTorch init U(-1/sqrt(H), 1/sqrt(H)), gate order [i,f,g,o].
        # Hoisted weight prep: fuse [W_ih^T ; W_hh^T] on K and fold b_ih + b_hh
        # once at init so nothing is re-materialized per call.
        bound = 1.0 / float(hidden_layer_size) ** 0.5
        self.layer_ws, self.layer_bs = [], []
        for l in range(num_hidden_layers):
            in_dim = embedding_size if l == 0 else hidden_layer_size
            k = keys[1 + 4 * l: 1 + 4 * (l + 1)]
            w_ih = jax.random.uniform(k[0], (4 * hidden_layer_size, in_dim),
                                      jnp.float32, -bound, bound)
            w_hh = jax.random.uniform(k[1], (4 * hidden_layer_size, hidden_layer_size),
                                      jnp.float32, -bound, bound)
            b_ih = jax.random.uniform(k[2], (4 * hidden_layer_size,),
                                      jnp.float32, -bound, bound)
            b_hh = jax.random.uniform(k[3], (4 * hidden_layer_size,),
                                      jnp.float32, -bound, bound)
            w_fused = jnp.concatenate(
                [jnp.transpose(w_ih), jnp.transpose(w_hh)], axis=0)   # (in+H, 4H)
            b_fused = (b_ih + b_hh).reshape(1, 4 * hidden_layer_size)
            self.layer_ws.append(w_fused.astype(jnp.float32))
            self.layer_bs.append(b_fused.astype(jnp.float32))

        # Output Linear, PyTorch init U(-1/sqrt(fan_in), 1/sqrt(fan_in))
        ob = 1.0 / float(hidden_layer_size) ** 0.5
        w_out = jax.random.uniform(keys[-2], (output_size, hidden_layer_size),
                                   jnp.float32, -ob, ob)
        b_out = jax.random.uniform(keys[-1], (output_size,),
                                   jnp.float32, -ob, ob)
        self.w_out_t = jnp.transpose(w_out).astype(jnp.float32)        # (H, V)
        self.b_out = b_out.reshape(1, output_size).astype(jnp.float32)

        # jit the entire forward (gather + fused kernel) once.
        self._fwd = jax.jit(self._forward)

    def _forward(self, decoder_input, hidden_state, cell):
        # decoder_input: (batch,) int32 token ids  (== PyTorch input before unsqueeze(0))
        x = jnp.take(self.embedding, decoder_input, axis=0)    # (B, E), glue gather
        # Dropout(eval) == identity.
        logits, h_new, c_new = decoder_step(
            x, hidden_state, cell, self.layer_ws, self.layer_bs,
            self.w_out_t, self.b_out)
        return logits, h_new, c_new

    def __call__(self, decoder_input, hidden_state, cell):
        return self._fwd(decoder_input, hidden_state, cell)


if __name__ == "__main__":
    vocab_size = 256          # input_size == output_size (len(post_field.vocab))
    embedding_size = 128
    hidden_layer_size = 256
    num_hidden_layers = 2
    dropout_rate = 0.5
    batch = 8

    key = jax.random.PRNGKey(0)
    k_params, k_tokens, k_h, k_c = jax.random.split(key, 4)

    model = Seq2SeqDecoderPallas(vocab_size, embedding_size, hidden_layer_size,
                                 num_hidden_layers, vocab_size, dropout_rate,
                                 k_params)

    decoder_input = jax.random.randint(k_tokens, (batch,), 0, vocab_size,
                                       dtype=jnp.int32)
    hidden_state = jax.random.normal(
        k_h, (num_hidden_layers, batch, hidden_layer_size), dtype=jnp.float32)
    cell = jax.random.normal(
        k_c, (num_hidden_layers, batch, hidden_layer_size), dtype=jnp.float32)

    logits, hidden_state_new, cell_new = model(decoder_input, hidden_state, cell)
    jax.block_until_ready((logits, hidden_state_new, cell_new))

    assert logits.shape == (batch, vocab_size)
    assert hidden_state_new.shape == (num_hidden_layers, batch, hidden_layer_size)
    assert cell_new.shape == (num_hidden_layers, batch, hidden_layer_size)
    print("KERNEL_OK")
</pallas_src>

<mosaic_0001>
module attributes {stable_mosaic.version = 11 : i64} {
  func.func @kernel(%arg0: i32, %arg1: memref<8x128xf32, #tpu.memory_space<vmem>>, %arg2: memref<2x8x256xf32, #tpu.memory_space<vmem>>, %arg3: memref<2x8x256xf32, #tpu.memory_space<vmem>>, %arg4: memref<384x1024xf32, #tpu.memory_space<vmem>>, %arg5: memref<1x1024xf32, #tpu.memory_space<vmem>>, %arg6: memref<512x1024xf32, #tpu.memory_space<vmem>>, %arg7: memref<1x1024xf32, #tpu.memory_space<vmem>>, %arg8: memref<256x256xf32, #tpu.memory_space<vmem>>, %arg9: memref<1x256xf32, #tpu.memory_space<vmem>>, %arg10: memref<8x256xf32, #tpu.memory_space<vmem>>, %arg11: memref<2x8x256xf32, #tpu.memory_space<vmem>>, %arg12: memref<2x8x256xf32, #tpu.memory_space<vmem>>) attributes {dimension_semantics = [#tpu.dimension_semantics<arbitrary>], iteration_bounds = array<i64: 1>, scalar_prefetch = 0 : i64, scratch_operands = 0 : i64, tpu.core_type = #tpu.core_type<tc>, window_params = [{pipeline_mode = #tpu.pipeline_mode<synchronous>, transform_indices = @transform_0, window_bounds = array<i64: 8, 128>}, {pipeline_mode = #tpu.pipeline_mode<synchronous>, transform_indices = @transform_1, window_bounds = array<i64: 2, 8, 256>}, {pipeline_mode = #tpu.pipeline_mode<synchronous>, transform_indices = @transform_2, window_bounds = array<i64: 2, 8, 256>}, {pipeline_mode = #tpu.pipeline_mode<synchronous>, transform_indices = @transform_3, window_bounds = array<i64: 384, 1024>}, {pipeline_mode = #tpu.pipeline_mode<synchronous>, transform_indices = @transform_4, window_bounds = array<i64: 1, 1024>}, {pipeline_mode = #tpu.pipeline_mode<synchronous>, transform_indices = @transform_5, window_bounds = array<i64: 512, 1024>}, {pipeline_mode = #tpu.pipeline_mode<synchronous>, transform_indices = @transform_6, window_bounds = array<i64: 1, 1024>}, {pipeline_mode = #tpu.pipeline_mode<synchronous>, transform_indices = @transform_7, window_bounds = array<i64: 256, 256>}, {pipeline_mode = #tpu.pipeline_mode<synchronous>, transform_indices = @transform_8, window_bounds = array<i64: 1, 256>}, {pipeline_mode = #tpu.pipeline_mode<synchronous>, transform_indices = @transform_9, window_bounds = array<i64: 8, 256>}, {pipeline_mode = #tpu.pipeline_mode<synchronous>, transform_indices = @transform_10, window_bounds = array<i64: 2, 8, 256>}, {pipeline_mode = #tpu.pipeline_mode<synchronous>, transform_indices = @transform_11, window_bounds = array<i64: 2, 8, 256>}]} {
    %c0 = arith.constant 0 : index
    %c0_0 = arith.constant 0 : index
    %0 = vector.load %arg1[%c0, %c0_0] : memref<8x128xf32, #tpu.memory_space<vmem>>, vector<8x128xf32>
    %c0_1 = arith.constant 0 : index
    %c0_2 = arith.constant 0 : index
    %c0_3 = arith.constant 0 : index
    %1 = vector.load %arg2[%c0_1, %c0_2, %c0_3] : memref<2x8x256xf32, #tpu.memory_space<vmem>>, vector<1x8x256xf32>
    %2 = vector.shape_cast %1 : vector<1x8x256xf32> to vector<8x256xf32>
    %c0_4 = arith.constant 0 : index
    %c0_5 = arith.constant 0 : index
    %c0_6 = arith.constant 0 : index
    %3 = vector.load %arg3[%c0_4, %c0_5, %c0_6] : memref<2x8x256xf32, #tpu.memory_space<vmem>>, vector<1x8x256xf32>
    %4 = vector.shape_cast %3 : vector<1x8x256xf32> to vector<8x256xf32>
    %5 = tpu.concatenate %0, %2 in 1 : vector<8x128xf32>, vector<8x256xf32> -> vector<8x384xf32>
    %c0_7 = arith.constant 0 : index
    %c0_8 = arith.constant 0 : index
    %6 = vector.load %arg4[%c0_7, %c0_8] : memref<384x1024xf32, #tpu.memory_space<vmem>>, vector<384x1024xf32>
    %cst = arith.constant dense<0.000000e+00> : vector<8x1024xf32>
    %7 = tpu.matmul %5, %6, %cst {dimension_numbers = #tpu.dot_dimension_numbers<[1], [0], [0], [1], [0, 0, 1, 1], [], []>} : vector<8x384xf32>, vector<384x1024xf32>, vector<8x1024xf32> -> vector<8x1024xf32>
    %c0_9 = arith.constant 0 : index
    %c0_10 = arith.constant 0 : index
    %8 = vector.load %arg5[%c0_9, %c0_10] : memref<1x1024xf32, #tpu.memory_space<vmem>>, vector<1x1024xf32>
    %9 = vector.broadcast %8 : vector<1x1024xf32> to vector<8x1024xf32>
    %10 = arith.addf %7, %9 : vector<8x1024xf32>
    %11 = vector.extract_strided_slice %10 {offsets = [0, 0], sizes = [8, 256], strides = [1, 1]} : vector<8x1024xf32> to vector<8x256xf32>
    %12 = arith.negf %11 : vector<8x256xf32>
    %13 = math.exp %12 : vector<8x256xf32>
    %cst_11 = arith.constant 1.000000e+00 : f32
    %14 = vector.broadcast %cst_11 : f32 to vector<8x256xf32>
    %15 = arith.addf %14, %13 : vector<8x256xf32>
    %16 = arith.divf %14, %15 : vector<8x256xf32>
    %17 = vector.extract_strided_slice %10 {offsets = [0, 256], sizes = [8, 256], strides = [1, 1]} : vector<8x1024xf32> to vector<8x256xf32>
    %18 = arith.negf %17 : vector<8x256xf32>
    %19 = math.exp %18 : vector<8x256xf32>
    %cst_12 = arith.constant 1.000000e+00 : f32
    %20 = vector.broadcast %cst_12 : f32 to vector<8x256xf32>
    %21 = arith.addf %20, %19 : vector<8x256xf32>
    %22 = arith.divf %20, %21 : vector<8x256xf32>
    %23 = vector.extract_strided_slice %10 {offsets = [0, 512], sizes = [8, 256], strides = [1, 1]} : vector<8x1024xf32> to vector<8x256xf32>
    %24 = math.tanh %23 : vector<8x256xf32>
    %25 = vector.extract_strided_slice %10 {offsets = [0, 768], sizes = [8, 256], strides = [1, 1]} : vector<8x1024xf32> to vector<8x256xf32>
    %26 = arith.negf %25 : vector<8x256xf32>
    %27 = math.exp %26 : vector<8x256xf32>
    %cst_13 = arith.constant 1.000000e+00 : f32
    %28 = vector.broadcast %cst_13 : f32 to vector<8x256xf32>
    %29 = arith.addf %28, %27 : vector<8x256xf32>
    %30 = arith.divf %28, %29 : vector<8x256xf32>
    %31 = arith.mulf %22, %4 : vector<8x256xf32>
    %32 = arith.mulf %16, %24 : vector<8x256xf32>
    %33 = arith.addf %31, %32 : vector<8x256xf32>
    %34 = math.tanh %33 : vector<8x256xf32>
    %35 = arith.mulf %30, %34 : vector<8x256xf32>
    %c0_14 = arith.constant 0 : index
    %c0_15 = arith.constant 0 : index
    %c0_16 = arith.constant 0 : index
    %36 = vector.load %arg11[%c0_14, %c0_15, %c0_16] : memref<2x8x256xf32, #tpu.memory_space<vmem>>, vector<1x8x256xf32>
    %37 = vector.shape_cast %36 : vector<1x8x256xf32> to vector<8x256xf32>
    %38 = vector.shape_cast %35 : vector<8x256xf32> to vector<1x8x256xf32>
    tpu.vector_store %arg11[%c0_14, %c0_15, %c0_16], %38 {strides = array<i32>} : memref<2x8x256xf32, #tpu.memory_space<vmem>>, vector<1x8x256xf32>,
    %c0_17 = arith.constant 0 : index
    %c0_18 = arith.constant 0 : index
    %c0_19 = arith.constant 0 : index
    %39 = vector.load %arg12[%c0_17, %c0_18, %c0_19] : memref<2x8x256xf32, #tpu.memory_space<vmem>>, vector<1x8x256xf32>
    %40 = vector.shape_cast %39 : vector<1x8x256xf32> to vector<8x256xf32>
    %41 = vector.shape_cast %33 : vector<8x256xf32> to vector<1x8x256xf32>
    tpu.vector_store %arg12[%c0_17, %c0_18, %c0_19], %41 {strides = array<i32>} : memref<2x8x256xf32, #tpu.memory_space<vmem>>, vector<1x8x256xf32>,
    %c1 = arith.constant 1 : index
    %c0_20 = arith.constant 0 : index
    %c0_21 = arith.constant 0 : index
    %42 = vector.load %arg2[%c1, %c0_20, %c0_21] : memref<2x8x256xf32, #tpu.memory_space<vmem>>, vector<1x8x256xf32>
    %43 = vector.shape_cast %42 : vector<1x8x256xf32> to vector<8x256xf32>
    %c1_22 = arith.constant 1 : index
    %c0_23 = arith.constant 0 : index
    %c0_24 = arith.constant 0 : index
    %44 = vector.load %arg3[%c1_22, %c0_23, %c0_24] : memref<2x8x256xf32, #tpu.memory_space<vmem>>, vector<1x8x256xf32>
    %45 = vector.shape_cast %44 : vector<1x8x256xf32> to vector<8x256xf32>
    %46 = tpu.concatenate %35, %43 in 1 : vector<8x256xf32>, vector<8x256xf32> -> vector<8x512xf32>
    %c0_25 = arith.constant 0 : index
    %c0_26 = arith.constant 0 : index
    %47 = vector.load %arg6[%c0_25, %c0_26] : memref<512x1024xf32, #tpu.memory_space<vmem>>, vector<512x1024xf32>
    %cst_27 = arith.constant dense<0.000000e+00> : vector<8x1024xf32>
    %48 = tpu.matmul %46, %47, %cst_27 {dimension_numbers = #tpu.dot_dimension_numbers<[1], [0], [0], [1], [0, 0, 1, 1], [], []>} : vector<8x512xf32>, vector<512x1024xf32>, vector<8x1024xf32> -> vector<8x1024xf32>
    %c0_28 = arith.constant 0 : index
    %c0_29 = arith.constant 0 : index
    %49 = vector.load %arg7[%c0_28, %c0_29] : memref<1x1024xf32, #tpu.memory_space<vmem>>, vector<1x1024xf32>
    %50 = vector.broadcast %49 : vector<1x1024xf32> to vector<8x1024xf32>
    %51 = arith.addf %48, %50 : vector<8x1024xf32>
    %52 = vector.extract_strided_slice %51 {offsets = [0, 0], sizes = [8, 256], strides = [1, 1]} : vector<8x1024xf32> to vector<8x256xf32>
    %53 = arith.negf %52 : vector<8x256xf32>
    %54 = math.exp %53 : vector<8x256xf32>
    %cst_30 = arith.constant 1.000000e+00 : f32
    %55 = vector.broadcast %cst_30 : f32 to vector<8x256xf32>
    %56 = arith.addf %55, %54 : vector<8x256xf32>
    %57 = arith.divf %55, %56 : vector<8x256xf32>
    %58 = vector.extract_strided_slice %51 {offsets = [0, 256], sizes = [8, 256], strides = [1, 1]} : vector<8x1024xf32> to vector<8x256xf32>
    %59 = arith.negf %58 : vector<8x256xf32>
    %60 = math.exp %59 : vector<8x256xf32>
    %cst_31 = arith.constant 1.000000e+00 : f32
    %61 = vector.broadcast %cst_31 : f32 to vector<8x256xf32>
    %62 = arith.addf %61, %60 : vector<8x256xf32>
    %63 = arith.divf %61, %62 : vector<8x256xf32>
    %64 = vector.extract_strided_slice %51 {offsets = [0, 512], sizes = [8, 256], strides = [1, 1]} : vector<8x1024xf32> to vector<8x256xf32>
    %65 = math.tanh %64 : vector<8x256xf32>
    %66 = vector.extract_strided_slice %51 {offsets = [0, 768], sizes = [8, 256], strides = [1, 1]} : vector<8x1024xf32> to vector<8x256xf32>
    %67 = arith.negf %66 : vector<8x256xf32>
    %68 = math.exp %67 : vector<8x256xf32>
    %cst_32 = arith.constant 1.000000e+00 : f32
    %69 = vector.broadcast %cst_32 : f32 to vector<8x256xf32>
    %70 = arith.addf %69, %68 : vector<8x256xf32>
    %71 = arith.divf %69, %70 : vector<8x256xf32>
    %72 = arith.mulf %63, %45 : vector<8x256xf32>
    %73 = arith.mulf %57, %65 : vector<8x256xf32>
    %74 = arith.addf %72, %73 : vector<8x256xf32>
    %75 = math.tanh %74 : vector<8x256xf32>
    %76 = arith.mulf %71, %75 : vector<8x256xf32>
    %c1_33 = arith.constant 1 : index
    %c0_34 = arith.constant 0 : index
    %c0_35 = arith.constant 0 : index
    %77 = vector.load %arg11[%c1_33, %c0_34, %c0_35] : memref<2x8x256xf32, #tpu.memory_space<vmem>>, vector<1x8x256xf32>
    %78 = vector.shape_cast %77 : vector<1x8x256xf32> to vector<8x256xf32>
    %79 = vector.shape_cast %76 : vector<8x256xf32> to vector<1x8x256xf32>
    tpu.vector_store %arg11[%c1_33, %c0_34, %c0_35], %79 {strides = array<i32>} : memref<2x8x256xf32, #tpu.memory_space<vmem>>, vector<1x8x256xf32>,
    %c1_36 = arith.constant 1 : index
    %c0_37 = arith.constant 0 : index
    %c0_38 = arith.constant 0 : index
    %80 = vector.load %arg12[%c1_36, %c0_37, %c0_38] : memref<2x8x256xf32, #tpu.memory_space<vmem>>, vector<1x8x256xf32>
    %81 = vector.shape_cast %80 : vector<1x8x256xf32> to vector<8x256xf32>
    %82 = vector.shape_cast %74 : vector<8x256xf32> to vector<1x8x256xf32>
    tpu.vector_store %arg12[%c1_36, %c0_37, %c0_38], %82 {strides = array<i32>} : memref<2x8x256xf32, #tpu.memory_space<vmem>>, vector<1x8x256xf32>,
    %c0_39 = arith.constant 0 : index
    %c0_40 = arith.constant 0 : index
    %83 = vector.load %arg8[%c0_39, %c0_40] : memref<256x256xf32, #tpu.memory_space<vmem>>, vector<256x256xf32>
    %cst_41 = arith.constant dense<0.000000e+00> : vector<8x256xf32>
    %84 = tpu.matmul %76, %83, %cst_41 {dimension_numbers = #tpu.dot_dimension_numbers<[1], [0], [0], [1], [0, 0, 1, 1], [], []>} : vector<8x256xf32>, vector<256x256xf32>, vector<8x256xf32> -> vector<8x256xf32>
    %c0_42 = arith.constant 0 : index
    %c0_43 = arith.constant 0 : index
    %85 = vector.load %arg9[%c0_42, %c0_43] : memref<1x256xf32, #tpu.memory_space<vmem>>, vector<1x256xf32>
    %86 = vector.broadcast %85 : vector<1x256xf32> to vector<8x256xf32>
    %87 = arith.addf %84, %86 : vector<8x256xf32>
    %c0_44 = arith.constant 0 : index
    %c0_45 = arith.constant 0 : index
    %88 = vector.load %arg10[%c0_44, %c0_45] : memref<8x256xf32, #tpu.memory_space<vmem>>, vector<8x256xf32>
    tpu.vector_store %arg10[%c0_44, %c0_45], %87 {strides = array<i32>} : memref<8x256xf32, #tpu.memory_space<vmem>>, vector<8x256xf32>,
    return
  }
  func.func @transform_0(%arg0: i32) -> (i32, i32) {
    %c0_i32 = arith.constant 0 : i32
    %c0_i32_0 = arith.constant 0 : i32
    %c0_i32_1 = arith.constant 0 : i32
    return %c0_i32, %c0_i32_0 : i32, i32
  }
  func.func @transform_1(%arg0: i32) -> (i32, i32, i32) {
    %c0_i32 = arith.constant 0 : i32
    %c0_i32_0 = arith.constant 0 : i32
    %c0_i32_1 = arith.constant 0 : i32
    %c0_i32_2 = arith.constant 0 : i32
    return %c0_i32, %c0_i32_0, %c0_i32_1 : i32, i32, i32
  }
  func.func @transform_2(%arg0: i32) -> (i32, i32, i32) {
    %c0_i32 = arith.constant 0 : i32
    %c0_i32_0 = arith.constant 0 : i32
    %c0_i32_1 = arith.constant 0 : i32
    %c0_i32_2 = arith.constant 0 : i32
    return %c0_i32, %c0_i32_0, %c0_i32_1 : i32, i32, i32
  }
  func.func @transform_3(%arg0: i32) -> (i32, i32) {
    %c0_i32 = arith.constant 0 : i32
    %c0_i32_0 = arith.constant 0 : i32
    %c0_i32_1 = arith.constant 0 : i32
    return %c0_i32, %c0_i32_0 : i32, i32
  }
  func.func @transform_4(%arg0: i32) -> (i32, i32) {
    %c0_i32 = arith.constant 0 : i32
    %c0_i32_0 = arith.constant 0 : i32
    %c0_i32_1 = arith.constant 0 : i32
    return %c0_i32, %c0_i32_0 : i32, i32
  }
  func.func @transform_5(%arg0: i32) -> (i32, i32) {
    %c0_i32 = arith.constant 0 : i32
    %c0_i32_0 = arith.constant 0 : i32
    %c0_i32_1 = arith.constant 0 : i32
    return %c0_i32, %c0_i32_0 : i32, i32
  }
  func.func @transform_6(%arg0: i32) -> (i32, i32) {
    %c0_i32 = arith.constant 0 : i32
    %c0_i32_0 = arith.constant 0 : i32
    %c0_i32_1 = arith.constant 0 : i32
    return %c0_i32, %c0_i32_0 : i32, i32
  }
  func.func @transform_7(%arg0: i32) -> (i32, i32) {
    %c0_i32 = arith.constant 0 : i32
    %c0_i32_0 = arith.constant 0 : i32
    %c0_i32_1 = arith.constant 0 : i32
    return %c0_i32, %c0_i32_0 : i32, i32
  }
  func.func @transform_8(%arg0: i32) -> (i32, i32) {
    %c0_i32 = arith.constant 0 : i32
    %c0_i32_0 = arith.constant 0 : i32
    %c0_i32_1 = arith.constant 0 : i32
    return %c0_i32, %c0_i32_0 : i32, i32
  }
  func.func @transform_9(%arg0: i32) -> (i32, i32) {
    %c0_i32 = arith.constant 0 : i32
    %c0_i32_0 = arith.constant 0 : i32
    %c0_i32_1 = arith.constant 0 : i32
    return %c0_i32, %c0_i32_0 : i32, i32
  }
  func.func @transform_10(%arg0: i32) -> (i32, i32, i32) {
    %c0_i32 = arith.constant 0 : i32
    %c0_i32_0 = arith.constant 0 : i32
    %c0_i32_1 = arith.constant 0 : i32
    %c0_i32_2 = arith.constant 0 : i32
    return %c0_i32, %c0_i32_0, %c0_i32_1 : i32, i32, i32
  }
  func.func @transform_11(%arg0: i32) -> (i32, i32, i32) {
    %c0_i32 = arith.constant 0 : i32
    %c0_i32_0 = arith.constant 0 : i32
    %c0_i32_1 = arith.constant 0 : i32
    %c0_i32_2 = arith.constant 0 : i32
    return %c0_i32, %c0_i32_0, %c0_i32_1 : i32, i32, i32
  }
}

</mosaic_0001>

<llo_original>
// kernel: _forward.1
$region0: #{_forward.1}
  #allocation0 [shape = 'u32[]', space=smem, size = 0x4, offset = 0x4, fixed_abs, tag = 'smem constant byte address 0x4 - core index']
  #allocation1 [shape = 'u32[144,128]{1,0:T(1,128)}', space=vmem, size = 0x12000, scoped, tag = 'internal scratch']
  %s0 = inlined_call_operand.vmem [shape: f32[8,128], index: 0, kind: input, shape index: {}]
  %s1 = inlined_call_operand.hbm [shape: f32[2,8,256], index: 1, kind: input, shape index: {}]
  %s2 = inlined_call_operand.hbm [shape: f32[2,8,256], index: 2, kind: input, shape index: {}]
  %s3 = inlined_call_operand.hbm [shape: f32[384,1024], index: 3, kind: input, shape index: {}]
  %s4 = inlined_call_operand.hbm [shape: f32[1,1024], index: 4, kind: input, shape index: {}]
  %s5 = inlined_call_operand.hbm [shape: f32[512,1024], index: 5, kind: input, shape index: {}]
  %s6 = inlined_call_operand.hbm [shape: f32[1,1024], index: 6, kind: input, shape index: {}]
  %s7 = inlined_call_operand.hbm [shape: f32[256,256], index: 7, kind: input, shape index: {}]
  %s8 = inlined_call_operand.hbm [shape: f32[1,256], index: 8, kind: input, shape index: {}]
  %s9 = inlined_call_operand.hbm [shape: f32[8,256], index: 9, kind: output, shape index: {0}]
  %s10 = inlined_call_operand.hbm [shape: f32[2,8,256], index: 10, kind: output, shape index: {1}]
  %s11 = inlined_call_operand.hbm [shape: f32[2,8,256], index: 11, kind: output, shape index: {2}]
  %12 = xla_tuple %s9, %s10, %s11
  %s13 = sld [smem:[#allocation0]]
  $region94: #{_forward.1} parent=0
    _
  %s15 = ssub.s32 1, %s13
  %s16 = scalar_select 0, %s15, %s13
  $region1: #{_forward.1} parent=0
    #allocation2 [shape = 'u8[16384]{0}', space=vmem, size = 0x4000, scoped, tag = 'input window, operand 1, single buffered']
    #allocation3 [shape = 's32[1]{0}', space=sflag, size = 0x4, scoped, tag = 'scoped memory for _forward.1']
    #allocation4 [shape = 's32[1]{0}', space=sflag, size = 0x4, scoped, tag = 'scoped memory for _forward.1']
    #allocation5 [shape = 'u8[16384]{0}', space=vmem, size = 0x4000, scoped, tag = 'input window, operand 2, single buffered']
    #allocation6 [shape = 's32[1]{0}', space=sflag, size = 0x4, scoped, tag = 'scoped memory for _forward.1']
    #allocation7 [shape = 'u8[1572864]{0}', space=vmem, size = 0x180000, scoped, tag = 'input window, operand 3, single buffered']
    #allocation8 [shape = 'u8[4096]{0}', space=vmem, size = 0x1000, scoped, tag = 'input window, operand 4, single buffered']
    #allocation9 [shape = 's32[1]{0}', space=sflag, size = 0x4, scoped, tag = 'scoped memory for _forward.1']
    #allocation10 [shape = 'u8[2097152]{0}', space=vmem, size = 0x200000, scoped, tag = 'input window, operand 5, single buffered']
    #allocation11 [shape = 'u8[4096]{0}', space=vmem, size = 0x1000, scoped, tag = 'input window, operand 6, single buffered']
    #allocation12 [shape = 's32[1]{0}', space=sflag, size = 0x4, scoped, tag = 'scoped memory for _forward.1']
    #allocation13 [shape = 'u8[262144]{0}', space=vmem, size = 0x40000, scoped, tag = 'input window, operand 7, single buffered']
    #allocation14 [shape = 'u8[1024]{0}', space=vmem, size = 0x400, scoped, tag = 'input window, operand 8, single buffered']
    #allocation15 [shape = 's32[1]{0}', space=sflag, size = 0x4, scoped, tag = 'scoped memory for _forward.1']
    #allocation16 [shape = 'u8[8192]{0}', space=vmem, size = 0x2000, scoped, tag = 'output window, operand 0, single buffered']
    #allocation17 [shape = 'u8[16384]{0}', space=vmem, size = 0x4000, scoped, tag = 'output window, operand 1, single buffered']
    #allocation18 [shape = 's32[1]{0}', space=sflag, size = 0x4, scoped, tag = 'scoped memory for _forward.1']
    #allocation19 [shape = 'u8[16384]{0}', space=vmem, size = 0x4000, scoped, tag = 'output window, operand 2, single buffered']
    %17 = vsyncpa [#allocation3], 0
    %18 = vsyncpa [#allocation6], 0
    %19 = vsyncpa [#allocation9], 0
    %20 = vsyncpa [#allocation12], 0
    %21 = vsyncpa [#allocation15], 0
    %22 = vsyncpa [#allocation4], 0
    %23 = vsyncpa [#allocation18], 0
    // Predicated region
    $region2: #{_forward.1} parent=1 // pred_check
      _
    $region3: #{_forward.1} parent=1 // pred_check_branch
      %25 = sbr.rel (0) target = $region5
    $region4: #{_forward.1} parent=1 // pred_region
      _
    $region5: #{_forward.1} parent=1 // pred_fallthru
      _
    // Predicated region
    $region6: #{_forward.1} parent=1 // pred_check
      _
    $region7: #{_forward.1} parent=1 // pred_check_branch
      %27 = sbr.rel (0) target = $region9
    $region8: #{_forward.1} parent=1 // pred_region
      %s29 = ssub.s32 512, 512
      %30 = vsyncadd [#allocation3], %s29
      %s31 = sshll.u32 [#allocation2], 4
      %s32 = int_to_ptr.vmem [resolvable:$true] %s31
      %37 = dma.hbm_to_vmem [thread:$0]  %s1, 512, %s32, [#allocation3], 256, 256, 16
    $region9: #{_forward.1} parent=1 // pred_fallthru
      _
    // Predicated region
    $region10: #{_forward.1} parent=1 // pred_check
      _
    $region11: #{_forward.1} parent=1 // pred_check_branch
      %39 = sbr.rel (0) target = $region13
    $region12: #{_forward.1} parent=1 // pred_region
      %s41 = ssub.s32 512, 512
      %42 = vsyncadd [#allocation6], %s41
      %s43 = sshll.u32 [#allocation5], 4
      %s44 = int_to_ptr.vmem [resolvable:$true] %s43
      %49 = dma.hbm_to_vmem [thread:$0]  %s2, 512, %s44, [#allocation6], 256, 256, 16
    $region13: #{_forward.1} parent=1 // pred_fallthru
      _
    // Predicated region
    $region14: #{_forward.1} parent=1 // pred_check
      _
    $region15: #{_forward.1} parent=1 // pred_check_branch
      %51 = sbr.rel (0) target = $region17
    $region16: #{_forward.1} parent=1 // pred_region
      %s53 = ssub.s32 49152, 49152
      %54 = vsyncadd [#allocation6], %s53
      %s55 = sshll.u32 [#allocation7], 4
      %s56 = int_to_ptr.vmem [resolvable:$true] %s55
      %61 = dma.hbm_to_vmem [thread:$0]  %s3, 49152, %s56, [#allocation6], 1024, 1024, 64
    $region17: #{_forward.1} parent=1 // pred_fallthru
      _
    // Predicated region
    $region18: #{_forward.1} parent=1 // pred_check
      _
    $region19: #{_forward.1} parent=1 // pred_check_branch
      %63 = sbr.rel (0) target = $region21
    $region20: #{_forward.1} parent=1 // pred_region
      %s65 = ssub.s32 128, 128
      %66 = vsyncadd [#allocation9], %s65
      %s68 = sshll.u32 [#allocation8], 4
      %s69 = int_to_ptr.vmem [resolvable:$true] %s68
      %71 = dma.hbm_to_vmem [thread:$0]  %s4, 128, %s69, [#allocation9]
    $region21: #{_forward.1} parent=1 // pred_fallthru
      _
    // Predicated region
    $region22: #{_forward.1} parent=1 // pred_check
      _
    $region23: #{_forward.1} parent=1 // pred_check_branch
      %73 = sbr.rel (0) target = $region25
    $region24: #{_forward.1} parent=1 // pred_region
      %s75 = ssub.s32 65536, 65536
      %76 = vsyncadd [#allocation9], %s75
      %s77 = sshll.u32 [#allocation10], 4
      %s78 = int_to_ptr.vmem [resolvable:$true] %s77
      %83 = dma.hbm_to_vmem [thread:$0]  %s5, 65536, %s78, [#allocation9], 1024, 1024, 64
    $region25: #{_forward.1} parent=1 // pred_fallthru
      _
    // Predicated region
    $region26: #{_forward.1} parent=1 // pred_check
      _
    $region27: #{_forward.1} parent=1 // pred_check_branch
      %85 = sbr.rel (0) target = $region29
    $region28: #{_forward.1} parent=1 // pred_region
      %s87 = ssub.s32 128, 128
      %88 = vsyncadd [#allocation12], %s87
      %s90 = sshll.u32 [#allocation11], 4
      %s91 = int_to_ptr.vmem [resolvable:$true] %s90
      %93 = dma.hbm_to_vmem [thread:$0]  %s6, 128, %s91, [#allocation12]
    $region29: #{_forward.1} parent=1 // pred_fallthru
      _
    // Predicated region
    $region30: #{_forward.1} parent=1 // pred_check
      _
    $region31: #{_forward.1} parent=1 // pred_check_branch
      %95 = sbr.rel (0) target = $region33
    $region32: #{_forward.1} parent=1 // pred_region
      %s97 = ssub.s32 8192, 8192
      %98 = vsyncadd [#allocation12], %s97
      %s99 = sshll.u32 [#allocation13], 4
      %s100 = int_to_ptr.vmem [resolvable:$true] %s99
      %105 = dma.hbm_to_vmem [thread:$0]  %s7, 8192, %s100, [#allocation12], 256, 256, 16
    $region33: #{_forward.1} parent=1 // pred_fallthru
      _
    // Predicated region
    $region34: #{_forward.1} parent=1 // pred_check
      _
    $region35: #{_forward.1} parent=1 // pred_check_branch
      %107 = sbr.rel (0) target = $region37
    $region36: #{_forward.1} parent=1 // pred_region
      %s109 = ssub.s32 32, 32
      %110 = vsyncadd [#allocation15], %s109
      %s112 = sshll.u32 [#allocation14], 4
      %s113 = int_to_ptr.vmem [resolvable:$true] %s112
      %115 = dma.hbm_to_vmem [thread:$0]  %s8, 32, %s113, [#allocation15]
    $region37: #{_forward.1} parent=1 // pred_fallthru
      _
    // Predicated region
    $region38: #{_forward.1} parent=1 // pred_check
      _
    $region39: #{_forward.1} parent=1 // pred_check_branch
      %117 = sbr.rel (0) target = $region41
    $region40: #{_forward.1} parent=1 // pred_region
      %118 = dma.done [#allocation3], 512
    $region41: #{_forward.1} parent=1 // pred_fallthru
      _
    // Predicated region
    $region42: #{_forward.1} parent=1 // pred_check
      _
    $region43: #{_forward.1} parent=1 // pred_check_branch
      %120 = sbr.rel (0) target = $region45
    $region44: #{_forward.1} parent=1 // pred_region
      %121 = dma.done [#allocation6], 512
    $region45: #{_forward.1} parent=1 // pred_fallthru
      _
    // Predicated region
    $region46: #{_forward.1} parent=1 // pred_check
      _
    $region47: #{_forward.1} parent=1 // pred_check_branch
      %123 = sbr.rel (0) target = $region49
    $region48: #{_forward.1} parent=1 // pred_region
      %124 = dma.done [#allocation6], 49152
    $region49: #{_forward.1} parent=1 // pred_fallthru
      _
    // Predicated region
    $region50: #{_forward.1} parent=1 // pred_check
      _
    $region51: #{_forward.1} parent=1 // pred_check_branch
      %126 = sbr.rel (0) target = $region53
    $region52: #{_forward.1} parent=1 // pred_region
      %127 = dma.done [#allocation9], 128
    $region53: #{_forward.1} parent=1 // pred_fallthru
      _
    // Predicated region
    $region54: #{_forward.1} parent=1 // pred_check
      _
    $region55: #{_forward.1} parent=1 // pred_check_branch
      %129 = sbr.rel (0) target = $region57
    $region56: #{_forward.1} parent=1 // pred_region
      %130 = dma.done [#allocation9], 65536
    $region57: #{_forward.1} parent=1 // pred_fallthru
      _
    // Predicated region
    $region58: #{_forward.1} parent=1 // pred_check
      _
    $region59: #{_forward.1} parent=1 // pred_check_branch
      %132 = sbr.rel (0) target = $region61
    $region60: #{_forward.1} parent=1 // pred_region
      %133 = dma.done [#allocation12], 128
    $region61: #{_forward.1} parent=1 // pred_fallthru
      _
    // Predicated region
    $region62: #{_forward.1} parent=1 // pred_check
      _
    $region63: #{_forward.1} parent=1 // pred_check_branch
      %135 = sbr.rel (0) target = $region65
    $region64: #{_forward.1} parent=1 // pred_region
      %136 = dma.done [#allocation12], 8192
    $region65: #{_forward.1} parent=1 // pred_fallthru
      _
    // Predicated region
    $region66: #{_forward.1} parent=1 // pred_check
      _
    $region67: #{_forward.1} parent=1 // pred_check_branch
      %138 = sbr.rel (0) target = $region69
    $region68: #{_forward.1} parent=1 // pred_region
      %139 = dma.done [#allocation15], 32
    $region69: #{_forward.1} parent=1 // pred_fallthru
      _
    %v140 = vld [vmem:[%s0] sm:$0xff]
    %v141 = vld [vmem:[#allocation2] sm:$0xff]
    %v142 = vld [vmem:[#allocation2 + $0x8] sm:$0xff]
    %v143 = vld [vmem:[#allocation5] sm:$0xff]
    %v144 = vld [vmem:[#allocation5 + $0x8] sm:$0xff]
    %v145 = vld [vmem:[#allocation7] sm:$0xff]
    %v146 = vld [vmem:[#allocation7 + $0x8] sm:$0xff]
    %v147 = vld [vmem:[#allocation7 + $0x10] sm:$0xff]
    %v148 = vld [vmem:[#allocation7 + $0x18] sm:$0xff]
    %v149 = vld [vmem:[#allocation7 + $0x20] sm:$0xff]
    %v150 = vld [vmem:[#allocation7 + $0x28] sm:$0xff]
    %v151 = vld [vmem:[#allocation7 + $0x30] sm:$0xff]
    %v152 = vld [vmem:[#allocation7 + $0x38] sm:$0xff]
    %v153 = vld [vmem:[#allocation7 + $0x40] sm:$0xff]
    %v154 = vld [vmem:[#allocation7 + $0x48] sm:$0xff]
    %v155 = vld [vmem:[#allocation7 + $0x50] sm:$0xff]
    %v156 = vld [vmem:[#allocation7 + $0x58] sm:$0xff]
    %v157 = vld [vmem:[#allocation7 + $0x60] sm:$0xff]
    %v158 = vld [vmem:[#allocation7 + $0x68] sm:$0xff]
    %v159 = vld [vmem:[#allocation7 + $0x70] sm:$0xff]
    %v160 = vld [vmem:[#allocation7 + $0x78] sm:$0xff]
    %v161 = vld [vmem:[#allocation7 + $0x80] sm:$0xff]
    %v162 = vld [vmem:[#allocation7 + $0x88] sm:$0xff]
    %v163 = vld [vmem:[#allocation7 + $0x90] sm:$0xff]
    %v164 = vld [vmem:[#allocation7 + $0x98] sm:$0xff]
    %v165 = vld [vmem:[#allocation7 + $0xa0] sm:$0xff]
    %v166 = vld [vmem:[#allocation7 + $0xa8] sm:$0xff]
    %v167 = vld [vmem:[#allocation7 + $0xb0] sm:$0xff]
    %v168 = vld [vmem:[#allocation7 + $0xb8] sm:$0xff]
    %v169 = vld [vmem:[#allocation7 + $0xc0] sm:$0xff]
    %v170 = vld [vmem:[#allocation7 + $0xc8] sm:$0xff]
    %v171 = vld [vmem:[#allocation7 + $0xd0] sm:$0xff]
    %v172 = vld [vmem:[#allocation7 + $0xd8] sm:$0xff]
    %v173 = vld [vmem:[#allocation7 + $0xe0] sm:$0xff]
    %v174 = vld [vmem:[#allocation7 + $0xe8] sm:$0xff]
    %v175 = vld [vmem:[#allocation7 + $0xf0] sm:$0xff]
    %v176 = vld [vmem:[#allocation7 + $0xf8] sm:$0xff]
    %v177 = vld [vmem:[#allocation7 + $0x100] sm:$0xff]
    %v178 = vld [vmem:[#allocation7 + $0x108] sm:$0xff]
    %v179 = vld [vmem:[#allocation7 + $0x110] sm:$0xff]
    %v180 = vld [vmem:[#allocation7 + $0x118] sm:$0xff]
    %v181 = vld [vmem:[#allocation7 + $0x120] sm:$0xff]
    %v182 = vld [vmem:[#allocation7 + $0x128] sm:$0xff]
    %v183 = vld [vmem:[#allocation7 + $0x130] sm:$0xff]
    %v184 = vld [vmem:[#allocation7 + $0x138] sm:$0xff]
    %v185 = vld [vmem:[#allocation7 + $0x140] sm:$0xff]
    %v186 = vld [vmem:[#allocation7 + $0x148] sm:$0xff]
    %v187 = vld [vmem:[#allocation7 + $0x150] sm:$0xff]
    %v188 = vld [vmem:[#allocation7 + $0x158] sm:$0xff]
    %v189 = vld [vmem:[#allocation7 + $0x160] sm:$0xff]
    %v190 = vld [vmem:[#allocation7 + $0x168] sm:$0xff]
    %v191 = vld [vmem:[#allocation7 + $0x170] sm:$0xff]
    %v192 = vld [vmem:[#allocation7 + $0x178] sm:$0xff]
    %v193 = vld [vmem:[#allocation7 + $0x180] sm:$0xff]
    %v194 = vld [vmem:[#allocation7 + $0x188] sm:$0xff]
    %v195 = vld [vmem:[#allocation7 + $0x190] sm:$0xff]
    %v196 = vld [vmem:[#allocation7 + $0x198] sm:$0xff]
    %v197 = vld [vmem:[#allocation7 + $0x1a0] sm:$0xff]
    %v198 = vld [vmem:[#allocation7 + $0x1a8] sm:$0xff]
    %v199 = vld [vmem:[#allocation7 + $0x1b0] sm:$0xff]
    %v200 = vld [vmem:[#allocation7 + $0x1b8] sm:$0xff]
    %v201 = vld [vmem:[#allocation7 + $0x1c0] sm:$0xff]
    %v202 = vld [vmem:[#allocation7 + $0x1c8] sm:$0xff]
    %v203 = vld [vmem:[#allocation7 + $0x1d0] sm:$0xff]
    %v204 = vld [vmem:[#allocation7 + $0x1d8] sm:$0xff]
    %v205 = vld [vmem:[#allocation7 + $0x1e0] sm:$0xff]
    %v206 = vld [vmem:[#allocation7 + $0x1e8] sm:$0xff]
    %v207 = vld [vmem:[#allocation7 + $0x1f0] sm:$0xff]
    %v208 = vld [vmem:[#allocation7 + $0x1f8] sm:$0xff]
    %v209 = vld [vmem:[#allocation7 + $0x200] sm:$0xff]
    %v210 = vld [vmem:[#allocation7 + $0x208] sm:$0xff]
    %v211 = vld [vmem:[#allocation7 + $0x210] sm:$0xff]
    %v212 = vld [vmem:[#allocation7 + $0x218] sm:$0xff]
    %v213 = vld [vmem:[#allocation7 + $0x220] sm:$0xff]
    %v214 = vld [vmem:[#allocation7 + $0x228] sm:$0xff]
    %v215 = vld [vmem:[#allocation7 + $0x230] sm:$0xff]
    %v216 = vld [vmem:[#allocation7 + $0x238] sm:$0xff]
    %v217 = vld [vmem:[#allocation7 + $0x240] sm:$0xff]
    %v218 = vld [vmem:[#allocation7 + $0x248] sm:$0xff]
    %v219 = vld [vmem:[#allocation7 + $0x250] sm:$0xff]
    %v220 = vld [vmem:[#allocation7 + $0x258] sm:$0xff]
    %v221 = vld [vmem:[#allocation7 + $0x260] sm:$0xff]
    %v222 = vld [vmem:[#allocation7 + $0x268] sm:$0xff]
    %v223 = vld [vmem:[#allocation7 + $0x270] sm:$0xff]
    %v224 = vld [vmem:[#allocation7 + $0x278] sm:$0xff]
    %v225 = vld [vmem:[#allocation7 + $0x280] sm:$0xff]
    %v226 = vld [vmem:[#allocation7 + $0x288] sm:$0xff]
    %v227 = vld [vmem:[#allocation7 + $0x290] sm:$0xff]
    %v228 = vld [vmem:[#allocation7 + $0x298] sm:$0xff]
    %v229 = vld [vmem:[#allocation7 + $0x2a0] sm:$0xff]
    %v230 = vld [vmem:[#allocation7 + $0x2a8] sm:$0xff]
    %v231 = vld [vmem:[#allocation7 + $0x2b0] sm:$0xff]
    %v232 = vld [vmem:[#allocation7 + $0x2b8] sm:$0xff]
    %v233 = vld [vmem:[#allocation7 + $0x2c0] sm:$0xff]
    %v234 = vld [vmem:[#allocation7 + $0x2c8] sm:$0xff]
    %v235 = vld [vmem:[#allocation7 + $0x2d0] sm:$0xff]
    %v236 = vld [vmem:[#allocation7 + $0x2d8] sm:$0xff]
    %v237 = vld [vmem:[#allocation7 + $0x2e0] sm:$0xff]
    %v238 = vld [vmem:[#allocation7 + $0x2e8] sm:$0xff]
    %v239 = vld [vmem:[#allocation7 + $0x2f0] sm:$0xff]
    %v240 = vld [vmem:[#allocation7 + $0x2f8] sm:$0xff]
    %v241 = vld [vmem:[#allocation7 + $0x300] sm:$0xff]
    %v242 = vld [vmem:[#allocation7 + $0x308] sm:$0xff]
    %v243 = vld [vmem:[#allocation7 + $0x310] sm:$0xff]
    %v244 = vld [vmem:[#allocation7 + $0x318] sm:$0xff]
    %v245 = vld [vmem:[#allocation7 + $0x320] sm:$0xff]
    %v246 = vld [vmem:[#allocation7 + $0x328] sm:$0xff]
    %v247 = vld [vmem:[#allocation7 + $0x330] sm:$0xff]
    %v248 = vld [vmem:[#allocation7 + $0x338] sm:$0xff]
    %v249 = vld [vmem:[#allocation7 + $0x340] sm:$0xff]
    %v250 = vld [vmem:[#allocation7 + $0x348] sm:$0xff]
    %v251 = vld [vmem:[#allocation7 + $0x350] sm:$0xff]
    %v252 = vld [vmem:[#allocation7 + $0x358] sm:$0xff]
    %v253 = vld [vmem:[#allocation7 + $0x360] sm:$0xff]
    %v254 = vld [vmem:[#allocation7 + $0x368] sm:$0xff]
    %v255 = vld [vmem:[#allocation7 + $0x370] sm:$0xff]
    %v256 = vld [vmem:[#allocation7 + $0x378] sm:$0xff]
    %v257 = vld [vmem:[#allocation7 + $0x380] sm:$0xff]
    %v258 = vld [vmem:[#allocation7 + $0x388] sm:$0xff]
    %v259 = vld [vmem:[#allocation7 + $0x390] sm:$0xff]
    %v260 = vld [vmem:[#allocation7 + $0x398] sm:$0xff]
    %v261 = vld [vmem:[#allocation7 + $0x3a0] sm:$0xff]
    %v262 = vld [vmem:[#allocation7 + $0x3a8] sm:$0xff]
    %v263 = vld [vmem:[#allocation7 + $0x3b0] sm:$0xff]
    %v264 = vld [vmem:[#allocation7 + $0x3b8] sm:$0xff]
    %v265 = vld [vmem:[#allocation7 + $0x3c0] sm:$0xff]
    %v266 = vld [vmem:[#allocation7 + $0x3c8] sm:$0xff]
    %v267 = vld [vmem:[#allocation7 + $0x3d0] sm:$0xff]
    %v268 = vld [vmem:[#allocation7 + $0x3d8] sm:$0xff]
    %v269 = vld [vmem:[#allocation7 + $0x3e0] sm:$0xff]
    %v270 = vld [vmem:[#allocation7 + $0x3e8] sm:$0xff]
    %v271 = vld [vmem:[#allocation7 + $0x3f0] sm:$0xff]
    %v272 = vld [vmem:[#allocation7 + $0x3f8] sm:$0xff]
    %v273 = vld [vmem:[#allocation7 + $0x400] sm:$0xff]
    %v274 = vld [vmem:[#allocation7 + $0x408] sm:$0xff]
    %v275 = vld [vmem:[#allocation7 + $0x410] sm:$0xff]
    %v276 = vld [vmem:[#allocation7 + $0x418] sm:$0xff]
    %v277 = vld [vmem:[#allocation7 + $0x420] sm:$0xff]
    %v278 = vld [vmem:[#allocation7 + $0x428] sm:$0xff]
    %v279 = vld [vmem:[#allocation7 + $0x430] sm:$0xff]
    %v280 = vld [vmem:[#allocation7 + $0x438] sm:$0xff]
    %v281 = vld [vmem:[#allocation7 + $0x440] sm:$0xff]
    %v282 = vld [vmem:[#allocation7 + $0x448] sm:$0xff]
    %v283 = vld [vmem:[#allocation7 + $0x450] sm:$0xff]
    %v284 = vld [vmem:[#allocation7 + $0x458] sm:$0xff]
    %v285 = vld [vmem:[#allocation7 + $0x460] sm:$0xff]
    %v286 = vld [vmem:[#allocation7 + $0x468] sm:$0xff]
    %v287 = vld [vmem:[#allocation7 + $0x470] sm:$0xff]
    %v288 = vld [vmem:[#allocation7 + $0x478] sm:$0xff]
    %v289 = vld [vmem:[#allocation7 + $0x480] sm:$0xff]
    %v290 = vld [vmem:[#allocation7 + $0x488] sm:$0xff]
    %v291 = vld [vmem:[#allocation7 + $0x490] sm:$0xff]
    %v292 = vld [vmem:[#allocation7 + $0x498] sm:$0xff]
    %v293 = vld [vmem:[#allocation7 + $0x4a0] sm:$0xff]
    %v294 = vld [vmem:[#allocation7 + $0x4a8] sm:$0xff]
    %v295 = vld [vmem:[#allocation7 + $0x4b0] sm:$0xff]
    %v296 = vld [vmem:[#allocation7 + $0x4b8] sm:$0xff]
    %v297 = vld [vmem:[#allocation7 + $0x4c0] sm:$0xff]
    %v298 = vld [vmem:[#allocation7 + $0x4c8] sm:$0xff]
    %v299 = vld [vmem:[#allocation7 + $0x4d0] sm:$0xff]
    %v300 = vld [vmem:[#allocation7 + $0x4d8] sm:$0xff]
    %v301 = vld [vmem:[#allocation7 + $0x4e0] sm:$0xff]
    %v302 = vld [vmem:[#allocation7 + $0x4e8] sm:$0xff]
    %v303 = vld [vmem:[#allocation7 + $0x4f0] sm:$0xff]
    %v304 = vld [vmem:[#allocation7 + $0x4f8] sm:$0xff]
    %v305 = vld [vmem:[#allocation7 + $0x500] sm:$0xff]
    %v306 = vld [vmem:[#allocation7 + $0x508] sm:$0xff]
    %v307 = vld [vmem:[#allocation7 + $0x510] sm:$0xff]
    %v308 = vld [vmem:[#allocation7 + $0x518] sm:$0xff]
    %v309 = vld [vmem:[#allocation7 + $0x520] sm:$0xff]
    %v310 = vld [vmem:[#allocation7 + $0x528] sm:$0xff]
    %v311 = vld [vmem:[#allocation7 + $0x530] sm:$0xff]
    %v312 = vld [vmem:[#allocation7 + $0x538] sm:$0xff]
    %v313 = vld [vmem:[#allocation7 + $0x540] sm:$0xff]
    %v314 = vld [vmem:[#allocation7 + $0x548] sm:$0xff]
    %v315 = vld [vmem:[#allocation7 + $0x550] sm:$0xff]
    %v316 = vld [vmem:[#allocation7 + $0x558] sm:$0xff]
    %v317 = vld [vmem:[#allocation7 + $0x560] sm:$0xff]
    %v318 = vld [vmem:[#allocation7 + $0x568] sm:$0xff]
    %v319 = vld [vmem:[#allocation7 + $0x570] sm:$0xff]
    %v320 = vld [vmem:[#allocation7 + $0x578] sm:$0xff]
    %v321 = vld [vmem:[#allocation7 + $0x580] sm:$0xff]
    %v322 = vld [vmem:[#allocation7 + $0x588] sm:$0xff]
    %v323 = vld [vmem:[#allocation7 + $0x590] sm:$0xff]
    %v324 = vld [vmem:[#allocation7 + $0x598] sm:$0xff]
    %v325 = vld [vmem:[#allocation7 + $0x5a0] sm:$0xff]
    %v326 = vld [vmem:[#allocation7 + $0x5a8] sm:$0xff]
    %v327 = vld [vmem:[#allocation7 + $0x5b0] sm:$0xff]
    %v328 = vld [vmem:[#allocation7 + $0x5b8] sm:$0xff]
    %v329 = vld [vmem:[#allocation7 + $0x5c0] sm:$0xff]
    %v330 = vld [vmem:[#allocation7 + $0x5c8] sm:$0xff]
    %v331 = vld [vmem:[#allocation7 + $0x5d0] sm:$0xff]
    %v332 = vld [vmem:[#allocation7 + $0x5d8] sm:$0xff]
    %v333 = vld [vmem:[#allocation7 + $0x5e0] sm:$0xff]
    %v334 = vld [vmem:[#allocation7 + $0x5e8] sm:$0xff]
    %v335 = vld [vmem:[#allocation7 + $0x5f0] sm:$0xff]
    %v336 = vld [vmem:[#allocation7 + $0x5f8] sm:$0xff]
    %v337 = vld [vmem:[#allocation7 + $0x600] sm:$0xff]
    %v338 = vld [vmem:[#allocation7 + $0x608] sm:$0xff]
    %v339 = vld [vmem:[#allocation7 + $0x610] sm:$0xff]
    %v340 = vld [vmem:[#allocation7 + $0x618] sm:$0xff]
    %v341 = vld [vmem:[#allocation7 + $0x620] sm:$0xff]
    %v342 = vld [vmem:[#allocation7 + $0x628] sm:$0xff]
    %v343 = vld [vmem:[#allocation7 + $0x630] sm:$0xff]
    %v344 = vld [vmem:[#allocation7 + $0x638] sm:$0xff]
    %v345 = vld [vmem:[#allocation7 + $0x640] sm:$0xff]
    %v346 = vld [vmem:[#allocation7 + $0x648] sm:$0xff]
    %v347 = vld [vmem:[#allocation7 + $0x650] sm:$0xff]
    %v348 = vld [vmem:[#allocation7 + $0x658] sm:$0xff]
    %v349 = vld [vmem:[#allocation7 + $0x660] sm:$0xff]
    %v350 = vld [vmem:[#allocation7 + $0x668] sm:$0xff]
    %v351 = vld [vmem:[#allocation7 + $0x670] sm:$0xff]
    %v352 = vld [vmem:[#allocation7 + $0x678] sm:$0xff]
    %v353 = vld [vmem:[#allocation7 + $0x680] sm:$0xff]
    %v354 = vld [vmem:[#allocation7 + $0x688] sm:$0xff]
    %v355 = vld [vmem:[#allocation7 + $0x690] sm:$0xff]
    %v356 = vld [vmem:[#allocation7 + $0x698] sm:$0xff]
    %v357 = vld [vmem:[#allocation7 + $0x6a0] sm:$0xff]
    %v358 = vld [vmem:[#allocation7 + $0x6a8] sm:$0xff]
    %v359 = vld [vmem:[#allocation7 + $0x6b0] sm:$0xff]
    %v360 = vld [vmem:[#allocation7 + $0x6b8] sm:$0xff]
    %v361 = vld [vmem:[#allocation7 + $0x6c0] sm:$0xff]
    %v362 = vld [vmem:[#allocation7 + $0x6c8] sm:$0xff]
    %v363 = vld [vmem:[#allocation7 + $0x6d0] sm:$0xff]
    %v364 = vld [vmem:[#allocation7 + $0x6d8] sm:$0xff]
    %v365 = vld [vmem:[#allocation7 + $0x6e0] sm:$0xff]
    %v366 = vld [vmem:[#allocation7 + $0x6e8] sm:$0xff]
    %v367 = vld [vmem:[#allocation7 + $0x6f0] sm:$0xff]
    %v368 = vld [vmem:[#allocation7 + $0x6f8] sm:$0xff]
    %v369 = vld [vmem:[#allocation7 + $0x700] sm:$0xff]
    %v370 = vld [vmem:[#allocation7 + $0x708] sm:$0xff]
    %v371 = vld [vmem:[#allocation7 + $0x710] sm:$0xff]
    %v372 = vld [vmem:[#allocation7 + $0x718] sm:$0xff]
    %v373 = vld [vmem:[#allocation7 + $0x720] sm:$0xff]
    %v374 = vld [vmem:[#allocation7 + $0x728] sm:$0xff]
    %v375 = vld [vmem:[#allocation7 + $0x730] sm:$0xff]
    %v376 = vld [vmem:[#allocation7 + $0x738] sm:$0xff]
    %v377 = vld [vmem:[#allocation7 + $0x740] sm:$0xff]
    %v378 = vld [vmem:[#allocation7 + $0x748] sm:$0xff]
    %v379 = vld [vmem:[#allocation7 + $0x750] sm:$0xff]
    %v380 = vld [vmem:[#allocation7 + $0x758] sm:$0xff]
    %v381 = vld [vmem:[#allocation7 + $0x760] sm:$0xff]
    %v382 = vld [vmem:[#allocation7 + $0x768] sm:$0xff]
    %v383 = vld [vmem:[#allocation7 + $0x770] sm:$0xff]
    %v384 = vld [vmem:[#allocation7 + $0x778] sm:$0xff]
    %v385 = vld [vmem:[#allocation7 + $0x780] sm:$0xff]
    %v386 = vld [vmem:[#allocation7 + $0x788] sm:$0xff]
    %v387 = vld [vmem:[#allocation7 + $0x790] sm:$0xff]
    %v388 = vld [vmem:[#allocation7 + $0x798] sm:$0xff]
    %v389 = vld [vmem:[#allocation7 + $0x7a0] sm:$0xff]
    %v390 = vld [vmem:[#allocation7 + $0x7a8] sm:$0xff]
    %v391 = vld [vmem:[#allocation7 + $0x7b0] sm:$0xff]
    %v392 = vld [vmem:[#allocation7 + $0x7b8] sm:$0xff]
    %v393 = vld [vmem:[#allocation7 + $0x7c0] sm:$0xff]
    %v394 = vld [vmem:[#allocation7 + $0x7c8] sm:$0xff]
    %v395 = vld [vmem:[#allocation7 + $0x7d0] sm:$0xff]
    %v396 = vld [vmem:[#allocation7 + $0x7d8] sm:$0xff]
    %v397 = vld [vmem:[#allocation7 + $0x7e0] sm:$0xff]
    %v398 = vld [vmem:[#allocation7 + $0x7e8] sm:$0xff]
    %v399 = vld [vmem:[#allocation7 + $0x7f0] sm:$0xff]
    %v400 = vld [vmem:[#allocation7 + $0x7f8] sm:$0xff]
    %v401 = vld [vmem:[#allocation7 + $0x800] sm:$0xff]
    %v402 = vld [vmem:[#allocation7 + $0x808] sm:$0xff]
    %v403 = vld [vmem:[#allocation7 + $0x810] sm:$0xff]
    %v404 = vld [vmem:[#allocation7 + $0x818] sm:$0xff]
    %v405 = vld [vmem:[#allocation7 + $0x820] sm:$0xff]
    %v406 = vld [vmem:[#allocation7 + $0x828] sm:$0xff]
    %v407 = vld [vmem:[#allocation7 + $0x830] sm:$0xff]
    %v408 = vld [vmem:[#allocation7 + $0x838] sm:$0xff]
    %v409 = vld [vmem:[#allocation7 + $0x840] sm:$0xff]
    %v410 = vld [vmem:[#allocation7 + $0x848] sm:$0xff]
    %v411 = vld [vmem:[#allocation7 + $0x850] sm:$0xff]
    %v412 = vld [vmem:[#allocation7 + $0x858] sm:$0xff]
    %v413 = vld [vmem:[#allocation7 + $0x860] sm:$0xff]
    %v414 = vld [vmem:[#allocation7 + $0x868] sm:$0xff]
    %v415 = vld [vmem:[#allocation7 + $0x870] sm:$0xff]
    %v416 = vld [vmem:[#allocation7 + $0x878] sm:$0xff]
    %v417 = vld [vmem:[#allocation7 + $0x880] sm:$0xff]
    %v418 = vld [vmem:[#allocation7 + $0x888] sm:$0xff]
    %v419 = vld [vmem:[#allocation7 + $0x890] sm:$0xff]
    %v420 = vld [vmem:[#allocation7 + $0x898] sm:$0xff]
    %v421 = vld [vmem:[#allocation7 + $0x8a0] sm:$0xff]
    %v422 = vld [vmem:[#allocation7 + $0x8a8] sm:$0xff]
    %v423 = vld [vmem:[#allocation7 + $0x8b0] sm:$0xff]
    %v424 = vld [vmem:[#allocation7 + $0x8b8] sm:$0xff]
    %v425 = vld [vmem:[#allocation7 + $0x8c0] sm:$0xff]
    %v426 = vld [vmem:[#allocation7 + $0x8c8] sm:$0xff]
    %v427 = vld [vmem:[#allocation7 + $0x8d0] sm:$0xff]
    %v428 = vld [vmem:[#allocation7 + $0x8d8] sm:$0xff]
    %v429 = vld [vmem:[#allocation7 + $0x8e0] sm:$0xff]
    %v430 = vld [vmem:[#allocation7 + $0x8e8] sm:$0xff]
    %v431 = vld [vmem:[#allocation7 + $0x8f0] sm:$0xff]
    %v432 = vld [vmem:[#allocation7 + $0x8f8] sm:$0xff]
    %v433 = vld [vmem:[#allocation7 + $0x900] sm:$0xff]
    %v434 = vld [vmem:[#allocation7 + $0x908] sm:$0xff]
    %v435 = vld [vmem:[#allocation7 + $0x910] sm:$0xff]
    %v436 = vld [vmem:[#allocation7 + $0x918] sm:$0xff]
    %v437 = vld [vmem:[#allocation7 + $0x920] sm:$0xff]
    %v438 = vld [vmem:[#allocation7 + $0x928] sm:$0xff]
    %v439 = vld [vmem:[#allocation7 + $0x930] sm:$0xff]
    %v440 = vld [vmem:[#allocation7 + $0x938] sm:$0xff]
    %v441 = vld [vmem:[#allocation7 + $0x940] sm:$0xff]
    %v442 = vld [vmem:[#allocation7 + $0x948] sm:$0xff]
    %v443 = vld [vmem:[#allocation7 + $0x950] sm:$0xff]
    %v444 = vld [vmem:[#allocation7 + $0x958] sm:$0xff]
    %v445 = vld [vmem:[#allocation7 + $0x960] sm:$0xff]
    %v446 = vld [vmem:[#allocation7 + $0x968] sm:$0xff]
    %v447 = vld [vmem:[#allocation7 + $0x970] sm:$0xff]
    %v448 = vld [vmem:[#allocation7 + $0x978] sm:$0xff]
    %v449 = vld [vmem:[#allocation7 + $0x980] sm:$0xff]
    %v450 = vld [vmem:[#allocation7 + $0x988] sm:$0xff]
    %v451 = vld [vmem:[#allocation7 + $0x990] sm:$0xff]
    %v452 = vld [vmem:[#allocation7 + $0x998] sm:$0xff]
    %v453 = vld [vmem:[#allocation7 + $0x9a0] sm:$0xff]
    %v454 = vld [vmem:[#allocation7 + $0x9a8] sm:$0xff]
    %v455 = vld [vmem:[#allocation7 + $0x9b0] sm:$0xff]
    %v456 = vld [vmem:[#allocation7 + $0x9b8] sm:$0xff]
    %v457 = vld [vmem:[#allocation7 + $0x9c0] sm:$0xff]
    %v458 = vld [vmem:[#allocation7 + $0x9c8] sm:$0xff]
    %v459 = vld [vmem:[#allocation7 + $0x9d0] sm:$0xff]
    %v460 = vld [vmem:[#allocation7 + $0x9d8] sm:$0xff]
    %v461 = vld [vmem:[#allocation7 + $0x9e0] sm:$0xff]
    %v462 = vld [vmem:[#allocation7 + $0x9e8] sm:$0xff]
    %v463 = vld [vmem:[#allocation7 + $0x9f0] sm:$0xff]
    %v464 = vld [vmem:[#allocation7 + $0x9f8] sm:$0xff]
    %v465 = vld [vmem:[#allocation7 + $0xa00] sm:$0xff]
    %v466 = vld [vmem:[#allocation7 + $0xa08] sm:$0xff]
    %v467 = vld [vmem:[#allocation7 + $0xa10] sm:$0xff]
    %v468 = vld [vmem:[#allocation7 + $0xa18] sm:$0xff]
    %v469 = vld [vmem:[#allocation7 + $0xa20] sm:$0xff]
    %v470 = vld [vmem:[#allocation7 + $0xa28] sm:$0xff]
    %v471 = vld [vmem:[#allocation7 + $0xa30] sm:$0xff]
    %v472 = vld [vmem:[#allocation7 + $0xa38] sm:$0xff]
    %v473 = vld [vmem:[#allocation7 + $0xa40] sm:$0xff]
    %v474 = vld [vmem:[#allocation7 + $0xa48] sm:$0xff]
    %v475 = vld [vmem:[#allocation7 + $0xa50] sm:$0xff]
    %v476 = vld [vmem:[#allocation7 + $0xa58] sm:$0xff]
    %v477 = vld [vmem:[#allocation7 + $0xa60] sm:$0xff]
    %v478 = vld [vmem:[#allocation7 + $0xa68] sm:$0xff]
    %v479 = vld [vmem:[#allocation7 + $0xa70] sm:$0xff]
    %v480 = vld [vmem:[#allocation7 + $0xa78] sm:$0xff]
    %v481 = vld [vmem:[#allocation7 + $0xa80] sm:$0xff]
    %v482 = vld [vmem:[#allocation7 + $0xa88] sm:$0xff]
    %v483 = vld [vmem:[#allocation7 + $0xa90] sm:$0xff]
    %v484 = vld [vmem:[#allocation7 + $0xa98] sm:$0xff]
    %v485 = vld [vmem:[#allocation7 + $0xaa0] sm:$0xff]
    %v486 = vld [vmem:[#allocation7 + $0xaa8] sm:$0xff]
    %v487 = vld [vmem:[#allocation7 + $0xab0] sm:$0xff]
    %v488 = vld [vmem:[#allocation7 + $0xab8] sm:$0xff]
    %v489 = vld [vmem:[#allocation7 + $0xac0] sm:$0xff]
    %v490 = vld [vmem:[#allocation7 + $0xac8] sm:$0xff]
    %v491 = vld [vmem:[#allocation7 + $0xad0] sm:$0xff]
    %v492 = vld [vmem:[#allocation7 + $0xad8] sm:$0xff]
    %v493 = vld [vmem:[#allocation7 + $0xae0] sm:$0xff]
    %v494 = vld [vmem:[#allocation7 + $0xae8] sm:$0xff]
    %v495 = vld [vmem:[#allocation7 + $0xaf0] sm:$0xff]
    %v496 = vld [vmem:[#allocation7 + $0xaf8] sm:$0xff]
    %v497 = vld [vmem:[#allocation7 + $0xb00] sm:$0xff]
    %v498 = vld [vmem:[#allocation7 + $0xb08] sm:$0xff]
    %v499 = vld [vmem:[#allocation7 + $0xb10] sm:$0xff]
    %v500 = vld [vmem:[#allocation7 + $0xb18] sm:$0xff]
    %v501 = vld [vmem:[#allocation7 + $0xb20] sm:$0xff]
    %v502 = vld [vmem:[#allocation7 + $0xb28] sm:$0xff]
    %v503 = vld [vmem:[#allocation7 + $0xb30] sm:$0xff]
    %v504 = vld [vmem:[#allocation7 + $0xb38] sm:$0xff]
    %v505 = vld [vmem:[#allocation7 + $0xb40] sm:$0xff]
    %v506 = vld [vmem:[#allocation7 + $0xb48] sm:$0xff]
    %v507 = vld [vmem:[#allocation7 + $0xb50] sm:$0xff]
    %v508 = vld [vmem:[#allocation7 + $0xb58] sm:$0xff]
    %v509 = vld [vmem:[#allocation7 + $0xb60] sm:$0xff]
    %v510 = vld [vmem:[#allocation7 + $0xb68] sm:$0xff]
    %v511 = vld [vmem:[#allocation7 + $0xb70] sm:$0xff]
    %v512 = vld [vmem:[#allocation7 + $0xb78] sm:$0xff]
    %v513 = vld [vmem:[#allocation7 + $0xb80] sm:$0xff]
    %v514 = vld [vmem:[#allocation7 + $0xb88] sm:$0xff]
    %v515 = vld [vmem:[#allocation7 + $0xb90] sm:$0xff]
    %v516 = vld [vmem:[#allocation7 + $0xb98] sm:$0xff]
    %v517 = vld [vmem:[#allocation7 + $0xba0] sm:$0xff]
    %v518 = vld [vmem:[#allocation7 + $0xba8] sm:$0xff]
    %v519 = vld [vmem:[#allocation7 + $0xbb0] sm:$0xff]
    %v520 = vld [vmem:[#allocation7 + $0xbb8] sm:$0xff]
    %v521 = vld [vmem:[#allocation7 + $0xbc0] sm:$0xff]
    %v522 = vld [vmem:[#allocation7 + $0xbc8] sm:$0xff]
    %v523 = vld [vmem:[#allocation7 + $0xbd0] sm:$0xff]
    %v524 = vld [vmem:[#allocation7 + $0xbd8] sm:$0xff]
    %v525 = vld [vmem:[#allocation7 + $0xbe0] sm:$0xff]
    %v526 = vld [vmem:[#allocation7 + $0xbe8] sm:$0xff]
    %v527 = vld [vmem:[#allocation7 + $0xbf0] sm:$0xff]
    %v528 = vld [vmem:[#allocation7 + $0xbf8] sm:$0xff]
    %v529 = vld [vmem:[#allocation8] sm:$0xff]
    %v531 = vlaneseq
    %v532 = vshrl.u32 %v531, 7
    %v533 = vsub.s32 0, %v532
    %v534 = vrot.slane %v529, %v533
    %v535 = vlaneseq
    %v536 = vshrl.u32 %v535, 7
    %v537 = vsub.s32 1, %v536
    %v538 = vrot.slane %v529, %v537
    %v539 = vlaneseq
    %v540 = vshrl.u32 %v539, 7
    %v541 = vsub.s32 2, %v540
    %v542 = vrot.slane %v529, %v541
    %v543 = vlaneseq
    %v544 = vshrl.u32 %v543, 7
    %v545 = vsub.s32 3, %v544
    %v546 = vrot.slane %v529, %v545
    %v547 = vlaneseq
    %v548 = vshrl.u32 %v547, 7
    %v549 = vsub.s32 4, %v548
    %v550 = vrot.slane %v529, %v549
    %v551 = vlaneseq
    %v552 = vshrl.u32 %v551, 7
    %v553 = vsub.s32 5, %v552
    %v554 = vrot.slane %v529, %v553
    %v555 = vlaneseq
    %v556 = vshrl.u32 %v555, 7
    %v557 = vsub.s32 6, %v556
    %v558 = vrot.slane %v529, %v557
    %v559 = vlaneseq
    %v560 = vshrl.u32 %v559, 7
    %v561 = vsub.s32 7, %v560
    %v562 = vrot.slane %v529, %v561
    %571 = vmatprep.subr.mxu0 %v146
    %572 = vmatpush1.msra.mxu0 %v145
    %573 = vmatprep.subr.mxu0 %v154
    %574 = vmatpush1.msra.mxu0 %v153
    %575 = vmatprep.subr.mxu0 %v162
    %576 = vmatpush1.msra.mxu0 %v161
    %577 = vmatprep.subr.mxu0 %v170
    %578 = vmatpush1.msra.mxu0 %v169
    %579 = vmatprep.subr.mxu0 %v178
    %580 = vmatpush1.msra.mxu0 %v177
    %581 = vmatprep.subr.mxu0 %v186
    %582 = vmatpush1.msra.mxu0 %v185
    %583 = vmatprep.subr.mxu0 %v194
    %584 = vmatpush1.msra.mxu0 %v193
    %585 = vmatprep.subr.mxu0 %v202
    %586 = vmatpush1.msra.mxu0 %v201
    %587 = vmatprep.subr.mxu0 %v210
    %588 = vmatpush1.msra.mxu0 %v209
    %589 = vmatprep.subr.mxu0 %v218
    %590 = vmatpush1.msra.mxu0 %v217
    %591 = vmatprep.subr.mxu0 %v226
    %592 = vmatpush1.msra.mxu0 %v225
    %593 = vmatprep.subr.mxu0 %v234
    %594 = vmatpush1.msra.mxu0 %v233
    %595 = vmatprep.subr.mxu0 %v242
    %596 = vmatpush1.msra.mxu0 %v241
    %597 = vmatprep.subr.mxu0 %v250
    %598 = vmatpush1.msra.mxu0 %v249
    %599 = vmatprep.subr.mxu0 %v258
    %600 = vmatpush1.msra.mxu0 %v257
    %601 = vmatprep.subr.mxu0 %v266
    %602 = vmatpush1.msra.mxu0 %v265
    %603 = vmatprep.subr.mxu0 %v274
    %604 = vmatpush1.msra.mxu0 %v273
    %605 = vmatprep.subr.mxu0 %v282
    %606 = vmatpush1.msra.mxu0 %v281
    %607 = vmatprep.subr.mxu0 %v290
    %608 = vmatpush1.msra.mxu0 %v289
    %609 = vmatprep.subr.mxu0 %v298
    %610 = vmatpush1.msra.mxu0 %v297
    %611 = vmatprep.subr.mxu0 %v306
    %612 = vmatpush1.msra.mxu0 %v305
    %613 = vmatprep.subr.mxu0 %v314
    %614 = vmatpush1.msra.mxu0 %v313
    %615 = vmatprep.subr.mxu0 %v322
    %616 = vmatpush1.msra.mxu0 %v321
    %617 = vmatprep.subr.mxu0 %v330
    %618 = vmatpush1.msra.mxu0 %v329
    %619 = vmatprep.subr.mxu0 %v338
    %620 = vmatpush1.msra.mxu0 %v337
    %621 = vmatprep.subr.mxu0 %v346
    %622 = vmatpush1.msra.mxu0 %v345
    %623 = vmatprep.subr.mxu0 %v354
    %624 = vmatpush1.msra.mxu0 %v353
    %625 = vmatprep.subr.mxu0 %v362
    %626 = vmatpush1.msra.mxu0 %v361
    %627 = vmatprep.subr.mxu0 %v370
    %628 = vmatpush1.msra.mxu0 %v369
    %629 = vmatprep.subr.mxu0 %v378
    %630 = vmatpush1.msra.mxu0 %v377
    %631 = vmatprep.subr.mxu0 %v386
    %632 = vmatpush1.msra.mxu0 %v385
    %633 = vmatprep.subr.mxu0 %v394
    %634 = vmatpush1.msra.mxu0 %v393
    %635 = vmatprep.mubr.f32.mxu0 %v141
    %636 = vmatmul.mubr.f32.gmra.mrb[0].mxu0 %v140
    %v637 = vpop.f32.mrb[0].mxu0
    %v638 = vadd.f32 %v534, %v637
    %v639 = vpop.f32.mrb[0].mxu0
    %v640 = vadd.f32 %v538, %v639
    %641 = vdwg.mxu0
    %642 = vmatprep.subr.mxu0 %v402
    %643 = vmatpush1.msra.mxu0 %v401
    %644 = vmatprep.subr.mxu0 %v410
    %645 = vmatpush1.msra.mxu0 %v409
    %646 = vmatprep.subr.mxu0 %v418
    %647 = vmatpush1.msra.mxu0 %v417
    %648 = vmatprep.subr.mxu0 %v426
    %649 = vmatpush1.msra.mxu0 %v425
    %650 = vmatprep.subr.mxu0 %v434
    %651 = vmatpush1.msra.mxu0 %v433
    %652 = vmatprep.subr.mxu0 %v442
    %653 = vmatpush1.msra.mxu0 %v441
    %654 = vmatprep.subr.mxu0 %v450
    %655 = vmatpush1.msra.mxu0 %v449
    %656 = vmatprep.subr.mxu0 %v458
    %657 = vmatpush1.msra.mxu0 %v457
    %658 = vmatprep.subr.mxu0 %v466
    %659 = vmatpush1.msra.mxu0 %v465
    %660 = vmatprep.subr.mxu0 %v474
    %661 = vmatpush1.msra.mxu0 %v473
    %662 = vmatprep.subr.mxu0 %v482
    %663 = vmatpush1.msra.mxu0 %v481
    %664 = vmatprep.subr.mxu0 %v490
    %665 = vmatpush1.msra.mxu0 %v489
    %666 = vmatprep.subr.mxu0 %v498
    %667 = vmatpush1.msra.mxu0 %v497
    %668 = vmatprep.subr.mxu0 %v506
    %669 = vmatpush1.msra.mxu0 %v505
    %670 = vmatprep.subr.mxu0 %v514
    %671 = vmatpush1.msra.mxu0 %v513
    %672 = vmatprep.subr.mxu0 %v522
    %673 = vmatpush1.msra.mxu0 %v521
    %674 = vmatprep.subr.mxu0 0.0
    %675 = vmatpush1.msra.mxu0 0.0
    %676 = vmatprep.subr.mxu0 0.0
    %677 = vmatpush1.msra.mxu0 0.0
    %678 = vmatprep.subr.mxu0 0.0
    %679 = vmatpush1.msra.mxu0 0.0
    %680 = vmatprep.subr.mxu0 0.0
    %681 = vmatpush1.msra.mxu0 0.0
    %682 = vmatprep.subr.mxu0 0.0
    %683 = vmatpush1.msra.mxu0 0.0
    %684 = vmatprep.subr.mxu0 0.0
    %685 = vmatpush1.msra.mxu0 0.0
    %686 = vmatprep.subr.mxu0 0.0
    %687 = vmatpush1.msra.mxu0 0.0
    %688 = vmatprep.subr.mxu0 0.0
    %689 = vmatpush1.msra.mxu0 0.0
    %690 = vmatprep.subr.mxu0 0.0
    %691 = vmatpush1.msra.mxu0 0.0
    %692 = vmatprep.subr.mxu0 0.0
    %693 = vmatpush1.msra.mxu0 0.0
    %694 = vmatprep.subr.mxu0 0.0
    %695 = vmatpush1.msra.mxu0 0.0
    %696 = vmatprep.subr.mxu0 0.0
    %697 = vmatpush1.msra.mxu0 0.0
    %698 = vmatprep.subr.mxu0 0.0
    %699 = vmatpush1.msra.mxu0 0.0
    %700 = vmatprep.subr.mxu0 0.0
    %701 = vmatpush1.msra.mxu0 0.0
    %702 = vmatprep.subr.mxu0 0.0
    %703 = vmatpush1.msra.mxu0 0.0
    %704 = vmatprep.subr.mxu0 0.0
    %705 = vmatpush1.msra.mxu0 0.0
    %706 = vmatprep.mubr.f32.mxu0 0.0
    %707 = vmatmul.mubr.f32.gmra.mrb[0].mxu0 %v142
    %v708 = vpop.f32.mrb[0].mxu0
    %v709 = vadd.f32 %v638, %v708
    %v710 = vpop.f32.mrb[0].mxu0
    %v711 = vadd.f32 %v640, %v710
    %712 = vdwg.mxu0
    %713 = vmatprep.subr.mxu0 %v148
    %714 = vmatpush1.msra.mxu0 %v147
    %715 = vmatprep.subr.mxu0 %v156
    %716 = vmatpush1.msra.mxu0 %v155
    %717 = vmatprep.subr.mxu0 %v164
    %718 = vmatpush1.msra.mxu0 %v163
    %719 = vmatprep.subr.mxu0 %v172
    %720 = vmatpush1.msra.mxu0 %v171
    %721 = vmatprep.subr.mxu0 %v180
    %722 = vmatpush1.msra.mxu0 %v179
    %723 = vmatprep.subr.mxu0 %v188
    %724 = vmatpush1.msra.mxu0 %v187
    %725 = vmatprep.subr.mxu0 %v196
    %726 = vmatpush1.msra.mxu0 %v195
    %727 = vmatprep.subr.mxu0 %v204
    %728 = vmatpush1.msra.mxu0 %v203
    %729 = vmatprep.subr.mxu0 %v212
    %730 = vmatpush1.msra.mxu0 %v211
    %731 = vmatprep.subr.mxu0 %v220
    %732 = vmatpush1.msra.mxu0 %v219
    %733 = vmatprep.subr.mxu0 %v228
    %734 = vmatpush1.msra.mxu0 %v227
    %735 = vmatprep.subr.mxu0 %v236
    %736 = vmatpush1.msra.mxu0 %v235
    %737 = vmatprep.subr.mxu0 %v244
    %738 = vmatpush1.msra.mxu0 %v243
    %739 = vmatprep.subr.mxu0 %v252
    %740 = vmatpush1.msra.mxu0 %v251
    %741 = vmatprep.subr.mxu0 %v260
    %742 = vmatpush1.msra.mxu0 %v259
    %743 = vmatprep.subr.mxu0 %v268
    %744 = vmatpush1.msra.mxu0 %v267
    %745 = vmatprep.subr.mxu0 %v276
    %746 = vmatpush1.msra.mxu0 %v275
    %747 = vmatprep.subr.mxu0 %v284
    %748 = vmatpush1.msra.mxu0 %v283
    %749 = vmatprep.subr.mxu0 %v292
    %750 = vmatpush1.msra.mxu0 %v291
    %751 = vmatprep.subr.mxu0 %v300
    %752 = vmatpush1.msra.mxu0 %v299
    %753 = vmatprep.subr.mxu0 %v308
    %754 = vmatpush1.msra.mxu0 %v307
    %755 = vmatprep.subr.mxu0 %v316
    %756 = vmatpush1.msra.mxu0 %v315
    %757 = vmatprep.subr.mxu0 %v324
    %758 = vmatpush1.msra.mxu0 %v323
    %759 = vmatprep.subr.mxu0 %v332
    %760 = vmatpush1.msra.mxu0 %v331
    %761 = vmatprep.subr.mxu0 %v340
    %762 = vmatpush1.msra.mxu0 %v339
    %763 = vmatprep.subr.mxu0 %v348
    %764 = vmatpush1.msra.mxu0 %v347
    %765 = vmatprep.subr.mxu0 %v356
    %766 = vmatpush1.msra.mxu0 %v355
    %767 = vmatprep.subr.mxu0 %v364
    %768 = vmatpush1.msra.mxu0 %v363
    %769 = vmatprep.subr.mxu0 %v372
    %770 = vmatpush1.msra.mxu0 %v371
    %771 = vmatprep.subr.mxu0 %v380
    %772 = vmatpush1.msra.mxu0 %v379
    %773 = vmatprep.subr.mxu0 %v388
    %774 = vmatpush1.msra.mxu0 %v387
    %775 = vmatprep.subr.mxu0 %v396
    %776 = vmatpush1.msra.mxu0 %v395
    %777 = vmatprep.mubr.f32.mxu0 %v141
    %778 = vmatmul.mubr.f32.gmra.mrb[0].mxu0 %v140
    %v779 = vpop.f32.mrb[0].mxu0
    %v780 = vadd.f32 %v542, %v779
    %v781 = vpop.f32.mrb[0].mxu0
    %v782 = vadd.f32 %v546, %v781
    %783 = vdwg.mxu0
    %784 = vmatprep.subr.mxu0 %v404
    %785 = vmatpush1.msra.mxu0 %v403
    %786 = vmatprep.subr.mxu0 %v412
    %787 = vmatpush1.msra.mxu0 %v411
    %788 = vmatprep.subr.mxu0 %v420
    %789 = vmatpush1.msra.mxu0 %v419
    %790 = vmatprep.subr.mxu0 %v428
    %791 = vmatpush1.msra.mxu0 %v427
    %792 = vmatprep.subr.mxu0 %v436
    %793 = vmatpush1.msra.mxu0 %v435
    %794 = vmatprep.subr.mxu0 %v444
    %795 = vmatpush1.msra.mxu0 %v443
    %796 = vmatprep.subr.mxu0 %v452
    %797 = vmatpush1.msra.mxu0 %v451
    %798 = vmatprep.subr.mxu0 %v460
    %799 = vmatpush1.msra.mxu0 %v459
    %800 = vmatprep.subr.mxu0 %v468
    %801 = vmatpush1.msra.mxu0 %v467
    %802 = vmatprep.subr.mxu0 %v476
    %803 = vmatpush1.msra.mxu0 %v475
    %804 = vmatprep.subr.mxu0 %v484
    %805 = vmatpush1.msra.mxu0 %v483
    %806 = vmatprep.subr.mxu0 %v492
    %807 = vmatpush1.msra.mxu0 %v491
    %808 = vmatprep.subr.mxu0 %v500
    %809 = vmatpush1.msra.mxu0 %v499
    %810 = vmatprep.subr.mxu0 %v508
    %811 = vmatpush1.msra.mxu0 %v507
    %812 = vmatprep.subr.mxu0 %v516
    %813 = vmatpush1.msra.mxu0 %v515
    %814 = vmatprep.subr.mxu0 %v524
    %815 = vmatpush1.msra.mxu0 %v523
    %816 = vmatprep.subr.mxu0 0.0
    %817 = vmatpush1.msra.mxu0 0.0
    %818 = vmatprep.subr.mxu0 0.0
    %819 = vmatpush1.msra.mxu0 0.0
    %820 = vmatprep.subr.mxu0 0.0
    %821 = vmatpush1.msra.mxu0 0.0
    %822 = vmatprep.subr.mxu0 0.0
    %823 = vmatpush1.msra.mxu0 0.0
    %824 = vmatprep.subr.mxu0 0.0
    %825 = vmatpush1.msra.mxu0 0.0
    %826 = vmatprep.subr.mxu0 0.0
    %827 = vmatpush1.msra.mxu0 0.0
    %828 = vmatprep.subr.mxu0 0.0
    %829 = vmatpush1.msra.mxu0 0.0
    %830 = vmatprep.subr.mxu0 0.0
    %831 = vmatpush1.msra.mxu0 0.0
    %832 = vmatprep.subr.mxu0 0.0
    %833 = vmatpush1.msra.mxu0 0.0
    %834 = vmatprep.subr.mxu0 0.0
    %835 = vmatpush1.msra.mxu0 0.0
    %836 = vmatprep.subr.mxu0 0.0
    %837 = vmatpush1.msra.mxu0 0.0
    %838 = vmatprep.subr.mxu0 0.0
    %839 = vmatpush1.msra.mxu0 0.0
    %840 = vmatprep.subr.mxu0 0.0
    %841 = vmatpush1.msra.mxu0 0.0
    %842 = vmatprep.subr.mxu0 0.0
    %843 = vmatpush1.msra.mxu0 0.0
    %844 = vmatprep.subr.mxu0 0.0
    %845 = vmatpush1.msra.mxu0 0.0
    %846 = vmatprep.subr.mxu0 0.0
    %847 = vmatpush1.msra.mxu0 0.0
    %848 = vmatprep.mubr.f32.mxu0 0.0
    %849 = vmatmul.mubr.f32.gmra.mrb[0].mxu0 %v142
    %v850 = vpop.f32.mrb[0].mxu0
    %v851 = vadd.f32 %v780, %v850
    %v852 = vpop.f32.mrb[0].mxu0
    %v853 = vadd.f32 %v782, %v852
    %854 = vdwg.mxu0
    %855 = vmatprep.subr.mxu0 %v150
    %856 = vmatpush1.msra.mxu0 %v149
    %857 = vmatprep.subr.mxu0 %v158
    %858 = vmatpush1.msra.mxu0 %v157
    %859 = vmatprep.subr.mxu0 %v166
    %860 = vmatpush1.msra.mxu0 %v165
    %861 = vmatprep.subr.mxu0 %v174
    %862 = vmatpush1.msra.mxu0 %v173
    %863 = vmatprep.subr.mxu0 %v182
    %864 = vmatpush1.msra.mxu0 %v181
    %865 = vmatprep.subr.mxu0 %v190
    %866 = vmatpush1.msra.mxu0 %v189
    %867 = vmatprep.subr.mxu0 %v198
    %868 = vmatpush1.msra.mxu0 %v197
    %869 = vmatprep.subr.mxu0 %v206
    %870 = vmatpush1.msra.mxu0 %v205
    %871 = vmatprep.subr.mxu0 %v214
    %872 = vmatpush1.msra.mxu0 %v213
    %873 = vmatprep.subr.mxu0 %v222
    %874 = vmatpush1.msra.mxu0 %v221
    %875 = vmatprep.subr.mxu0 %v230
    %876 = vmatpush1.msra.mxu0 %v229
    %877 = vmatprep.subr.mxu0 %v238
    %878 = vmatpush1.msra.mxu0 %v237
    %879 = vmatprep.subr.mxu0 %v246
    %880 = vmatpush1.msra.mxu0 %v245
    %881 = vmatprep.subr.mxu0 %v254
    %882 = vmatpush1.msra.mxu0 %v253
    %883 = vmatprep.subr.mxu0 %v262
    %884 = vmatpush1.msra.mxu0 %v261
    %885 = vmatprep.subr.mxu0 %v270
    %886 = vmatpush1.msra.mxu0 %v269
    %887 = vmatprep.subr.mxu0 %v278
    %888 = vmatpush1.msra.mxu0 %v277
    %889 = vmatprep.subr.mxu0 %v286
    %890 = vmatpush1.msra.mxu0 %v285
    %891 = vmatprep.subr.mxu0 %v294
    %892 = vmatpush1.msra.mxu0 %v293
    %893 = vmatprep.subr.mxu0 %v302
    %894 = vmatpush1.msra.mxu0 %v301
    %895 = vmatprep.subr.mxu0 %v310
    %896 = vmatpush1.msra.mxu0 %v309
    %897 = vmatprep.subr.mxu0 %v318
    %898 = vmatpush1.msra.mxu0 %v317
    %899 = vmatprep.subr.mxu0 %v326
    %900 = vmatpush1.msra.mxu0 %v325
    %901 = vmatprep.subr.mxu0 %v334
    %902 = vmatpush1.msra.mxu0 %v333
    %903 = vmatprep.subr.mxu0 %v342
    %904 = vmatpush1.msra.mxu0 %v341
    %905 = vmatprep.subr.mxu0 %v350
    %906 = vmatpush1.msra.mxu0 %v349
    %907 = vmatprep.subr.mxu0 %v358
    %908 = vmatpush1.msra.mxu0 %v357
    %909 = vmatprep.subr.mxu0 %v366
    %910 = vmatpush1.msra.mxu0 %v365
    %911 = vmatprep.subr.mxu0 %v374
    %912 = vmatpush1.msra.mxu0 %v373
    %913 = vmatprep.subr.mxu0 %v382
    %914 = vmatpush1.msra.mxu0 %v381
    %915 = vmatprep.subr.mxu0 %v390
    %916 = vmatpush1.msra.mxu0 %v389
    %917 = vmatprep.subr.mxu0 %v398
    %918 = vmatpush1.msra.mxu0 %v397
    %919 = vmatprep.mubr.f32.mxu0 %v141
    %920 = vmatmul.mubr.f32.gmra.mrb[0].mxu0 %v140
    %v921 = vpop.f32.mrb[0].mxu0
    %v922 = vadd.f32 %v550, %v921
    %v923 = vpop.f32.mrb[0].mxu0
    %v924 = vadd.f32 %v554, %v923
    %925 = vdwg.mxu0
    %926 = vmatprep.subr.mxu0 %v406
    %927 = vmatpush1.msra.mxu0 %v405
    %928 = vmatprep.subr.mxu0 %v414
    %929 = vmatpush1.msra.mxu0 %v413
    %930 = vmatprep.subr.mxu0 %v422
    %931 = vmatpush1.msra.mxu0 %v421
    %932 = vmatprep.subr.mxu0 %v430
    %933 = vmatpush1.msra.mxu0 %v429
    %934 = vmatprep.subr.mxu0 %v438
    %935 = vmatpush1.msra.mxu0 %v437
    %936 = vmatprep.subr.mxu0 %v446
    %937 = vmatpush1.msra.mxu0 %v445
    %938 = vmatprep.subr.mxu0 %v454
    %939 = vmatpush1.msra.mxu0 %v453
    %940 = vmatprep.subr.mxu0 %v462
    %941 = vmatpush1.msra.mxu0 %v461
    %942 = vmatprep.subr.mxu0 %v470
    %943 = vmatpush1.msra.mxu0 %v469
    %944 = vmatprep.subr.mxu0 %v478
    %945 = vmatpush1.msra.mxu0 %v477
    %946 = vmatprep.subr.mxu0 %v486
    %947 = vmatpush1.msra.mxu0 %v485
    %948 = vmatprep.subr.mxu0 %v494
    %949 = vmatpush1.msra.mxu0 %v493
    %950 = vmatprep.subr.mxu0 %v502
    %951 = vmatpush1.msra.mxu0 %v501
    %952 = vmatprep.subr.mxu0 %v510
    %953 = vmatpush1.msra.mxu0 %v509
    %954 = vmatprep.subr.mxu0 %v518
    %955 = vmatpush1.msra.mxu0 %v517
    %956 = vmatprep.subr.mxu0 %v526
    %957 = vmatpush1.msra.mxu0 %v525
    %958 = vmatprep.subr.mxu0 0.0
    %959 = vmatpush1.msra.mxu0 0.0
    %960 = vmatprep.subr.mxu0 0.0
    %961 = vmatpush1.msra.mxu0 0.0
    %962 = vmatprep.subr.mxu0 0.0
    %963 = vmatpush1.msra.mxu0 0.0
    %964 = vmatprep.subr.mxu0 0.0
    %965 = vmatpush1.msra.mxu0 0.0
    %966 = vmatprep.subr.mxu0 0.0
    %967 = vmatpush1.msra.mxu0 0.0
    %968 = vmatprep.subr.mxu0 0.0
    %969 = vmatpush1.msra.mxu0 0.0
    %970 = vmatprep.subr.mxu0 0.0
    %971 = vmatpush1.msra.mxu0 0.0
    %972 = vmatprep.subr.mxu0 0.0
    %973 = vmatpush1.msra.mxu0 0.0
    %974 = vmatprep.subr.mxu0 0.0
    %975 = vmatpush1.msra.mxu0 0.0
    %976 = vmatprep.subr.mxu0 0.0
    %977 = vmatpush1.msra.mxu0 0.0
    %978 = vmatprep.subr.mxu0 0.0
    %979 = vmatpush1.msra.mxu0 0.0
    %980 = vmatprep.subr.mxu0 0.0
    %981 = vmatpush1.msra.mxu0 0.0
    %982 = vmatprep.subr.mxu0 0.0
    %983 = vmatpush1.msra.mxu0 0.0
    %984 = vmatprep.subr.mxu0 0.0
    %985 = vmatpush1.msra.mxu0 0.0
    %986 = vmatprep.subr.mxu0 0.0
    %987 = vmatpush1.msra.mxu0 0.0
    %988 = vmatprep.subr.mxu0 0.0
    %989 = vmatpush1.msra.mxu0 0.0
    %990 = vmatprep.mubr.f32.mxu0 0.0
    %991 = vmatmul.mubr.f32.gmra.mrb[0].mxu0 %v142
    %v992 = vpop.f32.mrb[0].mxu0
    %v993 = vadd.f32 %v922, %v992
    %v994 = vpop.f32.mrb[0].mxu0
    %v995 = vadd.f32 %v924, %v994
    %996 = vdwg.mxu0
    %997 = vmatprep.subr.mxu0 %v152
    %998 = vmatpush1.msra.mxu0 %v151
    %999 = vmatprep.subr.mxu0 %v160
    %1000 = vmatpush1.msra.mxu0 %v159
    %1001 = vmatprep.subr.mxu0 %v168
    %1002 = vmatpush1.msra.mxu0 %v167
    %1003 = vmatprep.subr.mxu0 %v176
    %1004 = vmatpush1.msra.mxu0 %v175
    %1005 = vmatprep.subr.mxu0 %v184
    %1006 = vmatpush1.msra.mxu0 %v183
    %1007 = vmatprep.subr.mxu0 %v192
    %1008 = vmatpush1.msra.mxu0 %v191
    %1009 = vmatprep.subr.mxu0 %v200
    %1010 = vmatpush1.msra.mxu0 %v199
    %1011 = vmatprep.subr.mxu0 %v208
    %1012 = vmatpush1.msra.mxu0 %v207
    %1013 = vmatprep.subr.mxu0 %v216
    %1014 = vmatpush1.msra.mxu0 %v215
    %1015 = vmatprep.subr.mxu0 %v224
    %1016 = vmatpush1.msra.mxu0 %v223
    %1017 = vmatprep.subr.mxu0 %v232
    %1018 = vmatpush1.msra.mxu0 %v231
    %1019 = vmatprep.subr.mxu0 %v240
    %1020 = vmatpush1.msra.mxu0 %v239
    %1021 = vmatprep.subr.mxu0 %v248
    %1022 = vmatpush1.msra.mxu0 %v247
    %1023 = vmatprep.subr.mxu0 %v256
    %1024 = vmatpush1.msra.mxu0 %v255
    %1025 = vmatprep.subr.mxu0 %v264
    %1026 = vmatpush1.msra.mxu0 %v263
    %1027 = vmatprep.subr.mxu0 %v272
    %1028 = vmatpush1.msra.mxu0 %v271
    %1029 = vmatprep.subr.mxu0 %v280
    %1030 = vmatpush1.msra.mxu0 %v279
    %1031 = vmatprep.subr.mxu0 %v288
    %1032 = vmatpush1.msra.mxu0 %v287
    %1033 = vmatprep.subr.mxu0 %v296
    %1034 = vmatpush1.msra.mxu0 %v295
    %1035 = vmatprep.subr.mxu0 %v304
    %1036 = vmatpush1.msra.mxu0 %v303
    %1037 = vmatprep.subr.mxu0 %v312
    %1038 = vmatpush1.msra.mxu0 %v311
    %1039 = vmatprep.subr.mxu0 %v320
    %1040 = vmatpush1.msra.mxu0 %v319
    %1041 = vmatprep.subr.mxu0 %v328
    %1042 = vmatpush1.msra.mxu0 %v327
    %1043 = vmatprep.subr.mxu0 %v336
    %1044 = vmatpush1.msra.mxu0 %v335
    %1045 = vmatprep.subr.mxu0 %v344
    %1046 = vmatpush1.msra.mxu0 %v343
    %1047 = vmatprep.subr.mxu0 %v352
    %1048 = vmatpush1.msra.mxu0 %v351
    %1049 = vmatprep.subr.mxu0 %v360
    %1050 = vmatpush1.msra.mxu0 %v359
    %1051 = vmatprep.subr.mxu0 %v368
    %1052 = vmatpush1.msra.mxu0 %v367
    %1053 = vmatprep.subr.mxu0 %v376
    %1054 = vmatpush1.msra.mxu0 %v375
    %1055 = vmatprep.subr.mxu0 %v384
    %1056 = vmatpush1.msra.mxu0 %v383
    %1057 = vmatprep.subr.mxu0 %v392
    %1058 = vmatpush1.msra.mxu0 %v391
    %1059 = vmatprep.subr.mxu0 %v400
    %1060 = vmatpush1.msra.mxu0 %v399
    %1061 = vmatprep.mubr.f32.mxu0 %v141
    %1062 = vmatmul.mubr.f32.gmra.mrb[0].mxu0 %v140
    %v1063 = vpop.f32.mrb[0].mxu0
    %v1064 = vadd.f32 %v558, %v1063
    %v1065 = vpop.f32.mrb[0].mxu0
    %v1066 = vadd.f32 %v562, %v1065
    %1067 = vdwg.mxu0
    %1068 = vmatprep.subr.mxu0 %v408
    %1069 = vmatpush1.msra.mxu0 %v407
    %1070 = vmatprep.subr.mxu0 %v416
    %1071 = vmatpush1.msra.mxu0 %v415
    %1072 = vmatprep.subr.mxu0 %v424
    %1073 = vmatpush1.msra.mxu0 %v423
    %1074 = vmatprep.subr.mxu0 %v432
    %1075 = vmatpush1.msra.mxu0 %v431
    %1076 = vmatprep.subr.mxu0 %v440
    %1077 = vmatpush1.msra.mxu0 %v439
    %1078 = vmatprep.subr.mxu0 %v448
    %1079 = vmatpush1.msra.mxu0 %v447
    %1080 = vmatprep.subr.mxu0 %v456
    %1081 = vmatpush1.msra.mxu0 %v455
    %1082 = vmatprep.subr.mxu0 %v464
    %1083 = vmatpush1.msra.mxu0 %v463
    %1084 = vmatprep.subr.mxu0 %v472
    %1085 = vmatpush1.msra.mxu0 %v471
    %1086 = vmatprep.subr.mxu0 %v480
    %1087 = vmatpush1.msra.mxu0 %v479
    %1088 = vmatprep.subr.mxu0 %v488
    %1089 = vmatpush1.msra.mxu0 %v487
    %1090 = vmatprep.subr.mxu0 %v496
    %1091 = vmatpush1.msra.mxu0 %v495
    %1092 = vmatprep.subr.mxu0 %v504
    %1093 = vmatpush1.msra.mxu0 %v503
    %1094 = vmatprep.subr.mxu0 %v512
    %1095 = vmatpush1.msra.mxu0 %v511
    %1096 = vmatprep.subr.mxu0 %v520
    %1097 = vmatpush1.msra.mxu0 %v519
    %1098 = vmatprep.subr.mxu0 %v528
    %1099 = vmatpush1.msra.mxu0 %v527
    %1100 = vmatprep.subr.mxu0 0.0
    %1101 = vmatpush1.msra.mxu0 0.0
    %1102 = vmatprep.subr.mxu0 0.0
    %1103 = vmatpush1.msra.mxu0 0.0
    %1104 = vmatprep.subr.mxu0 0.0
    %1105 = vmatpush1.msra.mxu0 0.0
    %1106 = vmatprep.subr.mxu0 0.0
    %1107 = vmatpush1.msra.mxu0 0.0
    %1108 = vmatprep.subr.mxu0 0.0
    %1109 = vmatpush1.msra.mxu0 0.0
    %1110 = vmatprep.subr.mxu0 0.0
    %1111 = vmatpush1.msra.mxu0 0.0
    %1112 = vmatprep.subr.mxu0 0.0
    %1113 = vmatpush1.msra.mxu0 0.0
    %1114 = vmatprep.subr.mxu0 0.0
    %1115 = vmatpush1.msra.mxu0 0.0
    %1116 = vmatprep.subr.mxu0 0.0
    %1117 = vmatpush1.msra.mxu0 0.0
    %1118 = vmatprep.subr.mxu0 0.0
    %1119 = vmatpush1.msra.mxu0 0.0
    %1120 = vmatprep.subr.mxu0 0.0
    %1121 = vmatpush1.msra.mxu0 0.0
    %1122 = vmatprep.subr.mxu0 0.0
    %1123 = vmatpush1.msra.mxu0 0.0
    %1124 = vmatprep.subr.mxu0 0.0
    %1125 = vmatpush1.msra.mxu0 0.0
    %1126 = vmatprep.subr.mxu0 0.0
    %1127 = vmatpush1.msra.mxu0 0.0
    %1128 = vmatprep.subr.mxu0 0.0
    %1129 = vmatpush1.msra.mxu0 0.0
    %1130 = vmatprep.subr.mxu0 0.0
    %1131 = vmatpush1.msra.mxu0 0.0
    %1132 = vmatprep.mubr.f32.mxu0 0.0
    %1133 = vmatmul.mubr.f32.gmra.mrb[0].mxu0 %v142
    %v1134 = vpop.f32.mrb[0].mxu0
    %v1135 = vadd.f32 %v1064, %v1134
    %v1136 = vpop.f32.mrb[0].mxu0
    %v1137 = vadd.f32 %v1066, %v1136
    %1138 = vdwg.mxu0
    %v1139 = vxor.u32 %v709, 2147483648
    %v1140 = vxor.u32 %v711, 2147483648
    %v1141 = vmul.f32 %v1139, 1.442695
    %v1142 = vpow.pop %v1141
    %v1143 = vmul.f32 %v1140, 1.442695
    %v1144 = vpow.pop %v1143
    %v1145 = vadd.f32 %v1142, 1.0
    %v1146 = vadd.f32 %v1144, 1.0
    %v1147 = vrcp.pop %v1145
    %v1148 = vmul.f32 1.0, %v1147
    %v1149 = vrcp.pop %v1146
    %v1150 = vmul.f32 1.0, %v1149
    %v1151 = vxor.u32 %v851, 2147483648
    %v1152 = vxor.u32 %v853, 2147483648
    %v1153 = vmul.f32 %v1151, 1.442695
    %v1154 = vpow.pop %v1153
    %v1155 = vmul.f32 %v1152, 1.442695
    %v1156 = vpow.pop %v1155
    %v1157 = vadd.f32 %v1154, 1.0
    %v1158 = vadd.f32 %v1156, 1.0
    %v1159 = vrcp.pop %v1157
    %v1160 = vmul.f32 1.0, %v1159
    %v1161 = vrcp.pop %v1158
    %v1162 = vmul.f32 1.0, %v1161
    %v1163 = vtanh.pop %v993
    %v1164 = vtanh.pop %v995
    %v1165 = vxor.u32 %v1135, 2147483648
    %v1166 = vxor.u32 %v1137, 2147483648
    %v1167 = vmul.f32 %v1165, 1.442695
    %v1168 = vpow.pop %v1167
    %v1169 = vmul.f32 %v1166, 1.442695
    %v1170 = vpow.pop %v1169
    %v1171 = vadd.f32 %v1168, 1.0
    %v1172 = vadd.f32 %v1170, 1.0
    %v1173 = vrcp.pop %v1171
    %v1174 = vmul.f32 1.0, %v1173
    %v1175 = vrcp.pop %v1172
    %v1176 = vmul.f32 1.0, %v1175
    %v1177 = vmul.f32 %v1160, %v143
    %v1178 = vmul.f32 %v1162, %v144
    %v1179 = vmul.f32 %v1148, %v1163
    %v1180 = vmul.f32 %v1150, %v1164
    %v1181 = vadd.f32 %v1177, %v1179
    %v1182 = vadd.f32 %v1178, %v1180
    %v1183 = vtanh.pop %v1181
    %v1184 = vtanh.pop %v1182
    %v1185 = vmul.f32 %v1174, %v1183
    %v1186 = vmul.f32 %v1176, %v1184
    %1187 = vst [vmem:[#allocation17] sm:$0xff] %v1185
    %1188 = vst [vmem:[#allocation17 + $0x8] sm:$0xff] %v1186
    %1189 = vst [vmem:[#allocation19] sm:$0xff] %v1181
    %1190 = vst [vmem:[#allocation19 + $0x8] sm:$0xff] %v1182
    %s1191 = scalar_lea.vmem [#allocation2], 16
    %v1192 = vld [vmem:[%s1191] sm:$0xff]
    %v1193 = vld [vmem:[%s1191 + $0x8] sm:$0xff]
    %s1194 = scalar_lea.vmem [#allocation5], 16
    %v1195 = vld [vmem:[%s1194] sm:$0xff]
    %v1196 = vld [vmem:[%s1194 + $0x8] sm:$0xff]
    %v1197 = vld [vmem:[#allocation10] sm:$0xff]
    %v1198 = vld [vmem:[#allocation10 + $0x8] sm:$0xff]
    %v1199 = vld [vmem:[#allocation10 + $0x10] sm:$0xff]
    %v1200 = vld [vmem:[#allocation10 + $0x18] sm:$0xff]
    %v1201 = vld [vmem:[#allocation10 + $0x20] sm:$0xff]
    %v1202 = vld [vmem:[#allocation10 + $0x28] sm:$0xff]
    %v1203 = vld [vmem:[#allocation10 + $0x30] sm:$0xff]
    %v1204 = vld [vmem:[#allocation10 + $0x38] sm:$0xff]
    %v1205 = vld [vmem:[#allocation10 + $0x40] sm:$0xff]
    %v1206 = vld [vmem:[#allocation10 + $0x48] sm:$0xff]
    %v1207 = vld [vmem:[#allocation10 + $0x50] sm:$0xff]
    %v1208 = vld [vmem:[#allocation10 + $0x58] sm:$0xff]
    %v1209 = vld [vmem:[#allocation10 + $0x60] sm:$0xff]
    %v1210 = vld [vmem:[#allocation10 + $0x68] sm:$0xff]
    %v1211 = vld [vmem:[#allocation10 + $0x70] sm:$0xff]
    %v1212 = vld [vmem:[#allocation10 + $0x78] sm:$0xff]
    %v1213 = vld [vmem:[#allocation10 + $0x80] sm:$0xff]
    %v1214 = vld [vmem:[#allocation10 + $0x88] sm:$0xff]
    %v1215 = vld [vmem:[#allocation10 + $0x90] sm:$0xff]
    %v1216 = vld [vmem:[#allocation10 + $0x98] sm:$0xff]
    %v1217 = vld [vmem:[#allocation10 + $0xa0] sm:$0xff]
    %v1218 = vld [vmem:[#allocation10 + $0xa8] sm:$0xff]
    %v1219 = vld [vmem:[#allocation10 + $0xb0] sm:$0xff]
    %v1220 = vld [vmem:[#allocation10 + $0xb8] sm:$0xff]
    %v1221 = vld [vmem:[#allocation10 + $0xc0] sm:$0xff]
    %v1222 = vld [vmem:[#allocation10 + $0xc8] sm:$0xff]
    %v1223 = vld [vmem:[#allocation10 + $0xd0] sm:$0xff]
    %v1224 = vld [vmem:[#allocation10 + $0xd8] sm:$0xff]
    %v1225 = vld [vmem:[#allocation10 + $0xe0] sm:$0xff]
    %v1226 = vld [vmem:[#allocation10 + $0xe8] sm:$0xff]
    %v1227 = vld [vmem:[#allocation10 + $0xf0] sm:$0xff]
    %v1228 = vld [vmem:[#allocation10 + $0xf8] sm:$0xff]
    %v1229 = vld [vmem:[#allocation10 + $0x100] sm:$0xff]
    %v1230 = vld [vmem:[#allocation10 + $0x108] sm:$0xff]
    %v1231 = vld [vmem:[#allocation10 + $0x110] sm:$0xff]
    %v1232 = vld [vmem:[#allocation10 + $0x118] sm:$0xff]
    %v1233 = vld [vmem:[#allocation10 + $0x120] sm:$0xff]
    %v1234 = vld [vmem:[#allocation10 + $0x128] sm:$0xff]
    %v1235 = vld [vmem:[#allocation10 + $0x130] sm:$0xff]
    %v1236 = vld [vmem:[#allocation10 + $0x138] sm:$0xff]
    %v1237 = vld [vmem:[#allocation10 + $0x140] sm:$0xff]
    %v1238 = vld [vmem:[#allocation10 + $0x148] sm:$0xff]
    %v1239 = vld [vmem:[#allocation10 + $0x150] sm:$0xff]
    %v1240 = vld [vmem:[#allocation10 + $0x158] sm:$0xff]
    %v1241 = vld [vmem:[#allocation10 + $0x160] sm:$0xff]
    %v1242 = vld [vmem:[#allocation10 + $0x168] sm:$0xff]
    %v1243 = vld [vmem:[#allocation10 + $0x170] sm:$0xff]
    %v1244 = vld [vmem:[#allocation10 + $0x178] sm:$0xff]
    %v1245 = vld [vmem:[#allocation10 + $0x180] sm:$0xff]
    %v1246 = vld [vmem:[#allocation10 + $0x188] sm:$0xff]
    %v1247 = vld [vmem:[#allocation10 + $0x190] sm:$0xff]
    %v1248 = vld [vmem:[#allocation10 + $0x198] sm:$0xff]
    %v1249 = vld [vmem:[#allocation10 + $0x1a0] sm:$0xff]
    %v1250 = vld [vmem:[#allocation10 + $0x1a8] sm:$0xff]
    %v1251 = vld [vmem:[#allocation10 + $0x1b0] sm:$0xff]
    %v1252 = vld [vmem:[#allocation10 + $0x1b8] sm:$0xff]
    %v1253 = vld [vmem:[#allocation10 + $0x1c0] sm:$0xff]
    %v1254 = vld [vmem:[#allocation10 + $0x1c8] sm:$0xff]
    %v1255 = vld [vmem:[#allocation10 + $0x1d0] sm:$0xff]
    %v1256 = vld [vmem:[#allocation10 + $0x1d8] sm:$0xff]
    %v1257 = vld [vmem:[#allocation10 + $0x1e0] sm:$0xff]
    %v1258 = vld [vmem:[#allocation10 + $0x1e8] sm:$0xff]
    %v1259 = vld [vmem:[#allocation10 + $0x1f0] sm:$0xff]
    %v1260 = vld [vmem:[#allocation10 + $0x1f8] sm:$0xff]
    %v1261 = vld [vmem:[#allocation10 + $0x200] sm:$0xff]
    %v1262 = vld [vmem:[#allocation10 + $0x208] sm:$0xff]
    %v1263 = vld [vmem:[#allocation10 + $0x210] sm:$0xff]
    %v1264 = vld [vmem:[#allocation10 + $0x218] sm:$0xff]
    %v1265 = vld [vmem:[#allocation10 + $0x220] sm:$0xff]
    %v1266 = vld [vmem:[#allocation10 + $0x228] sm:$0xff]
    %v1267 = vld [vmem:[#allocation10 + $0x230] sm:$0xff]
    %v1268 = vld [vmem:[#allocation10 + $0x238] sm:$0xff]
    %v1269 = vld [vmem:[#allocation10 + $0x240] sm:$0xff]
    %v1270 = vld [vmem:[#allocation10 + $0x248] sm:$0xff]
    %v1271 = vld [vmem:[#allocation10 + $0x250] sm:$0xff]
    %v1272 = vld [vmem:[#allocation10 + $0x258] sm:$0xff]
    %v1273 = vld [vmem:[#allocation10 + $0x260] sm:$0xff]
    %v1274 = vld [vmem:[#allocation10 + $0x268] sm:$0xff]
    %v1275 = vld [vmem:[#allocation10 + $0x270] sm:$0xff]
    %v1276 = vld [vmem:[#allocation10 + $0x278] sm:$0xff]
    %v1277 = vld [vmem:[#allocation10 + $0x280] sm:$0xff]
    %v1278 = vld [vmem:[#allocation10 + $0x288] sm:$0xff]
    %v1279 = vld [vmem:[#allocation10 + $0x290] sm:$0xff]
    %v1280 = vld [vmem:[#allocation10 + $0x298] sm:$0xff]
    %v1281 = vld [vmem:[#allocation10 + $0x2a0] sm:$0xff]
    %v1282 = vld [vmem:[#allocation10 + $0x2a8] sm:$0xff]
    %v1283 = vld [vmem:[#allocation10 + $0x2b0] sm:$0xff]
    %v1284 = vld [vmem:[#allocation10 + $0x2b8] sm:$0xff]
    %v1285 = vld [vmem:[#allocation10 + $0x2c0] sm:$0xff]
    %v1286 = vld [vmem:[#allocation10 + $0x2c8] sm:$0xff]
    %v1287 = vld [vmem:[#allocation10 + $0x2d0] sm:$0xff]
    %v1288 = vld [vmem:[#allocation10 + $0x2d8] sm:$0xff]
    %v1289 = vld [vmem:[#allocation10 + $0x2e0] sm:$0xff]
    %v1290 = vld [vmem:[#allocation10 + $0x2e8] sm:$0xff]
    %v1291 = vld [vmem:[#allocation10 + $0x2f0] sm:$0xff]
    %v1292 = vld [vmem:[#allocation10 + $0x2f8] sm:$0xff]
    %v1293 = vld [vmem:[#allocation10 + $0x300] sm:$0xff]
    %v1294 = vld [vmem:[#allocation10 + $0x308] sm:$0xff]
    %v1295 = vld [vmem:[#allocation10 + $0x310] sm:$0xff]
    %v1296 = vld [vmem:[#allocation10 + $0x318] sm:$0xff]
    %v1297 = vld [vmem:[#allocation10 + $0x320] sm:$0xff]
    %v1298 = vld [vmem:[#allocation10 + $0x328] sm:$0xff]
    %v1299 = vld [vmem:[#allocation10 + $0x330] sm:$0xff]
    %v1300 = vld [vmem:[#allocation10 + $0x338] sm:$0xff]
    %v1301 = vld [vmem:[#allocation10 + $0x340] sm:$0xff]
    %v1302 = vld [vmem:[#allocation10 + $0x348] sm:$0xff]
    %v1303 = vld [vmem:[#allocation10 + $0x350] sm:$0xff]
    %v1304 = vld [vmem:[#allocation10 + $0x358] sm:$0xff]
    %v1305 = vld [vmem:[#allocation10 + $0x360] sm:$0xff]
    %v1306 = vld [vmem:[#allocation10 + $0x368] sm:$0xff]
    %v1307 = vld [vmem:[#allocation10 + $0x370] sm:$0xff]
    %v1308 = vld [vmem:[#allocation10 + $0x378] sm:$0xff]
    %v1309 = vld [vmem:[#allocation10 + $0x380] sm:$0xff]
    %v1310 = vld [vmem:[#allocation10 + $0x388] sm:$0xff]
    %v1311 = vld [vmem:[#allocation10 + $0x390] sm:$0xff]
    %v1312 = vld [vmem:[#allocation10 + $0x398] sm:$0xff]
    %v1313 = vld [vmem:[#allocation10 + $0x3a0] sm:$0xff]
    %v1314 = vld [vmem:[#allocation10 + $0x3a8] sm:$0xff]
    %v1315 = vld [vmem:[#allocation10 + $0x3b0] sm:$0xff]
    %v1316 = vld [vmem:[#allocation10 + $0x3b8] sm:$0xff]
    %v1317 = vld [vmem:[#allocation10 + $0x3c0] sm:$0xff]
    %v1318 = vld [vmem:[#allocation10 + $0x3c8] sm:$0xff]
    %v1319 = vld [vmem:[#allocation10 + $0x3d0] sm:$0xff]
    %v1320 = vld [vmem:[#allocation10 + $0x3d8] sm:$0xff]
    %v1321 = vld [vmem:[#allocation10 + $0x3e0] sm:$0xff]
    %v1322 = vld [vmem:[#allocation10 + $0x3e8] sm:$0xff]
    %v1323 = vld [vmem:[#allocation10 + $0x3f0] sm:$0xff]
    %v1324 = vld [vmem:[#allocation10 + $0x3f8] sm:$0xff]
    %v1325 = vld [vmem:[#allocation10 + $0x400] sm:$0xff]
    %v1326 = vld [vmem:[#allocation10 + $0x408] sm:$0xff]
    %v1327 = vld [vmem:[#allocation10 + $0x410] sm:$0xff]
    %v1328 = vld [vmem:[#allocation10 + $0x418] sm:$0xff]
    %v1329 = vld [vmem:[#allocation10 + $0x420] sm:$0xff]
    %v1330 = vld [vmem:[#allocation10 + $0x428] sm:$0xff]
    %v1331 = vld [vmem:[#allocation10 + $0x430] sm:$0xff]
    %v1332 = vld [vmem:[#allocation10 + $0x438] sm:$0xff]
    %v1333 = vld [vmem:[#allocation10 + $0x440] sm:$0xff]
    %v1334 = vld [vmem:[#allocation10 + $0x448] sm:$0xff]
    %v1335 = vld [vmem:[#allocation10 + $0x450] sm:$0xff]
    %v1336 = vld [vmem:[#allocation10 + $0x458] sm:$0xff]
    %v1337 = vld [vmem:[#allocation10 + $0x460] sm:$0xff]
    %v1338 = vld [vmem:[#allocation10 + $0x468] sm:$0xff]
    %v1339 = vld [vmem:[#allocation10 + $0x470] sm:$0xff]
    %v1340 = vld [vmem:[#allocation10 + $0x478] sm:$0xff]
    %v1341 = vld [vmem:[#allocation10 + $0x480] sm:$0xff]
    %v1342 = vld [vmem:[#allocation10 + $0x488] sm:$0xff]
    %v1343 = vld [vmem:[#allocation10 + $0x490] sm:$0xff]
    %v1344 = vld [vmem:[#allocation10 + $0x498] sm:$0xff]
    %v1345 = vld [vmem:[#allocation10 + $0x4a0] sm:$0xff]
    %v1346 = vld [vmem:[#allocation10 + $0x4a8] sm:$0xff]
    %v1347 = vld [vmem:[#allocation10 + $0x4b0] sm:$0xff]
    %v1348 = vld [vmem:[#allocation10 + $0x4b8] sm:$0xff]
    %v1349 = vld [vmem:[#allocation10 + $0x4c0] sm:$0xff]
    %v1350 = vld [vmem:[#allocation10 + $0x4c8] sm:$0xff]
    %v1351 = vld [vmem:[#allocation10 + $0x4d0] sm:$0xff]
    %v1352 = vld [vmem:[#allocation10 + $0x4d8] sm:$0xff]
    %v1353 = vld [vmem:[#allocation10 + $0x4e0] sm:$0xff]
    %v1354 = vld [vmem:[#allocation10 + $0x4e8] sm:$0xff]
    %v1355 = vld [vmem:[#allocation10 + $0x4f0] sm:$0xff]
    %v1356 = vld [vmem:[#allocation10 + $0x4f8] sm:$0xff]
    %v1357 = vld [vmem:[#allocation10 + $0x500] sm:$0xff]
    %v1358 = vld [vmem:[#allocation10 + $0x508] sm:$0xff]
    %v1359 = vld [vmem:[#allocation10 + $0x510] sm:$0xff]
    %v1360 = vld [vmem:[#allocation10 + $0x518] sm:$0xff]
    %v1361 = vld [vmem:[#allocation10 + $0x520] sm:$0xff]
    %v1362 = vld [vmem:[#allocation10 + $0x528] sm:$0xff]
    %v1363 = vld [vmem:[#allocation10 + $0x530] sm:$0xff]
    %v1364 = vld [vmem:[#allocation10 + $0x538] sm:$0xff]
    %v1365 = vld [vmem:[#allocation10 + $0x540] sm:$0xff]
    %v1366 = vld [vmem:[#allocation10 + $0x548] sm:$0xff]
    %v1367 = vld [vmem:[#allocation10 + $0x550] sm:$0xff]
    %v1368 = vld [vmem:[#allocation10 + $0x558] sm:$0xff]
    %v1369 = vld [vmem:[#allocation10 + $0x560] sm:$0xff]
    %v1370 = vld [vmem:[#allocation10 + $0x568] sm:$0xff]
    %v1371 = vld [vmem:[#allocation10 + $0x570] sm:$0xff]
    %v1372 = vld [vmem:[#allocation10 + $0x578] sm:$0xff]
    %v1373 = vld [vmem:[#allocation10 + $0x580] sm:$0xff]
    %v1374 = vld [vmem:[#allocation10 + $0x588] sm:$0xff]
    %v1375 = vld [vmem:[#allocation10 + $0x590] sm:$0xff]
    %v1376 = vld [vmem:[#allocation10 + $0x598] sm:$0xff]
    %v1377 = vld [vmem:[#allocation10 + $0x5a0] sm:$0xff]
    %v1378 = vld [vmem:[#allocation10 + $0x5a8] sm:$0xff]
    %v1379 = vld [vmem:[#allocation10 + $0x5b0] sm:$0xff]
    %v1380 = vld [vmem:[#allocation10 + $0x5b8] sm:$0xff]
    %v1381 = vld [vmem:[#allocation10 + $0x5c0] sm:$0xff]
    %v1382 = vld [vmem:[#allocation10 + $0x5c8] sm:$0xff]
    %v1383 = vld [vmem:[#allocation10 + $0x5d0] sm:$0xff]
    %v1384 = vld [vmem:[#allocation10 + $0x5d8] sm:$0xff]
    %v1385 = vld [vmem:[#allocation10 + $0x5e0] sm:$0xff]
    %v1386 = vld [vmem:[#allocation10 + $0x5e8] sm:$0xff]
    %v1387 = vld [vmem:[#allocation10 + $0x5f0] sm:$0xff]
    %v1388 = vld [vmem:[#allocation10 + $0x5f8] sm:$0xff]
    %v1389 = vld [vmem:[#allocation10 + $0x600] sm:$0xff]
    %v1390 = vld [vmem:[#allocation10 + $0x608] sm:$0xff]
    %v1391 = vld [vmem:[#allocation10 + $0x610] sm:$0xff]
    %v1392 = vld [vmem:[#allocation10 + $0x618] sm:$0xff]
    %v1393 = vld [vmem:[#allocation10 + $0x620] sm:$0xff]
    %v1394 = vld [vmem:[#allocation10 + $0x628] sm:$0xff]
    %v1395 = vld [vmem:[#allocation10 + $0x630] sm:$0xff]
    %v1396 = vld [vmem:[#allocation10 + $0x638] sm:$0xff]
    %v1397 = vld [vmem:[#allocation10 + $0x640] sm:$0xff]
    %v1398 = vld [vmem:[#allocation10 + $0x648] sm:$0xff]
    %v1399 = vld [vmem:[#allocation10 + $0x650] sm:$0xff]
    %v1400 = vld [vmem:[#allocation10 + $0x658] sm:$0xff]
    %v1401 = vld [vmem:[#allocation10 + $0x660] sm:$0xff]
    %v1402 = vld [vmem:[#allocation10 + $0x668] sm:$0xff]
    %v1403 = vld [vmem:[#allocation10 + $0x670] sm:$0xff]
    %v1404 = vld [vmem:[#allocation10 + $0x678] sm:$0xff]
    %v1405 = vld [vmem:[#allocation10 + $0x680] sm:$0xff]
    %v1406 = vld [vmem:[#allocation10 + $0x688] sm:$0xff]
    %v1407 = vld [vmem:[#allocation10 + $0x690] sm:$0xff]
    %v1408 = vld [vmem:[#allocation10 + $0x698] sm:$0xff]
    %v1409 = vld [vmem:[#allocation10 + $0x6a0] sm:$0xff]
    %v1410 = vld [vmem:[#allocation10 + $0x6a8] sm:$0xff]
    %v1411 = vld [vmem:[#allocation10 + $0x6b0] sm:$0xff]
    %v1412 = vld [vmem:[#allocation10 + $0x6b8] sm:$0xff]
    %v1413 = vld [vmem:[#allocation10 + $0x6c0] sm:$0xff]
    %v1414 = vld [vmem:[#allocation10 + $0x6c8] sm:$0xff]
    %v1415 = vld [vmem:[#allocation10 + $0x6d0] sm:$0xff]
    %v1416 = vld [vmem:[#allocation10 + $0x6d8] sm:$0xff]
    %v1417 = vld [vmem:[#allocation10 + $0x6e0] sm:$0xff]
    %v1418 = vld [vmem:[#allocation10 + $0x6e8] sm:$0xff]
    %v1419 = vld [vmem:[#allocation10 + $0x6f0] sm:$0xff]
    %v1420 = vld [vmem:[#allocation10 + $0x6f8] sm:$0xff]
    %v1421 = vld [vmem:[#allocation10 + $0x700] sm:$0xff]
    %v1422 = vld [vmem:[#allocation10 + $0x708] sm:$0xff]
    %v1423 = vld [vmem:[#allocation10 + $0x710] sm:$0xff]
    %v1424 = vld [vmem:[#allocation10 + $0x718] sm:$0xff]
    %v1425 = vld [vmem:[#allocation10 + $0x720] sm:$0xff]
    %v1426 = vld [vmem:[#allocation10 + $0x728] sm:$0xff]
    %v1427 = vld [vmem:[#allocation10 + $0x730] sm:$0xff]
    %v1428 = vld [vmem:[#allocation10 + $0x738] sm:$0xff]
    %v1429 = vld [vmem:[#allocation10 + $0x740] sm:$0xff]
    %v1430 = vld [vmem:[#allocation10 + $0x748] sm:$0xff]
    %v1431 = vld [vmem:[#allocation10 + $0x750] sm:$0xff]
    %v1432 = vld [vmem:[#allocation10 + $0x758] sm:$0xff]
    %v1433 = vld [vmem:[#allocation10 + $0x760] sm:$0xff]
    %v1434 = vld [vmem:[#allocation10 + $0x768] sm:$0xff]
    %v1435 = vld [vmem:[#allocation10 + $0x770] sm:$0xff]
    %v1436 = vld [vmem:[#allocation10 + $0x778] sm:$0xff]
    %v1437 = vld [vmem:[#allocation10 + $0x780] sm:$0xff]
    %v1438 = vld [vmem:[#allocation10 + $0x788] sm:$0xff]
    %v1439 = vld [vmem:[#allocation10 + $0x790] sm:$0xff]
    %v1440 = vld [vmem:[#allocation10 + $0x798] sm:$0xff]
    %v1441 = vld [vmem:[#allocation10 + $0x7a0] sm:$0xff]
    %v1442 = vld [vmem:[#allocation10 + $0x7a8] sm:$0xff]
    %v1443 = vld [vmem:[#allocation10 + $0x7b0] sm:$0xff]
    %v1444 = vld [vmem:[#allocation10 + $0x7b8] sm:$0xff]
    %v1445 = vld [vmem:[#allocation10 + $0x7c0] sm:$0xff]
    %v1446 = vld [vmem:[#allocation10 + $0x7c8] sm:$0xff]
    %v1447 = vld [vmem:[#allocation10 + $0x7d0] sm:$0xff]
    %v1448 = vld [vmem:[#allocation10 + $0x7d8] sm:$0xff]
    %v1449 = vld [vmem:[#allocation10 + $0x7e0] sm:$0xff]
    %v1450 = vld [vmem:[#allocation10 + $0x7e8] sm:$0xff]
    %v1451 = vld [vmem:[#allocation10 + $0x7f0] sm:$0xff]
    %v1452 = vld [vmem:[#allocation10 + $0x7f8] sm:$0xff]
    %v1453 = vld [vmem:[#allocation10 + $0x800] sm:$0xff]
    %v1454 = vld [vmem:[#allocation10 + $0x808] sm:$0xff]
    %v1455 = vld [vmem:[#allocation10 + $0x810] sm:$0xff]
    %v1456 = vld [vmem:[#allocation10 + $0x818] sm:$0xff]
    %v1457 = vld [vmem:[#allocation10 + $0x820] sm:$0xff]
    %v1458 = vld [vmem:[#allocation10 + $0x828] sm:$0xff]
    %v1459 = vld [vmem:[#allocation10 + $0x830] sm:$0xff]
    %v1460 = vld [vmem:[#allocation10 + $0x838] sm:$0xff]
    %v1461 = vld [vmem:[#allocation10 + $0x840] sm:$0xff]
    %v1462 = vld [vmem:[#allocation10 + $0x848] sm:$0xff]
    %v1463 = vld [vmem:[#allocation10 + $0x850] sm:$0xff]
    %v1464 = vld [vmem:[#allocation10 + $0x858] sm:$0xff]
    %v1465 = vld [vmem:[#allocation10 + $0x860] sm:$0xff]
    %v1466 = vld [vmem:[#allocation10 + $0x868] sm:$0xff]
    %v1467 = vld [vmem:[#allocation10 + $0x870] sm:$0xff]
    %v1468 = vld [vmem:[#allocation10 + $0x878] sm:$0xff]
    %v1469 = vld [vmem:[#allocation10 + $0x880] sm:$0xff]
    %v1470 = vld [vmem:[#allocation10 + $0x888] sm:$0xff]
    %v1471 = vld [vmem:[#allocation10 + $0x890] sm:$0xff]
    %v1472 = vld [vmem:[#allocation10 + $0x898] sm:$0xff]
    %v1473 = vld [vmem:[#allocation10 + $0x8a0] sm:$0xff]
    %v1474 = vld [vmem:[#allocation10 + $0x8a8] sm:$0xff]
    %v1475 = vld [vmem:[#allocation10 + $0x8b0] sm:$0xff]
    %v1476 = vld [vmem:[#allocation10 + $0x8b8] sm:$0xff]
    %v1477 = vld [vmem:[#allocation10 + $0x8c0] sm:$0xff]
    %v1478 = vld [vmem:[#allocation10 + $0x8c8] sm:$0xff]
    %v1479 = vld [vmem:[#allocation10 + $0x8d0] sm:$0xff]
    %v1480 = vld [vmem:[#allocation10 + $0x8d8] sm:$0xff]
    %v1481 = vld [vmem:[#allocation10 + $0x8e0] sm:$0xff]
    %v1482 = vld [vmem:[#allocation10 + $0x8e8] sm:$0xff]
    %v1483 = vld [vmem:[#allocation10 + $0x8f0] sm:$0xff]
    %v1484 = vld [vmem:[#allocation10 + $0x8f8] sm:$0xff]
    %v1485 = vld [vmem:[#allocation10 + $0x900] sm:$0xff]
    %v1486 = vld [vmem:[#allocation10 + $0x908] sm:$0xff]
    %v1487 = vld [vmem:[#allocation10 + $0x910] sm:$0xff]
    %v1488 = vld [vmem:[#allocation10 + $0x918] sm:$0xff]
    %v1489 = vld [vmem:[#allocation10 + $0x920] sm:$0xff]
    %v1490 = vld [vmem:[#allocation10 + $0x928] sm:$0xff]
    %v1491 = vld [vmem:[#allocation10 + $0x930] sm:$0xff]
    %v1492 = vld [vmem:[#allocation10 + $0x938] sm:$0xff]
    %v1493 = vld [vmem:[#allocation10 + $0x940] sm:$0xff]
    %v1494 = vld [vmem:[#allocation10 + $0x948] sm:$0xff]
    %v1495 = vld [vmem:[#allocation10 + $0x950] sm:$0xff]
    %v1496 = vld [vmem:[#allocation10 + $0x958] sm:$0xff]
    %v1497 = vld [vmem:[#allocation10 + $0x960] sm:$0xff]
    %v1498 = vld [vmem:[#allocation10 + $0x968] sm:$0xff]
    %v1499 = vld [vmem:[#allocation10 + $0x970] sm:$0xff]
    %v1500 = vld [vmem:[#allocation10 + $0x978] sm:$0xff]
    %v1501 = vld [vmem:[#allocation10 + $0x980] sm:$0xff]
    %v1502 = vld [vmem:[#allocation10 + $0x988] sm:$0xff]
    %v1503 = vld [vmem:[#allocation10 + $0x990] sm:$0xff]
    %v1504 = vld [vmem:[#allocation10 + $0x998] sm:$0xff]
    %v1505 = vld [vmem:[#allocation10 + $0x9a0] sm:$0xff]
    %v1506 = vld [vmem:[#allocation10 + $0x9a8] sm:$0xff]
    %v1507 = vld [vmem:[#allocation10 + $0x9b0] sm:$0xff]
    %v1508 = vld [vmem:[#allocation10 + $0x9b8] sm:$0xff]
    %v1509 = vld [vmem:[#allocation10 + $0x9c0] sm:$0xff]
    %v1510 = vld [vmem:[#allocation10 + $0x9c8] sm:$0xff]
    %v1511 = vld [vmem:[#allocation10 + $0x9d0] sm:$0xff]
    %v1512 = vld [vmem:[#allocation10 + $0x9d8] sm:$0xff]
    %v1513 = vld [vmem:[#allocation10 + $0x9e0] sm:$0xff]
    %v1514 = vld [vmem:[#allocation10 + $0x9e8] sm:$0xff]
    %v1515 = vld [vmem:[#allocation10 + $0x9f0] sm:$0xff]
    %v1516 = vld [vmem:[#allocation10 + $0x9f8] sm:$0xff]
    %v1517 = vld [vmem:[#allocation10 + $0xa00] sm:$0xff]
    %v1518 = vld [vmem:[#allocation10 + $0xa08] sm:$0xff]
    %v1519 = vld [vmem:[#allocation10 + $0xa10] sm:$0xff]
    %v1520 = vld [vmem:[#allocation10 + $0xa18] sm:$0xff]
    %v1521 = vld [vmem:[#allocation10 + $0xa20] sm:$0xff]
    %v1522 = vld [vmem:[#allocation10 + $0xa28] sm:$0xff]
    %v1523 = vld [vmem:[#allocation10 + $0xa30] sm:$0xff]
    %v1524 = vld [vmem:[#allocation10 + $0xa38] sm:$0xff]
    %v1525 = vld [vmem:[#allocation10 + $0xa40] sm:$0xff]
    %v1526 = vld [vmem:[#allocation10 + $0xa48] sm:$0xff]
    %v1527 = vld [vmem:[#allocation10 + $0xa50] sm:$0xff]
    %v1528 = vld [vmem:[#allocation10 + $0xa58] sm:$0xff]
    %v1529 = vld [vmem:[#allocation10 + $0xa60] sm:$0xff]
    %v1530 = vld [vmem:[#allocation10 + $0xa68] sm:$0xff]
    %v1531 = vld [vmem:[#allocation10 + $0xa70] sm:$0xff]
    %v1532 = vld [vmem:[#allocation10 + $0xa78] sm:$0xff]
    %v1533 = vld [vmem:[#allocation10 + $0xa80] sm:$0xff]
    %v1534 = vld [vmem:[#allocation10 + $0xa88] sm:$0xff]
    %v1535 = vld [vmem:[#allocation10 + $0xa90] sm:$0xff]
    %v1536 = vld [vmem:[#allocation10 + $0xa98] sm:$0xff]
    %v1537 = vld [vmem:[#allocation10 + $0xaa0] sm:$0xff]
    %v1538 = vld [vmem:[#allocation10 + $0xaa8] sm:$0xff]
    %v1539 = vld [vmem:[#allocation10 + $0xab0] sm:$0xff]
    %v1540 = vld [vmem:[#allocation10 + $0xab8] sm:$0xff]
    %v1541 = vld [vmem:[#allocation10 + $0xac0] sm:$0xff]
    %v1542 = vld [vmem:[#allocation10 + $0xac8] sm:$0xff]
    %v1543 = vld [vmem:[#allocation10 + $0xad0] sm:$0xff]
    %v1544 = vld [vmem:[#allocation10 + $0xad8] sm:$0xff]
    %v1545 = vld [vmem:[#allocation10 + $0xae0] sm:$0xff]
    %v1546 = vld [vmem:[#allocation10 + $0xae8] sm:$0xff]
    %v1547 = vld [vmem:[#allocation10 + $0xaf0] sm:$0xff]
    %v1548 = vld [vmem:[#allocation10 + $0xaf8] sm:$0xff]
    %v1549 = vld [vmem:[#allocation10 + $0xb00] sm:$0xff]
    %v1550 = vld [vmem:[#allocation10 + $0xb08] sm:$0xff]
    %v1551 = vld [vmem:[#allocation10 + $0xb10] sm:$0xff]
    %v1552 = vld [vmem:[#allocation10 + $0xb18] sm:$0xff]
    %v1553 = vld [vmem:[#allocation10 + $0xb20] sm:$0xff]
    %v1554 = vld [vmem:[#allocation10 + $0xb28] sm:$0xff]
    %v1555 = vld [vmem:[#allocation10 + $0xb30] sm:$0xff]
    %v1556 = vld [vmem:[#allocation10 + $0xb38] sm:$0xff]
    %v1557 = vld [vmem:[#allocation10 + $0xb40] sm:$0xff]
    %v1558 = vld [vmem:[#allocation10 + $0xb48] sm:$0xff]
    %v1559 = vld [vmem:[#allocation10 + $0xb50] sm:$0xff]
    %v1560 = vld [vmem:[#allocation10 + $0xb58] sm:$0xff]
    %v1561 = vld [vmem:[#allocation10 + $0xb60] sm:$0xff]
    %v1562 = vld [vmem:[#allocation10 + $0xb68] sm:$0xff]
    %v1563 = vld [vmem:[#allocation10 + $0xb70] sm:$0xff]
    %v1564 = vld [vmem:[#allocation10 + $0xb78] sm:$0xff]
    %v1565 = vld [vmem:[#allocation10 + $0xb80] sm:$0xff]
    %v1566 = vld [vmem:[#allocation10 + $0xb88] sm:$0xff]
    %v1567 = vld [vmem:[#allocation10 + $0xb90] sm:$0xff]
    %v1568 = vld [vmem:[#allocation10 + $0xb98] sm:$0xff]
    %v1569 = vld [vmem:[#allocation10 + $0xba0] sm:$0xff]
    %v1570 = vld [vmem:[#allocation10 + $0xba8] sm:$0xff]
    %v1571 = vld [vmem:[#allocation10 + $0xbb0] sm:$0xff]
    %v1572 = vld [vmem:[#allocation10 + $0xbb8] sm:$0xff]
    %v1573 = vld [vmem:[#allocation10 + $0xbc0] sm:$0xff]
    %v1574 = vld [vmem:[#allocation10 + $0xbc8] sm:$0xff]
    %v1575 = vld [vmem:[#allocation10 + $0xbd0] sm:$0xff]
    %v1576 = vld [vmem:[#allocation10 + $0xbd8] sm:$0xff]
    %v1577 = vld [vmem:[#allocation10 + $0xbe0] sm:$0xff]
    %v1578 = vld [vmem:[#allocation10 + $0xbe8] sm:$0xff]
    %v1579 = vld [vmem:[#allocation10 + $0xbf0] sm:$0xff]
    %v1580 = vld [vmem:[#allocation10 + $0xbf8] sm:$0xff]
    %v1581 = vld [vmem:[#allocation10 + $0xc00] sm:$0xff]
    %v1582 = vld [vmem:[#allocation10 + $0xc08] sm:$0xff]
    %v1583 = vld [vmem:[#allocation10 + $0xc10] sm:$0xff]
    %v1584 = vld [vmem:[#allocation10 + $0xc18] sm:$0xff]
    %v1585 = vld [vmem:[#allocation10 + $0xc20] sm:$0xff]
    %v1586 = vld [vmem:[#allocation10 + $0xc28] sm:$0xff]
    %v1587 = vld [vmem:[#allocation10 + $0xc30] sm:$0xff]
    %v1588 = vld [vmem:[#allocation10 + $0xc38] sm:$0xff]
    %v1589 = vld [vmem:[#allocation10 + $0xc40] sm:$0xff]
    %v1590 = vld [vmem:[#allocation10 + $0xc48] sm:$0xff]
    %v1591 = vld [vmem:[#allocation10 + $0xc50] sm:$0xff]
    %v1592 = vld [vmem:[#allocation10 + $0xc58] sm:$0xff]
    %v1593 = vld [vmem:[#allocation10 + $0xc60] sm:$0xff]
    %v1594 = vld [vmem:[#allocation10 + $0xc68] sm:$0xff]
    %v1595 = vld [vmem:[#allocation10 + $0xc70] sm:$0xff]
    %v1596 = vld [vmem:[#allocation10 + $0xc78] sm:$0xff]
    %v1597 = vld [vmem:[#allocation10 + $0xc80] sm:$0xff]
    %v1598 = vld [vmem:[#allocation10 + $0xc88] sm:$0xff]
    %v1599 = vld [vmem:[#allocation10 + $0xc90] sm:$0xff]
    %v1600 = vld [vmem:[#allocation10 + $0xc98] sm:$0xff]
    %v1601 = vld [vmem:[#allocation10 + $0xca0] sm:$0xff]
    %v1602 = vld [vmem:[#allocation10 + $0xca8] sm:$0xff]
    %v1603 = vld [vmem:[#allocation10 + $0xcb0] sm:$0xff]
    %v1604 = vld [vmem:[#allocation10 + $0xcb8] sm:$0xff]
    %v1605 = vld [vmem:[#allocation10 + $0xcc0] sm:$0xff]
    %v1606 = vld [vmem:[#allocation10 + $0xcc8] sm:$0xff]
    %v1607 = vld [vmem:[#allocation10 + $0xcd0] sm:$0xff]
    %v1608 = vld [vmem:[#allocation10 + $0xcd8] sm:$0xff]
    %v1609 = vld [vmem:[#allocation10 + $0xce0] sm:$0xff]
    %v1610 = vld [vmem:[#allocation10 + $0xce8] sm:$0xff]
    %v1611 = vld [vmem:[#allocation10 + $0xcf0] sm:$0xff]
    %v1612 = vld [vmem:[#allocation10 + $0xcf8] sm:$0xff]
    %v1613 = vld [vmem:[#allocation10 + $0xd00] sm:$0xff]
    %v1614 = vld [vmem:[#allocation10 + $0xd08] sm:$0xff]
    %v1615 = vld [vmem:[#allocation10 + $0xd10] sm:$0xff]
    %v1616 = vld [vmem:[#allocation10 + $0xd18] sm:$0xff]
    %v1617 = vld [vmem:[#allocation10 + $0xd20] sm:$0xff]
    %v1618 = vld [vmem:[#allocation10 + $0xd28] sm:$0xff]
    %v1619 = vld [vmem:[#allocation10 + $0xd30] sm:$0xff]
    %v1620 = vld [vmem:[#allocation10 + $0xd38] sm:$0xff]
    %v1621 = vld [vmem:[#allocation10 + $0xd40] sm:$0xff]
    %v1622 = vld [vmem:[#allocation10 + $0xd48] sm:$0xff]
    %v1623 = vld [vmem:[#allocation10 + $0xd50] sm:$0xff]
    %v1624 = vld [vmem:[#allocation10 + $0xd58] sm:$0xff]
    %v1625 = vld [vmem:[#allocation10 + $0xd60] sm:$0xff]
    %v1626 = vld [vmem:[#allocation10 + $0xd68] sm:$0xff]
    %v1627 = vld [vmem:[#allocation10 + $0xd70] sm:$0xff]
    %v1628 = vld [vmem:[#allocation10 + $0xd78] sm:$0xff]
    %v1629 = vld [vmem:[#allocation10 + $0xd80] sm:$0xff]
    %v1630 = vld [vmem:[#allocation10 + $0xd88] sm:$0xff]
    %v1631 = vld [vmem:[#allocation10 + $0xd90] sm:$0xff]
    %v1632 = vld [vmem:[#allocation10 + $0xd98] sm:$0xff]
    %v1633 = vld [vmem:[#allocation10 + $0xda0] sm:$0xff]
    %v1634 = vld [vmem:[#allocation10 + $0xda8] sm:$0xff]
    %v1635 = vld [vmem:[#allocation10 + $0xdb0] sm:$0xff]
    %v1636 = vld [vmem:[#allocation10 + $0xdb8] sm:$0xff]
    %v1637 = vld [vmem:[#allocation10 + $0xdc0] sm:$0xff]
    %v1638 = vld [vmem:[#allocation10 + $0xdc8] sm:$0xff]
    %v1639 = vld [vmem:[#allocation10 + $0xdd0] sm:$0xff]
    %v1640 = vld [vmem:[#allocation10 + $0xdd8] sm:$0xff]
    %v1641 = vld [vmem:[#allocation10 + $0xde0] sm:$0xff]
    %v1642 = vld [vmem:[#allocation10 + $0xde8] sm:$0xff]
    %v1643 = vld [vmem:[#allocation10 + $0xdf0] sm:$0xff]
    %v1644 = vld [vmem:[#allocation10 + $0xdf8] sm:$0xff]
    %v1645 = vld [vmem:[#allocation10 + $0xe00] sm:$0xff]
    %v1646 = vld [vmem:[#allocation10 + $0xe08] sm:$0xff]
    %v1647 = vld [vmem:[#allocation10 + $0xe10] sm:$0xff]
    %v1648 = vld [vmem:[#allocation10 + $0xe18] sm:$0xff]
    %v1649 = vld [vmem:[#allocation10 + $0xe20] sm:$0xff]
    %v1650 = vld [vmem:[#allocation10 + $0xe28] sm:$0xff]
    %v1651 = vld [vmem:[#allocation10 + $0xe30] sm:$0xff]
    %v1652 = vld [vmem:[#allocation10 + $0xe38] sm:$0xff]
    %v1653 = vld [vmem:[#allocation10 + $0xe40] sm:$0xff]
    %v1654 = vld [vmem:[#allocation10 + $0xe48] sm:$0xff]
    %v1655 = vld [vmem:[#allocation10 + $0xe50] sm:$0xff]
    %v1656 = vld [vmem:[#allocation10 + $0xe58] sm:$0xff]
    %v1657 = vld [vmem:[#allocation10 + $0xe60] sm:$0xff]
    %v1658 = vld [vmem:[#allocation10 + $0xe68] sm:$0xff]
    %v1659 = vld [vmem:[#allocation10 + $0xe70] sm:$0xff]
    %v1660 = vld [vmem:[#allocation10 + $0xe78] sm:$0xff]
    %v1661 = vld [vmem:[#allocation10 + $0xe80] sm:$0xff]
    %v1662 = vld [vmem:[#allocation10 + $0xe88] sm:$0xff]
    %v1663 = vld [vmem:[#allocation10 + $0xe90] sm:$0xff]
    %v1664 = vld [vmem:[#allocation10 + $0xe98] sm:$0xff]
    %v1665 = vld [vmem:[#allocation10 + $0xea0] sm:$0xff]
    %v1666 = vld [vmem:[#allocation10 + $0xea8] sm:$0xff]
    %v1667 = vld [vmem:[#allocation10 + $0xeb0] sm:$0xff]
    %v1668 = vld [vmem:[#allocation10 + $0xeb8] sm:$0xff]
    %v1669 = vld [vmem:[#allocation10 + $0xec0] sm:$0xff]
    %v1670 = vld [vmem:[#allocation10 + $0xec8] sm:$0xff]
    %v1671 = vld [vmem:[#allocation10 + $0xed0] sm:$0xff]
    %v1672 = vld [vmem:[#allocation10 + $0xed8] sm:$0xff]
    %v1673 = vld [vmem:[#allocation10 + $0xee0] sm:$0xff]
    %v1674 = vld [vmem:[#allocation10 + $0xee8] sm:$0xff]
    %v1675 = vld [vmem:[#allocation10 + $0xef0] sm:$0xff]
    %v1676 = vld [vmem:[#allocation10 + $0xef8] sm:$0xff]
    %v1677 = vld [vmem:[#allocation10 + $0xf00] sm:$0xff]
    %v1678 = vld [vmem:[#allocation10 + $0xf08] sm:$0xff]
    %v1679 = vld [vmem:[#allocation10 + $0xf10] sm:$0xff]
    %v1680 = vld [vmem:[#allocation10 + $0xf18] sm:$0xff]
    %v1681 = vld [vmem:[#allocation10 + $0xf20] sm:$0xff]
    %v1682 = vld [vmem:[#allocation10 + $0xf28] sm:$0xff]
    %v1683 = vld [vmem:[#allocation10 + $0xf30] sm:$0xff]
    %v1684 = vld [vmem:[#allocation10 + $0xf38] sm:$0xff]
    %v1685 = vld [vmem:[#allocation10 + $0xf40] sm:$0xff]
    %v1686 = vld [vmem:[#allocation10 + $0xf48] sm:$0xff]
    %v1687 = vld [vmem:[#allocation10 + $0xf50] sm:$0xff]
    %v1688 = vld [vmem:[#allocation10 + $0xf58] sm:$0xff]
    %v1689 = vld [vmem:[#allocation10 + $0xf60] sm:$0xff]
    %v1690 = vld [vmem:[#allocation10 + $0xf68] sm:$0xff]
    %v1691 = vld [vmem:[#allocation10 + $0xf70] sm:$0xff]
    %v1692 = vld [vmem:[#allocation10 + $0xf78] sm:$0xff]
    %v1693 = vld [vmem:[#allocation10 + $0xf80] sm:$0xff]
    %v1694 = vld [vmem:[#allocation10 + $0xf88] sm:$0xff]
    %v1695 = vld [vmem:[#allocation10 + $0xf90] sm:$0xff]
    %v1696 = vld [vmem:[#allocation10 + $0xf98] sm:$0xff]
    %v1697 = vld [vmem:[#allocation10 + $0xfa0] sm:$0xff]
    %v1698 = vld [vmem:[#allocation10 + $0xfa8] sm:$0xff]
    %v1699 = vld [vmem:[#allocation10 + $0xfb0] sm:$0xff]
    %v1700 = vld [vmem:[#allocation10 + $0xfb8] sm:$0xff]
    %v1701 = vld [vmem:[#allocation10 + $0xfc0] sm:$0xff]
    %v1702 = vld [vmem:[#allocation10 + $0xfc8] sm:$0xff]
    %v1703 = vld [vmem:[#allocation10 + $0xfd0] sm:$0xff]
    %v1704 = vld [vmem:[#allocation10 + $0xfd8] sm:$0xff]
    %v1705 = vld [vmem:[#allocation10 + $0xfe0] sm:$0xff]
    %v1706 = vld [vmem:[#allocation10 + $0xfe8] sm:$0xff]
    %v1707 = vld [vmem:[#allocation10 + $0xff0] sm:$0xff]
    %v1708 = vld [vmem:[#allocation10 + $0xff8] sm:$0xff]
    %v1709 = vld [vmem:[#allocation11] sm:$0xff]
    %v1711 = vlaneseq
    %v1712 = vshrl.u32 %v1711, 7
    %v1713 = vsub.s32 0, %v1712
    %v1714 = vrot.slane %v1709, %v1713
    %v1715 = vlaneseq
    %v1716 = vshrl.u32 %v1715, 7
    %v1717 = vsub.s32 1, %v1716
    %v1718 = vrot.slane %v1709, %v1717
    %v1719 = vlaneseq
    %v1720 = vshrl.u32 %v1719, 7
    %v1721 = vsub.s32 2, %v1720
    %v1722 = vrot.slane %v1709, %v1721
    %v1723 = vlaneseq
    %v1724 = vshrl.u32 %v1723, 7
    %v1725 = vsub.s32 3, %v1724
    %v1726 = vrot.slane %v1709, %v1725
    %v1727 = vlaneseq
    %v1728 = vshrl.u32 %v1727, 7
    %v1729 = vsub.s32 4, %v1728
    %v1730 = vrot.slane %v1709, %v1729
    %v1731 = vlaneseq
    %v1732 = vshrl.u32 %v1731, 7
    %v1733 = vsub.s32 5, %v1732
    %v1734 = vrot.slane %v1709, %v1733
    %v1735 = vlaneseq
    %v1736 = vshrl.u32 %v1735, 7
    %v1737 = vsub.s32 6, %v1736
    %v1738 = vrot.slane %v1709, %v1737
    %v1739 = vlaneseq
    %v1740 = vshrl.u32 %v1739, 7
    %v1741 = vsub.s32 7, %v1740
    %v1742 = vrot.slane %v1709, %v1741
    %1751 = vmatprep.subr.mxu0 %v1198
    %1752 = vmatpush1.msra.mxu0 %v1197
    %1753 = vmatprep.subr.mxu0 %v1206
    %1754 = vmatpush1.msra.mxu0 %v1205
    %1755 = vmatprep.subr.mxu0 %v1214
    %1756 = vmatpush1.msra.mxu0 %v1213
    %1757 = vmatprep.subr.mxu0 %v1222
    %1758 = vmatpush1.msra.mxu0 %v1221
    %1759 = vmatprep.subr.mxu0 %v1230
    %1760 = vmatpush1.msra.mxu0 %v1229
    %1761 = vmatprep.subr.mxu0 %v1238
    %1762 = vmatpush1.msra.mxu0 %v1237
    %1763 = vmatprep.subr.mxu0 %v1246
    %1764 = vmatpush1.msra.mxu0 %v1245
    %1765 = vmatprep.subr.mxu0 %v1254
    %1766 = vmatpush1.msra.mxu0 %v1253
    %1767 = vmatprep.subr.mxu0 %v1262
    %1768 = vmatpush1.msra.mxu0 %v1261
    %1769 = vmatprep.subr.mxu0 %v1270
    %1770 = vmatpush1.msra.mxu0 %v1269
    %1771 = vmatprep.subr.mxu0 %v1278
    %1772 = vmatpush1.msra.mxu0 %v1277
    %1773 = vmatprep.subr.mxu0 %v1286
    %1774 = vmatpush1.msra.mxu0 %v1285
    %1775 = vmatprep.subr.mxu0 %v1294
    %1776 = vmatpush1.msra.mxu0 %v1293
    %1777 = vmatprep.subr.mxu0 %v1302
    %1778 = vmatpush1.msra.mxu0 %v1301
    %1779 = vmatprep.subr.mxu0 %v1310
    %1780 = vmatpush1.msra.mxu0 %v1309
    %1781 = vmatprep.subr.mxu0 %v1318
    %1782 = vmatpush1.msra.mxu0 %v1317
    %1783 = vmatprep.subr.mxu0 %v1326
    %1784 = vmatpush1.msra.mxu0 %v1325
    %1785 = vmatprep.subr.mxu0 %v1334
    %1786 = vmatpush1.msra.mxu0 %v1333
    %1787 = vmatprep.subr.mxu0 %v1342
    %1788 = vmatpush1.msra.mxu0 %v1341
    %1789 = vmatprep.subr.mxu0 %v1350
    %1790 = vmatpush1.msra.mxu0 %v1349
    %1791 = vmatprep.subr.mxu0 %v1358
    %1792 = vmatpush1.msra.mxu0 %v1357
    %1793 = vmatprep.subr.mxu0 %v1366
    %1794 = vmatpush1.msra.mxu0 %v1365
    %1795 = vmatprep.subr.mxu0 %v1374
    %1796 = vmatpush1.msra.mxu0 %v1373
    %1797 = vmatprep.subr.mxu0 %v1382
    %1798 = vmatpush1.msra.mxu0 %v1381
    %1799 = vmatprep.subr.mxu0 %v1390
    %1800 = vmatpush1.msra.mxu0 %v1389
    %1801 = vmatprep.subr.mxu0 %v1398
    %1802 = vmatpush1.msra.mxu0 %v1397
    %1803 = vmatprep.subr.mxu0 %v1406
    %1804 = vmatpush1.msra.mxu0 %v1405
    %1805 = vmatprep.subr.mxu0 %v1414
    %1806 = vmatpush1.msra.mxu0 %v1413
    %1807 = vmatprep.subr.mxu0 %v1422
    %1808 = vmatpush1.msra.mxu0 %v1421
    %1809 = vmatprep.subr.mxu0 %v1430
    %1810 = vmatpush1.msra.mxu0 %v1429
    %1811 = vmatprep.subr.mxu0 %v1438
    %1812 = vmatpush1.msra.mxu0 %v1437
    %1813 = vmatprep.subr.mxu0 %v1446
    %1814 = vmatpush1.msra.mxu0 %v1445
    %1815 = vmatprep.mubr.f32.mxu0 %v1186
    %1816 = vmatmul.mubr.f32.gmra.mrb[0].mxu0 %v1185
    %v1817 = vpop.f32.mrb[0].mxu0
    %v1818 = vadd.f32 %v1714, %v1817
    %v1819 = vpop.f32.mrb[0].mxu0
    %v1820 = vadd.f32 %v1718, %v1819
    %1821 = vdwg.mxu0
    %1822 = vmatprep.subr.mxu0 %v1454
    %1823 = vmatpush1.msra.mxu0 %v1453
    %1824 = vmatprep.subr.mxu0 %v1462
    %1825 = vmatpush1.msra.mxu0 %v1461
    %1826 = vmatprep.subr.mxu0 %v1470
    %1827 = vmatpush1.msra.mxu0 %v1469
    %1828 = vmatprep.subr.mxu0 %v1478
    %1829 = vmatpush1.msra.mxu0 %v1477
    %1830 = vmatprep.subr.mxu0 %v1486
    %1831 = vmatpush1.msra.mxu0 %v1485
    %1832 = vmatprep.subr.mxu0 %v1494
    %1833 = vmatpush1.msra.mxu0 %v1493
    %1834 = vmatprep.subr.mxu0 %v1502
    %1835 = vmatpush1.msra.mxu0 %v1501
    %1836 = vmatprep.subr.mxu0 %v1510
    %1837 = vmatpush1.msra.mxu0 %v1509
    %1838 = vmatprep.subr.mxu0 %v1518
    %1839 = vmatpush1.msra.mxu0 %v1517
    %1840 = vmatprep.subr.mxu0 %v1526
    %1841 = vmatpush1.msra.mxu0 %v1525
    %1842 = vmatprep.subr.mxu0 %v1534
    %1843 = vmatpush1.msra.mxu0 %v1533
    %1844 = vmatprep.subr.mxu0 %v1542
    %1845 = vmatpush1.msra.mxu0 %v1541
    %1846 = vmatprep.subr.mxu0 %v1550
    %1847 = vmatpush1.msra.mxu0 %v1549
    %1848 = vmatprep.subr.mxu0 %v1558
    %1849 = vmatpush1.msra.mxu0 %v1557
    %1850 = vmatprep.subr.mxu0 %v1566
    %1851 = vmatpush1.msra.mxu0 %v1565
    %1852 = vmatprep.subr.mxu0 %v1574
    %1853 = vmatpush1.msra.mxu0 %v1573
    %1854 = vmatprep.subr.mxu0 %v1582
    %1855 = vmatpush1.msra.mxu0 %v1581
    %1856 = vmatprep.subr.mxu0 %v1590
    %1857 = vmatpush1.msra.mxu0 %v1589
    %1858 = vmatprep.subr.mxu0 %v1598
    %1859 = vmatpush1.msra.mxu0 %v1597
    %1860 = vmatprep.subr.mxu0 %v1606
    %1861 = vmatpush1.msra.mxu0 %v1605
    %1862 = vmatprep.subr.mxu0 %v1614
    %1863 = vmatpush1.msra.mxu0 %v1613
    %1864 = vmatprep.subr.mxu0 %v1622
    %1865 = vmatpush1.msra.mxu0 %v1621
    %1866 = vmatprep.subr.mxu0 %v1630
    %1867 = vmatpush1.msra.mxu0 %v1629
    %1868 = vmatprep.subr.mxu0 %v1638
    %1869 = vmatpush1.msra.mxu0 %v1637
    %1870 = vmatprep.subr.mxu0 %v1646
    %1871 = vmatpush1.msra.mxu0 %v1645
    %1872 = vmatprep.subr.mxu0 %v1654
    %1873 = vmatpush1.msra.mxu0 %v1653
    %1874 = vmatprep.subr.mxu0 %v1662
    %1875 = vmatpush1.msra.mxu0 %v1661
    %1876 = vmatprep.subr.mxu0 %v1670
    %1877 = vmatpush1.msra.mxu0 %v1669
    %1878 = vmatprep.subr.mxu0 %v1678
    %1879 = vmatpush1.msra.mxu0 %v1677
    %1880 = vmatprep.subr.mxu0 %v1686
    %1881 = vmatpush1.msra.mxu0 %v1685
    %1882 = vmatprep.subr.mxu0 %v1694
    %1883 = vmatpush1.msra.mxu0 %v1693
    %1884 = vmatprep.subr.mxu0 %v1702
    %1885 = vmatpush1.msra.mxu0 %v1701
    %1886 = vmatprep.mubr.f32.mxu0 %v1193
    %1887 = vmatmul.mubr.f32.gmra.mrb[0].mxu0 %v1192
    %v1888 = vpop.f32.mrb[0].mxu0
    %v1889 = vadd.f32 %v1818, %v1888
    %v1890 = vpop.f32.mrb[0].mxu0
    %v1891 = vadd.f32 %v1820, %v1890
    %1892 = vdwg.mxu0
    %1893 = vmatprep.subr.mxu0 %v1200
    %1894 = vmatpush1.msra.mxu0 %v1199
    %1895 = vmatprep.subr.mxu0 %v1208
    %1896 = vmatpush1.msra.mxu0 %v1207
    %1897 = vmatprep.subr.mxu0 %v1216
    %1898 = vmatpush1.msra.mxu0 %v1215
    %1899 = vmatprep.subr.mxu0 %v1224
    %1900 = vmatpush1.msra.mxu0 %v1223
    %1901 = vmatprep.subr.mxu0 %v1232
    %1902 = vmatpush1.msra.mxu0 %v1231
    %1903 = vmatprep.subr.mxu0 %v1240
    %1904 = vmatpush1.msra.mxu0 %v1239
    %1905 = vmatprep.subr.mxu0 %v1248
    %1906 = vmatpush1.msra.mxu0 %v1247
    %1907 = vmatprep.subr.mxu0 %v1256
    %1908 = vmatpush1.msra.mxu0 %v1255
    %1909 = vmatprep.subr.mxu0 %v1264
    %1910 = vmatpush1.msra.mxu0 %v1263
    %1911 = vmatprep.subr.mxu0 %v1272
    %1912 = vmatpush1.msra.mxu0 %v1271
    %1913 = vmatprep.subr.mxu0 %v1280
    %1914 = vmatpush1.msra.mxu0 %v1279
    %1915 = vmatprep.subr.mxu0 %v1288
    %1916 = vmatpush1.msra.mxu0 %v1287
    %1917 = vmatprep.subr.mxu0 %v1296
    %1918 = vmatpush1.msra.mxu0 %v1295
    %1919 = vmatprep.subr.mxu0 %v1304
    %1920 = vmatpush1.msra.mxu0 %v1303
    %1921 = vmatprep.subr.mxu0 %v1312
    %1922 = vmatpush1.msra.mxu0 %v1311
    %1923 = vmatprep.subr.mxu0 %v1320
    %1924 = vmatpush1.msra.mxu0 %v1319
    %1925 = vmatprep.subr.mxu0 %v1328
    %1926 = vmatpush1.msra.mxu0 %v1327
    %1927 = vmatprep.subr.mxu0 %v1336
    %1928 = vmatpush1.msra.mxu0 %v1335
    %1929 = vmatprep.subr.mxu0 %v1344
    %1930 = vmatpush1.msra.mxu0 %v1343
    %1931 = vmatprep.subr.mxu0 %v1352
    %1932 = vmatpush1.msra.mxu0 %v1351
    %1933 = vmatprep.subr.mxu0 %v1360
    %1934 = vmatpush1.msra.mxu0 %v1359
    %1935 = vmatprep.subr.mxu0 %v1368
    %1936 = vmatpush1.msra.mxu0 %v1367
    %1937 = vmatprep.subr.mxu0 %v1376
    %1938 = vmatpush1.msra.mxu0 %v1375
    %1939 = vmatprep.subr.mxu0 %v1384
    %1940 = vmatpush1.msra.mxu0 %v1383
    %1941 = vmatprep.subr.mxu0 %v1392
    %1942 = vmatpush1.msra.mxu0 %v1391
    %1943 = vmatprep.subr.mxu0 %v1400
    %1944 = vmatpush1.msra.mxu0 %v1399
    %1945 = vmatprep.subr.mxu0 %v1408
    %1946 = vmatpush1.msra.mxu0 %v1407
    %1947 = vmatprep.subr.mxu0 %v1416
    %1948 = vmatpush1.msra.mxu0 %v1415
    %1949 = vmatprep.subr.mxu0 %v1424
    %1950 = vmatpush1.msra.mxu0 %v1423
    %1951 = vmatprep.subr.mxu0 %v1432
    %1952 = vmatpush1.msra.mxu0 %v1431
    %1953 = vmatprep.subr.mxu0 %v1440
    %1954 = vmatpush1.msra.mxu0 %v1439
    %1955 = vmatprep.subr.mxu0 %v1448
    %1956 = vmatpush1.msra.mxu0 %v1447
    %1957 = vmatprep.mubr.f32.mxu0 %v1186
    %1958 = vmatmul.mubr.f32.gmra.mrb[0].mxu0 %v1185
    %v1959 = vpop.f32.mrb[0].mxu0
    %v1960 = vadd.f32 %v1722, %v1959
    %v1961 = vpop.f32.mrb[0].mxu0
    %v1962 = vadd.f32 %v1726, %v1961
    %1963 = vdwg.mxu0
    %1964 = vmatprep.subr.mxu0 %v1456
    %1965 = vmatpush1.msra.mxu0 %v1455
    %1966 = vmatprep.subr.mxu0 %v1464
    %1967 = vmatpush1.msra.mxu0 %v1463
    %1968 = vmatprep.subr.mxu0 %v1472
    %1969 = vmatpush1.msra.mxu0 %v1471
    %1970 = vmatprep.subr.mxu0 %v1480
    %1971 = vmatpush1.msra.mxu0 %v1479
    %1972 = vmatprep.subr.mxu0 %v1488
    %1973 = vmatpush1.msra.mxu0 %v1487
    %1974 = vmatprep.subr.mxu0 %v1496
    %1975 = vmatpush1.msra.mxu0 %v1495
    %1976 = vmatprep.subr.mxu0 %v1504
    %1977 = vmatpush1.msra.mxu0 %v1503
    %1978 = vmatprep.subr.mxu0 %v1512
    %1979 = vmatpush1.msra.mxu0 %v1511
    %1980 = vmatprep.subr.mxu0 %v1520
    %1981 = vmatpush1.msra.mxu0 %v1519
    %1982 = vmatprep.subr.mxu0 %v1528
    %1983 = vmatpush1.msra.mxu0 %v1527
    %1984 = vmatprep.subr.mxu0 %v1536
    %1985 = vmatpush1.msra.mxu0 %v1535
    %1986 = vmatprep.subr.mxu0 %v1544
    %1987 = vmatpush1.msra.mxu0 %v1543
    %1988 = vmatprep.subr.mxu0 %v1552
    %1989 = vmatpush1.msra.mxu0 %v1551
    %1990 = vmatprep.subr.mxu0 %v1560
    %1991 = vmatpush1.msra.mxu0 %v1559
    %1992 = vmatprep.subr.mxu0 %v1568
    %1993 = vmatpush1.msra.mxu0 %v1567
    %1994 = vmatprep.subr.mxu0 %v1576
    %1995 = vmatpush1.msra.mxu0 %v1575
    %1996 = vmatprep.subr.mxu0 %v1584
    %1997 = vmatpush1.msra.mxu0 %v1583
    %1998 = vmatprep.subr.mxu0 %v1592
    %1999 = vmatpush1.msra.mxu0 %v1591
    %2000 = vmatprep.subr.mxu0 %v1600
    %2001 = vmatpush1.msra.mxu0 %v1599
    %2002 = vmatprep.subr.mxu0 %v1608
    %2003 = vmatpush1.msra.mxu0 %v1607
    %2004 = vmatprep.subr.mxu0 %v1616
    %2005 = vmatpush1.msra.mxu0 %v1615
    %2006 = vmatprep.subr.mxu0 %v1624
    %2007 = vmatpush1.msra.mxu0 %v1623
    %2008 = vmatprep.subr.mxu0 %v1632
    %2009 = vmatpush1.msra.mxu0 %v1631
    %2010 = vmatprep.subr.mxu0 %v1640
    %2011 = vmatpush1.msra.mxu0 %v1639
    %2012 = vmatprep.subr.mxu0 %v1648
    %2013 = vmatpush1.msra.mxu0 %v1647
    %2014 = vmatprep.subr.mxu0 %v1656
    %2015 = vmatpush1.msra.mxu0 %v1655
    %2016 = vmatprep.subr.mxu0 %v1664
    %2017 = vmatpush1.msra.mxu0 %v1663
    %2018 = vmatprep.subr.mxu0 %v1672
    %2019 = vmatpush1.msra.mxu0 %v1671
    %2020 = vmatprep.subr.mxu0 %v1680
    %2021 = vmatpush1.msra.mxu0 %v1679
    %2022 = vmatprep.subr.mxu0 %v1688
    %2023 = vmatpush1.msra.mxu0 %v1687
    %2024 = vmatprep.subr.mxu0 %v1696
    %2025 = vmatpush1.msra.mxu0 %v1695
    %2026 = vmatprep.subr.mxu0 %v1704
    %2027 = vmatpush1.msra.mxu0 %v1703
    %2028 = vmatprep.mubr.f32.mxu0 %v1193
    %2029 = vmatmul.mubr.f32.gmra.mrb[0].mxu0 %v1192
    %v2030 = vpop.f32.mrb[0].mxu0
    %v2031 = vadd.f32 %v1960, %v2030
    %v2032 = vpop.f32.mrb[0].mxu0
    %v2033 = vadd.f32 %v1962, %v2032
    %2034 = vdwg.mxu0
    %2035 = vmatprep.subr.mxu0 %v1202
    %2036 = vmatpush1.msra.mxu0 %v1201
    %2037 = vmatprep.subr.mxu0 %v1210
    %2038 = vmatpush1.msra.mxu0 %v1209
    %2039 = vmatprep.subr.mxu0 %v1218
    %2040 = vmatpush1.msra.mxu0 %v1217
    %2041 = vmatprep.subr.mxu0 %v1226
    %2042 = vmatpush1.msra.mxu0 %v1225
    %2043 = vmatprep.subr.mxu0 %v1234
    %2044 = vmatpush1.msra.mxu0 %v1233
    %2045 = vmatprep.subr.mxu0 %v1242
    %2046 = vmatpush1.msra.mxu0 %v1241
    %2047 = vmatprep.subr.mxu0 %v1250
    %2048 = vmatpush1.msra.mxu0 %v1249
    %2049 = vmatprep.subr.mxu0 %v1258
    %2050 = vmatpush1.msra.mxu0 %v1257
    %2051 = vmatprep.subr.mxu0 %v1266
    %2052 = vmatpush1.msra.mxu0 %v1265
    %2053 = vmatprep.subr.mxu0 %v1274
    %2054 = vmatpush1.msra.mxu0 %v1273
    %2055 = vmatprep.subr.mxu0 %v1282
    %2056 = vmatpush1.msra.mxu0 %v1281
    %2057 = vmatprep.subr.mxu0 %v1290
    %2058 = vmatpush1.msra.mxu0 %v1289
    %2059 = vmatprep.subr.mxu0 %v1298
    %2060 = vmatpush1.msra.mxu0 %v1297
    %2061 = vmatprep.subr.mxu0 %v1306
    %2062 = vmatpush1.msra.mxu0 %v1305
    %2063 = vmatprep.subr.mxu0 %v1314
    %2064 = vmatpush1.msra.mxu0 %v1313
    %2065 = vmatprep.subr.mxu0 %v1322
    %2066 = vmatpush1.msra.mxu0 %v1321
    %2067 = vmatprep.subr.mxu0 %v1330
    %2068 = vmatpush1.msra.mxu0 %v1329
    %2069 = vmatprep.subr.mxu0 %v1338
    %2070 = vmatpush1.msra.mxu0 %v1337
    %2071 = vmatprep.subr.mxu0 %v1346
    %2072 = vmatpush1.msra.mxu0 %v1345
    %2073 = vmatprep.subr.mxu0 %v1354
    %2074 = vmatpush1.msra.mxu0 %v1353
    %2075 = vmatprep.subr.mxu0 %v1362
    %2076 = vmatpush1.msra.mxu0 %v1361
    %2077 = vmatprep.subr.mxu0 %v1370
    %2078 = vmatpush1.msra.mxu0 %v1369
    %2079 = vmatprep.subr.mxu0 %v1378
    %2080 = vmatpush1.msra.mxu0 %v1377
    %2081 = vmatprep.subr.mxu0 %v1386
    %2082 = vmatpush1.msra.mxu0 %v1385
    %2083 = vmatprep.subr.mxu0 %v1394
    %2084 = vmatpush1.msra.mxu0 %v1393
    %2085 = vmatprep.subr.mxu0 %v1402
    %2086 = vmatpush1.msra.mxu0 %v1401
    %2087 = vmatprep.subr.mxu0 %v1410
    %2088 = vmatpush1.msra.mxu0 %v1409
    %2089 = vmatprep.subr.mxu0 %v1418
    %2090 = vmatpush1.msra.mxu0 %v1417
    %2091 = vmatprep.subr.mxu0 %v1426
    %2092 = vmatpush1.msra.mxu0 %v1425
    %2093 = vmatprep.subr.mxu0 %v1434
    %2094 = vmatpush1.msra.mxu0 %v1433
    %2095 = vmatprep.subr.mxu0 %v1442
    %2096 = vmatpush1.msra.mxu0 %v1441
    %2097 = vmatprep.subr.mxu0 %v1450
    %2098 = vmatpush1.msra.mxu0 %v1449
    %2099 = vmatprep.mubr.f32.mxu0 %v1186
    %2100 = vmatmul.mubr.f32.gmra.mrb[0].mxu0 %v1185
    %v2101 = vpop.f32.mrb[0].mxu0
    %v2102 = vadd.f32 %v1730, %v2101
    %v2103 = vpop.f32.mrb[0].mxu0
    %v2104 = vadd.f32 %v1734, %v2103
    %2105 = vdwg.mxu0
    %2106 = vmatprep.subr.mxu0 %v1458
    %2107 = vmatpush1.msra.mxu0 %v1457
    %2108 = vmatprep.subr.mxu0 %v1466
    %2109 = vmatpush1.msra.mxu0 %v1465
    %2110 = vmatprep.subr.mxu0 %v1474
    %2111 = vmatpush1.msra.mxu0 %v1473
    %2112 = vmatprep.subr.mxu0 %v1482
    %2113 = vmatpush1.msra.mxu0 %v1481
    %2114 = vmatprep.subr.mxu0 %v1490
    %2115 = vmatpush1.msra.mxu0 %v1489
    %2116 = vmatprep.subr.mxu0 %v1498
    %2117 = vmatpush1.msra.mxu0 %v1497
    %2118 = vmatprep.subr.mxu0 %v1506
    %2119 = vmatpush1.msra.mxu0 %v1505
    %2120 = vmatprep.subr.mxu0 %v1514
    %2121 = vmatpush1.msra.mxu0 %v1513
    %2122 = vmatprep.subr.mxu0 %v1522
    %2123 = vmatpush1.msra.mxu0 %v1521
    %2124 = vmatprep.subr.mxu0 %v1530
    %2125 = vmatpush1.msra.mxu0 %v1529
    %2126 = vmatprep.subr.mxu0 %v1538
    %2127 = vmatpush1.msra.mxu0 %v1537
    %2128 = vmatprep.subr.mxu0 %v1546
    %2129 = vmatpush1.msra.mxu0 %v1545
    %2130 = vmatprep.subr.mxu0 %v1554
    %2131 = vmatpush1.msra.mxu0 %v1553
    %2132 = vmatprep.subr.mxu0 %v1562
    %2133 = vmatpush1.msra.mxu0 %v1561
    %2134 = vmatprep.subr.mxu0 %v1570
    %2135 = vmatpush1.msra.mxu0 %v1569
    %2136 = vmatprep.subr.mxu0 %v1578
    %2137 = vmatpush1.msra.mxu0 %v1577
    %2138 = vmatprep.subr.mxu0 %v1586
    %2139 = vmatpush1.msra.mxu0 %v1585
    %2140 = vmatprep.subr.mxu0 %v1594
    %2141 = vmatpush1.msra.mxu0 %v1593
    %2142 = vmatprep.subr.mxu0 %v1602
    %2143 = vmatpush1.msra.mxu0 %v1601
    %2144 = vmatprep.subr.mxu0 %v1610
    %2145 = vmatpush1.msra.mxu0 %v1609
    %2146 = vmatprep.subr.mxu0 %v1618
    %2147 = vmatpush1.msra.mxu0 %v1617
    %2148 = vmatprep.subr.mxu0 %v1626
    %2149 = vmatpush1.msra.mxu0 %v1625
    %2150 = vmatprep.subr.mxu0 %v1634
    %2151 = vmatpush1.msra.mxu0 %v1633
    %2152 = vmatprep.subr.mxu0 %v1642
    %2153 = vmatpush1.msra.mxu0 %v1641
    %2154 = vmatprep.subr.mxu0 %v1650
    %2155 = vmatpush1.msra.mxu0 %v1649
    %2156 = vmatprep.subr.mxu0 %v1658
    %2157 = vmatpush1.msra.mxu0 %v1657
    %2158 = vmatprep.subr.mxu0 %v1666
    %2159 = vmatpush1.msra.mxu0 %v1665
    %2160 = vmatprep.subr.mxu0 %v1674
    %2161 = vmatpush1.msra.mxu0 %v1673
    %2162 = vmatprep.subr.mxu0 %v1682
    %2163 = vmatpush1.msra.mxu0 %v1681
    %2164 = vmatprep.subr.mxu0 %v1690
    %2165 = vmatpush1.msra.mxu0 %v1689
    %2166 = vmatprep.subr.mxu0 %v1698
    %2167 = vmatpush1.msra.mxu0 %v1697
    %2168 = vmatprep.subr.mxu0 %v1706
    %2169 = vmatpush1.msra.mxu0 %v1705
    %2170 = vmatprep.mubr.f32.mxu0 %v1193
    %2171 = vmatmul.mubr.f32.gmra.mrb[0].mxu0 %v1192
    %v2172 = vpop.f32.mrb[0].mxu0
    %v2173 = vadd.f32 %v2102, %v2172
    %v2174 = vpop.f32.mrb[0].mxu0
    %v2175 = vadd.f32 %v2104, %v2174
    %2176 = vdwg.mxu0
    %2177 = vmatprep.subr.mxu0 %v1204
    %2178 = vmatpush1.msra.mxu0 %v1203
    %2179 = vmatprep.subr.mxu0 %v1212
    %2180 = vmatpush1.msra.mxu0 %v1211
    %2181 = vmatprep.subr.mxu0 %v1220
    %2182 = vmatpush1.msra.mxu0 %v1219
    %2183 = vmatprep.subr.mxu0 %v1228
    %2184 = vmatpush1.msra.mxu0 %v1227
    %2185 = vmatprep.subr.mxu0 %v1236
    %2186 = vmatpush1.msra.mxu0 %v1235
    %2187 = vmatprep.subr.mxu0 %v1244
    %2188 = vmatpush1.msra.mxu0 %v1243
    %2189 = vmatprep.subr.mxu0 %v1252
    %2190 = vmatpush1.msra.mxu0 %v1251
    %2191 = vmatprep.subr.mxu0 %v1260
    %2192 = vmatpush1.msra.mxu0 %v1259
    %2193 = vmatprep.subr.mxu0 %v1268
    %2194 = vmatpush1.msra.mxu0 %v1267
    %2195 = vmatprep.subr.mxu0 %v1276
    %2196 = vmatpush1.msra.mxu0 %v1275
    %2197 = vmatprep.subr.mxu0 %v1284
    %2198 = vmatpush1.msra.mxu0 %v1283
    %2199 = vmatprep.subr.mxu0 %v1292
    %2200 = vmatpush1.msra.mxu0 %v1291
    %2201 = vmatprep.subr.mxu0 %v1300
    %2202 = vmatpush1.msra.mxu0 %v1299
    %2203 = vmatprep.subr.mxu0 %v1308
    %2204 = vmatpush1.msra.mxu0 %v1307
    %2205 = vmatprep.subr.mxu0 %v1316
    %2206 = vmatpush1.msra.mxu0 %v1315
    %2207 = vmatprep.subr.mxu0 %v1324
    %2208 = vmatpush1.msra.mxu0 %v1323
    %2209 = vmatprep.subr.mxu0 %v1332
    %2210 = vmatpush1.msra.mxu0 %v1331
    %2211 = vmatprep.subr.mxu0 %v1340
    %2212 = vmatpush1.msra.mxu0 %v1339
    %2213 = vmatprep.subr.mxu0 %v1348
    %2214 = vmatpush1.msra.mxu0 %v1347
    %2215 = vmatprep.subr.mxu0 %v1356
    %2216 = vmatpush1.msra.mxu0 %v1355
    %2217 = vmatprep.subr.mxu0 %v1364
    %2218 = vmatpush1.msra.mxu0 %v1363
    %2219 = vmatprep.subr.mxu0 %v1372
    %2220 = vmatpush1.msra.mxu0 %v1371
    %2221 = vmatprep.subr.mxu0 %v1380
    %2222 = vmatpush1.msra.mxu0 %v1379
    %2223 = vmatprep.subr.mxu0 %v1388
    %2224 = vmatpush1.msra.mxu0 %v1387
    %2225 = vmatprep.subr.mxu0 %v1396
    %2226 = vmatpush1.msra.mxu0 %v1395
    %2227 = vmatprep.subr.mxu0 %v1404
    %2228 = vmatpush1.msra.mxu0 %v1403
    %2229 = vmatprep.subr.mxu0 %v1412
    %2230 = vmatpush1.msra.mxu0 %v1411
    %2231 = vmatprep.subr.mxu0 %v1420
    %2232 = vmatpush1.msra.mxu0 %v1419
    %2233 = vmatprep.subr.mxu0 %v1428
    %2234 = vmatpush1.msra.mxu0 %v1427
    %2235 = vmatprep.subr.mxu0 %v1436
    %2236 = vmatpush1.msra.mxu0 %v1435
    %2237 = vmatprep.subr.mxu0 %v1444
    %2238 = vmatpush1.msra.mxu0 %v1443
    %2239 = vmatprep.subr.mxu0 %v1452
    %2240 = vmatpush1.msra.mxu0 %v1451
    %2241 = vmatprep.mubr.f32.mxu0 %v1186
    %2242 = vmatmul.mubr.f32.gmra.mrb[0].mxu0 %v1185
    %v2243 = vpop.f32.mrb[0].mxu0
    %v2244 = vadd.f32 %v1738, %v2243
    %v2245 = vpop.f32.mrb[0].mxu0
    %v2246 = vadd.f32 %v1742, %v2245
    %2247 = vdwg.mxu0
    %2248 = vmatprep.subr.mxu0 %v1460
    %2249 = vmatpush1.msra.mxu0 %v1459
    %2250 = vmatprep.subr.mxu0 %v1468
    %2251 = vmatpush1.msra.mxu0 %v1467
    %2252 = vmatprep.subr.mxu0 %v1476
    %2253 = vmatpush1.msra.mxu0 %v1475
    %2254 = vmatprep.subr.mxu0 %v1484
    %2255 = vmatpush1.msra.mxu0 %v1483
    %2256 = vmatprep.subr.mxu0 %v1492
    %2257 = vmatpush1.msra.mxu0 %v1491
    %2258 = vmatprep.subr.mxu0 %v1500
    %2259 = vmatpush1.msra.mxu0 %v1499
    %2260 = vmatprep.subr.mxu0 %v1508
    %2261 = vmatpush1.msra.mxu0 %v1507
    %2262 = vmatprep.subr.mxu0 %v1516
    %2263 = vmatpush1.msra.mxu0 %v1515
    %2264 = vmatprep.subr.mxu0 %v1524
    %2265 = vmatpush1.msra.mxu0 %v1523
    %2266 = vmatprep.subr.mxu0 %v1532
    %2267 = vmatpush1.msra.mxu0 %v1531
    %2268 = vmatprep.subr.mxu0 %v1540
    %2269 = vmatpush1.msra.mxu0 %v1539
    %2270 = vmatprep.subr.mxu0 %v1548
    %2271 = vmatpush1.msra.mxu0 %v1547
    %2272 = vmatprep.subr.mxu0 %v1556
    %2273 = vmatpush1.msra.mxu0 %v1555
    %2274 = vmatprep.subr.mxu0 %v1564
    %2275 = vmatpush1.msra.mxu0 %v1563
    %2276 = vmatprep.subr.mxu0 %v1572
    %2277 = vmatpush1.msra.mxu0 %v1571
    %2278 = vmatprep.subr.mxu0 %v1580
    %2279 = vmatpush1.msra.mxu0 %v1579
    %2280 = vmatprep.subr.mxu0 %v1588
    %2281 = vmatpush1.msra.mxu0 %v1587
    %2282 = vmatprep.subr.mxu0 %v1596
    %2283 = vmatpush1.msra.mxu0 %v1595
    %2284 = vmatprep.subr.mxu0 %v1604
    %2285 = vmatpush1.msra.mxu0 %v1603
    %2286 = vmatprep.subr.mxu0 %v1612
    %2287 = vmatpush1.msra.mxu0 %v1611
    %2288 = vmatprep.subr.mxu0 %v1620
    %2289 = vmatpush1.msra.mxu0 %v1619
    %2290 = vmatprep.subr.mxu0 %v1628
    %2291 = vmatpush1.msra.mxu0 %v1627
    %2292 = vmatprep.subr.mxu0 %v1636
    %2293 = vmatpush1.msra.mxu0 %v1635
    %2294 = vmatprep.subr.mxu0 %v1644
    %2295 = vmatpush1.msra.mxu0 %v1643
    %2296 = vmatprep.subr.mxu0 %v1652
    %2297 = vmatpush1.msra.mxu0 %v1651
    %2298 = vmatprep.subr.mxu0 %v1660
    %2299 = vmatpush1.msra.mxu0 %v1659
    %2300 = vmatprep.subr.mxu0 %v1668
    %2301 = vmatpush1.msra.mxu0 %v1667
    %2302 = vmatprep.subr.mxu0 %v1676
    %2303 = vmatpush1.msra.mxu0 %v1675
    %2304 = vmatprep.subr.mxu0 %v1684
    %2305 = vmatpush1.msra.mxu0 %v1683
    %2306 = vmatprep.subr.mxu0 %v1692
    %2307 = vmatpush1.msra.mxu0 %v1691
    %2308 = vmatprep.subr.mxu0 %v1700
    %2309 = vmatpush1.msra.mxu0 %v1699
    %2310 = vmatprep.subr.mxu0 %v1708
    %2311 = vmatpush1.msra.mxu0 %v1707
    %2312 = vmatprep.mubr.f32.mxu0 %v1193
    %2313 = vmatmul.mubr.f32.gmra.mrb[0].mxu0 %v1192
    %v2314 = vpop.f32.mrb[0].mxu0
    %v2315 = vadd.f32 %v2244, %v2314
    %v2316 = vpop.f32.mrb[0].mxu0
    %v2317 = vadd.f32 %v2246, %v2316
    %2318 = vdwg.mxu0
    %v2319 = vxor.u32 %v1889, 2147483648
    %v2320 = vxor.u32 %v1891, 2147483648
    %v2321 = vmul.f32 %v2319, 1.442695
    %v2322 = vpow.pop %v2321
    %v2323 = vmul.f32 %v2320, 1.442695
    %v2324 = vpow.pop %v2323
    %v2325 = vadd.f32 %v2322, 1.0
    %v2326 = vadd.f32 %v2324, 1.0
    %v2327 = vrcp.pop %v2325
    %v2328 = vmul.f32 1.0, %v2327
    %v2329 = vrcp.pop %v2326
    %v2330 = vmul.f32 1.0, %v2329
    %v2331 = vxor.u32 %v2031, 2147483648
    %v2332 = vxor.u32 %v2033, 2147483648
    %v2333 = vmul.f32 %v2331, 1.442695
    %v2334 = vpow.pop %v2333
    %v2335 = vmul.f32 %v2332, 1.442695
    %v2336 = vpow.pop %v2335
    %v2337 = vadd.f32 %v2334, 1.0
    %v2338 = vadd.f32 %v2336, 1.0
    %v2339 = vrcp.pop %v2337
    %v2340 = vmul.f32 1.0, %v2339
    %v2341 = vrcp.pop %v2338
    %v2342 = vmul.f32 1.0, %v2341
    %v2343 = vtanh.pop %v2173
    %v2344 = vtanh.pop %v2175
    %v2345 = vxor.u32 %v2315, 2147483648
    %v2346 = vxor.u32 %v2317, 2147483648
    %v2347 = vmul.f32 %v2345, 1.442695
    %v2348 = vpow.pop %v2347
    %v2349 = vmul.f32 %v2346, 1.442695
    %v2350 = vpow.pop %v2349
    %v2351 = vadd.f32 %v2348, 1.0
    %v2352 = vadd.f32 %v2350, 1.0
    %v2353 = vrcp.pop %v2351
    %v2354 = vmul.f32 1.0, %v2353
    %v2355 = vrcp.pop %v2352
    %v2356 = vmul.f32 1.0, %v2355
    %v2357 = vmul.f32 %v2340, %v1195
    %v2358 = vmul.f32 %v2342, %v1196
    %v2359 = vmul.f32 %v2328, %v2343
    %v2360 = vmul.f32 %v2330, %v2344
    %v2361 = vadd.f32 %v2357, %v2359
    %v2362 = vadd.f32 %v2358, %v2360
    %v2363 = vtanh.pop %v2361
    %v2364 = vtanh.pop %v2362
    %v2365 = vmul.f32 %v2354, %v2363
    %v2366 = vmul.f32 %v2356, %v2364
    %s2367 = scalar_lea.vmem [#allocation17], 16
    %2368 = vst [vmem:[%s2367] sm:$0xff] %v2365
    %2369 = vst [vmem:[%s2367 + $0x8] sm:$0xff] %v2366
    %s2370 = scalar_lea.vmem [#allocation19], 16
    %2371 = vst [vmem:[%s2370] sm:$0xff] %v2361
    %2372 = vst [vmem:[%s2370 + $0x8] sm:$0xff] %v2362
    %v2373 = vld [vmem:[#allocation13] sm:$0xff]
    %v2374 = vld [vmem:[#allocation13 + $0x8] sm:$0xff]
    %v2375 = vld [vmem:[#allocation13 + $0x10] sm:$0xff]
    %v2376 = vld [vmem:[#allocation13 + $0x18] sm:$0xff]
    %v2377 = vld [vmem:[#allocation13 + $0x20] sm:$0xff]
    %v2378 = vld [vmem:[#allocation13 + $0x28] sm:$0xff]
    %v2379 = vld [vmem:[#allocation13 + $0x30] sm:$0xff]
    %v2380 = vld [vmem:[#allocation13 + $0x38] sm:$0xff]
    %v2381 = vld [vmem:[#allocation13 + $0x40] sm:$0xff]
    %v2382 = vld [vmem:[#allocation13 + $0x48] sm:$0xff]
    %v2383 = vld [vmem:[#allocation13 + $0x50] sm:$0xff]
    %v2384 = vld [vmem:[#allocation13 + $0x58] sm:$0xff]
    %v2385 = vld [vmem:[#allocation13 + $0x60] sm:$0xff]
    %v2386 = vld [vmem:[#allocation13 + $0x68] sm:$0xff]
    %v2387 = vld [vmem:[#allocation13 + $0x70] sm:$0xff]
    %v2388 = vld [vmem:[#allocation13 + $0x78] sm:$0xff]
    %v2389 = vld [vmem:[#allocation13 + $0x80] sm:$0xff]
    %v2390 = vld [vmem:[#allocation13 + $0x88] sm:$0xff]
    %v2391 = vld [vmem:[#allocation13 + $0x90] sm:$0xff]
    %v2392 = vld [vmem:[#allocation13 + $0x98] sm:$0xff]
    %v2393 = vld [vmem:[#allocation13 + $0xa0] sm:$0xff]
    %v2394 = vld [vmem:[#allocation13 + $0xa8] sm:$0xff]
    %v2395 = vld [vmem:[#allocation13 + $0xb0] sm:$0xff]
    %v2396 = vld [vmem:[#allocation13 + $0xb8] sm:$0xff]
    %v2397 = vld [vmem:[#allocation13 + $0xc0] sm:$0xff]
    %v2398 = vld [vmem:[#allocation13 + $0xc8] sm:$0xff]
    %v2399 = vld [vmem:[#allocation13 + $0xd0] sm:$0xff]
    %v2400 = vld [vmem:[#allocation13 + $0xd8] sm:$0xff]
    %v2401 = vld [vmem:[#allocation13 + $0xe0] sm:$0xff]
    %v2402 = vld [vmem:[#allocation13 + $0xe8] sm:$0xff]
    %v2403 = vld [vmem:[#allocation13 + $0xf0] sm:$0xff]
    %v2404 = vld [vmem:[#allocation13 + $0xf8] sm:$0xff]
    %v2405 = vld [vmem:[#allocation13 + $0x100] sm:$0xff]
    %v2406 = vld [vmem:[#allocation13 + $0x108] sm:$0xff]
    %v2407 = vld [vmem:[#allocation13 + $0x110] sm:$0xff]
    %v2408 = vld [vmem:[#allocation13 + $0x118] sm:$0xff]
    %v2409 = vld [vmem:[#allocation13 + $0x120] sm:$0xff]
    %v2410 = vld [vmem:[#allocation13 + $0x128] sm:$0xff]
    %v2411 = vld [vmem:[#allocation13 + $0x130] sm:$0xff]
    %v2412 = vld [vmem:[#allocation13 + $0x138] sm:$0xff]
    %v2413 = vld [vmem:[#allocation13 + $0x140] sm:$0xff]
    %v2414 = vld [vmem:[#allocation13 + $0x148] sm:$0xff]
    %v2415 = vld [vmem:[#allocation13 + $0x150] sm:$0xff]
    %v2416 = vld [vmem:[#allocation13 + $0x158] sm:$0xff]
    %v2417 = vld [vmem:[#allocation13 + $0x160] sm:$0xff]
    %v2418 = vld [vmem:[#allocation13 + $0x168] sm:$0xff]
    %v2419 = vld [vmem:[#allocation13 + $0x170] sm:$0xff]
    %v2420 = vld [vmem:[#allocation13 + $0x178] sm:$0xff]
    %v2421 = vld [vmem:[#allocation13 + $0x180] sm:$0xff]
    %v2422 = vld [vmem:[#allocation13 + $0x188] sm:$0xff]
    %v2423 = vld [vmem:[#allocation13 + $0x190] sm:$0xff]
    %v2424 = vld [vmem:[#allocation13 + $0x198] sm:$0xff]
    %v2425 = vld [vmem:[#allocation13 + $0x1a0] sm:$0xff]
    %v2426 = vld [vmem:[#allocation13 + $0x1a8] sm:$0xff]
    %v2427 = vld [vmem:[#allocation13 + $0x1b0] sm:$0xff]
    %v2428 = vld [vmem:[#allocation13 + $0x1b8] sm:$0xff]
    %v2429 = vld [vmem:[#allocation13 + $0x1c0] sm:$0xff]
    %v2430 = vld [vmem:[#allocation13 + $0x1c8] sm:$0xff]
    %v2431 = vld [vmem:[#allocation13 + $0x1d0] sm:$0xff]
    %v2432 = vld [vmem:[#allocation13 + $0x1d8] sm:$0xff]
    %v2433 = vld [vmem:[#allocation13 + $0x1e0] sm:$0xff]
    %v2434 = vld [vmem:[#allocation13 + $0x1e8] sm:$0xff]
    %v2435 = vld [vmem:[#allocation13 + $0x1f0] sm:$0xff]
    %v2436 = vld [vmem:[#allocation13 + $0x1f8] sm:$0xff]
    %v2437 = vld [vmem:[#allocation14] sm:$0x3]
    %v2439 = vlaneseq
    %v2440 = vshrl.u32 %v2439, 7
    %v2441 = vsub.s32 0, %v2440
    %v2442 = vrot.slane %v2437, %v2441
    %v2443 = vlaneseq
    %v2444 = vshrl.u32 %v2443, 7
    %v2445 = vsub.s32 1, %v2444
    %v2446 = vrot.slane %v2437, %v2445
    %2449 = vmatprep.subr.mxu0 %v2374
    %2450 = vmatpush1.msra.mxu0 %v2373
    %2451 = vmatprep.subr.mxu0 %v2376
    %2452 = vmatpush1.msra.mxu0 %v2375
    %2453 = vmatprep.subr.mxu0 %v2378
    %2454 = vmatpush1.msra.mxu0 %v2377
    %2455 = vmatprep.subr.mxu0 %v2380
    %2456 = vmatpush1.msra.mxu0 %v2379
    %2457 = vmatprep.subr.mxu0 %v2382
    %2458 = vmatpush1.msra.mxu0 %v2381
    %2459 = vmatprep.subr.mxu0 %v2384
    %2460 = vmatpush1.msra.mxu0 %v2383
    %2461 = vmatprep.subr.mxu0 %v2386
    %2462 = vmatpush1.msra.mxu0 %v2385
    %2463 = vmatprep.subr.mxu0 %v2388
    %2464 = vmatpush1.msra.mxu0 %v2387
    %2465 = vmatprep.subr.mxu0 %v2390
    %2466 = vmatpush1.msra.mxu0 %v2389
    %2467 = vmatprep.subr.mxu0 %v2392
    %2468 = vmatpush1.msra.mxu0 %v2391
    %2469 = vmatprep.subr.mxu0 %v2394
    %2470 = vmatpush1.msra.mxu0 %v2393
    %2471 = vmatprep.subr.mxu0 %v2396
    %2472 = vmatpush1.msra.mxu0 %v2395
    %2473 = vmatprep.subr.mxu0 %v2398
    %2474 = vmatpush1.msra.mxu0 %v2397
    %2475 = vmatprep.subr.mxu0 %v2400
    %2476 = vmatpush1.msra.mxu0 %v2399
    %2477 = vmatprep.subr.mxu0 %v2402
    %2478 = vmatpush1.msra.mxu0 %v2401
    %2479 = vmatprep.subr.mxu0 %v2404
    %2480 = vmatpush1.msra.mxu0 %v2403
    %2481 = vmatprep.subr.mxu0 %v2406
    %2482 = vmatpush1.msra.mxu0 %v2405
    %2483 = vmatprep.subr.mxu0 %v2408
    %2484 = vmatpush1.msra.mxu0 %v2407
    %2485 = vmatprep.subr.mxu0 %v2410
    %2486 = vmatpush1.msra.mxu0 %v2409
    %2487 = vmatprep.subr.mxu0 %v2412
    %2488 = vmatpush1.msra.mxu0 %v2411
    %2489 = vmatprep.subr.mxu0 %v2414
    %2490 = vmatpush1.msra.mxu0 %v2413
    %2491 = vmatprep.subr.mxu0 %v2416
    %2492 = vmatpush1.msra.mxu0 %v2415
    %2493 = vmatprep.subr.mxu0 %v2418
    %2494 = vmatpush1.msra.mxu0 %v2417
    %2495 = vmatprep.subr.mxu0 %v2420
    %2496 = vmatpush1.msra.mxu0 %v2419
    %2497 = vmatprep.subr.mxu0 %v2422
    %2498 = vmatpush1.msra.mxu0 %v2421
    %2499 = vmatprep.subr.mxu0 %v2424
    %2500 = vmatpush1.msra.mxu0 %v2423
    %2501 = vmatprep.subr.mxu0 %v2426
    %2502 = vmatpush1.msra.mxu0 %v2425
    %2503 = vmatprep.subr.mxu0 %v2428
    %2504 = vmatpush1.msra.mxu0 %v2427
    %2505 = vmatprep.subr.mxu0 %v2430
    %2506 = vmatpush1.msra.mxu0 %v2429
    %2507 = vmatprep.subr.mxu0 %v2432
    %2508 = vmatpush1.msra.mxu0 %v2431
    %2509 = vmatprep.subr.mxu0 %v2434
    %2510 = vmatpush1.msra.mxu0 %v2433
    %2511 = vmatprep.subr.mxu0 %v2436
    %2512 = vmatpush1.msra.mxu0 %v2435
    %2513 = vmatprep.mubr.f32.mxu0 %v2366
    %2514 = vmatmul.mubr.f32.gmra.mrb[0].mxu0 %v2365
    %v2515 = vpop.f32.mrb[0].mxu0
    %v2516 = vadd.f32 %v2442, %v2515
    %v2517 = vpop.f32.mrb[0].mxu0
    %v2518 = vadd.f32 %v2446, %v2517
    %2519 = vdwg.mxu0
    %2520 = vst [vmem:[#allocation16] sm:$0xff] %v2516
    %2521 = vst [vmem:[#allocation16 + $0x8] sm:$0xff] %v2518
    // Predicated region
    $region70: #{_forward.1} parent=1 // pred_check
      _
    $region71: #{_forward.1} parent=1 // pred_check_branch
      %2523 = sbr.rel (0) target = $region73
    $region72: #{_forward.1} parent=1 // pred_region
      %s2525 = ssub.s32 256, 256
      %2526 = vsyncadd [#allocation4], %s2525
      %s2528 = sshll.u32 [#allocation16], 4
      %s2529 = int_to_ptr.vmem [resolvable:$true] %s2528
      %2531 = dma.vmem_to_hbm [thread:$0]  %s2529, 256, %s9, [#allocation4]
    $region73: #{_forward.1} parent=1 // pred_fallthru
      _
    // Predicated region
    $region74: #{_forward.1} parent=1 // pred_check
      _
    $region75: #{_forward.1} parent=1 // pred_check_branch
      %2533 = sbr.rel (0) target = $region77
    $region76: #{_forward.1} parent=1 // pred_region
      %s2535 = ssub.s32 512, 512
      %2536 = vsyncadd [#allocation18], %s2535
      %s2537 = sshll.u32 [#allocation17], 4
      %s2538 = int_to_ptr.vmem [resolvable:$true] %s2537
      %2543 = dma.vmem_to_hbm [thread:$0]  %s2538, 512, %s10, [#allocation18], 256, 256, 16
    $region77: #{_forward.1} parent=1 // pred_fallthru
      _
    // Predicated region
    $region78: #{_forward.1} parent=1 // pred_check
      _
    $region79: #{_forward.1} parent=1 // pred_check_branch
      %2545 = sbr.rel (0) target = $region81
    $region80: #{_forward.1} parent=1 // pred_region
      %s2547 = ssub.s32 512, 512
      %2548 = vsyncadd [#allocation18], %s2547
      %s2549 = sshll.u32 [#allocation19], 4
      %s2550 = int_to_ptr.vmem [resolvable:$true] %s2549
      %2555 = dma.vmem_to_hbm [thread:$0]  %s2550, 512, %s11, [#allocation18], 256, 256, 16
    $region81: #{_forward.1} parent=1 // pred_fallthru
      _
    // Predicated region
    $region82: #{_forward.1} parent=1 // pred_check
      _
    $region83: #{_forward.1} parent=1 // pred_check_branch
      %2557 = sbr.rel (0) target = $region85
    $region84: #{_forward.1} parent=1 // pred_region
      %2558 = dma.done [#allocation4], 256
    $region85: #{_forward.1} parent=1 // pred_fallthru
      _
    // Predicated region
    $region86: #{_forward.1} parent=1 // pred_check
      _
    $region87: #{_forward.1} parent=1 // pred_check_branch
      %2560 = sbr.rel (0) target = $region89
    $region88: #{_forward.1} parent=1 // pred_region
      %2561 = dma.done [#allocation18], 512
    $region89: #{_forward.1} parent=1 // pred_fallthru
      _
    // Predicated region
    $region90: #{_forward.1} parent=1 // pred_check
      _
    $region91: #{_forward.1} parent=1 // pred_check_branch
      %2563 = sbr.rel (0) target = $region93
    $region92: #{_forward.1} parent=1 // pred_region
      %2564 = dma.done [#allocation18], 512
    $region93: #{_forward.1} parent=1 // pred_fallthru
      _
    %2565 = vsyncpa [#allocation3], 1
    %2566 = vsyncpa [#allocation6], 1
    %2567 = vsyncpa [#allocation9], 1
    %2568 = vsyncpa [#allocation12], 1
    %2569 = vsyncpa [#allocation15], 1
    %2570 = vsyncpa [#allocation4], 1
    %2571 = vsyncpa [#allocation18], 1

</llo_original>
